<compile_context>
chip_gen: v7x
topology: tpu7x:2x2x1
jax: 0.10.0
libtpu: 0.0.40
codegen_flags: <defaults>
</compile_context>

<pallas_src>
import jax
import jax.numpy as jnp
from jax.experimental import pallas as pl
from jax.experimental.pallas import tpu as pltpu


def _make_kernel(tb: int, L: int, D: int, N: int, C: int, mm_dtype):
    mm_dtype = jnp.dtype(mm_dtype)
    f32 = jnp.float32

    def kernel(x_ref, w1t_ref, b1_ref, w2_ref, b2_ref, wcm_ref, wcs_ref, bc_ref,
               y_ref, a_ref):
        # x_ref: (tb, L, N) -- tb bags, features L on sublanes, instances N on lanes.
        x_f = x_ref[...].astype(f32)                                   # (tb, L, N)

        # ---- attention MLP: zt[b,d,n] = tanh(sum_l W1t[d,l] x[b,l,n] + b1[d]) ------
        # x is the MXU RHS in its natural layout, so no transpose is ever needed.
        if mm_dtype == jnp.dtype(jnp.float32):
            x_mm = x_f
        else:
            x_mm = x_ref[...].astype(mm_dtype)                         # bf16 fast path
        w1t_b = jnp.broadcast_to(w1t_ref[...].astype(mm_dtype), (tb, D, L))
        zt = jnp.einsum('bdl,bln->bdn', w1t_b, x_mm,
                        preferred_element_type=f32)                    # (tb, D, N)
        zt = jnp.tanh(zt + b1_ref[...])                                # b1: (D,1), f32

        # logits[b,n] = sum_d w2[d] * zt[b,d,n] + b2  -> lane-dense (tb, 1, N)
        w2_b = jnp.broadcast_to(w2_ref[...], (tb, 1, D))
        logits = jnp.einsum('bqd,bdn->bqn', w2_b, zt,
                            preferred_element_type=f32) + b2_ref[...]  # (tb, 1, N)

        # ---- softmax over instances (lane axis), one batched reduce per step -------
        mx = jnp.max(logits, axis=-1, keepdims=True)                   # (tb, 1, 1)
        e = jnp.exp(logits - mx)
        a = e / jnp.sum(e, axis=-1, keepdims=True)                     # (tb, 1, N)
        a_ref[...] = a.astype(a_ref.dtype)

        # ---- weighted mean / weighted std (two-pass, matches PyTorch formula) ------
        m_col = jnp.einsum('bln,bqn->blq', x_f, a,
                           preferred_element_type=f32)                 # (tb, L, 1)
        diff = x_f - m_col                                             # (tb, L, N)
        upper = jnp.einsum('bln,bqn->blq', diff * diff, a,
                           preferred_element_type=f32)                 # (tb, L, 1)

        sum_a = jnp.sum(a, axis=-1, keepdims=True)                     # (tb, 1, 1)
        n_cnt = jnp.sum((a != 0.0).astype(f32), axis=-1,
                        keepdims=True)                                 # (tb, 1, 1)
        # n_cnt == 1 -> lower == 0 -> inf/nan, identical to the PyTorch reference.
        lower = (n_cnt - 1.0) * sum_a / n_cnt                          # (tb, 1, 1)
        s_col = jnp.sqrt(upper / lower)                                # (tb, L, 1)

        # ---- classifier: Y = M @ Wc[:L] + S @ Wc[L:] + bc (Wc pre-split, no concat) -
        wcm_b = jnp.broadcast_to(wcm_ref[...], (tb, C, L))
        wcs_b = jnp.broadcast_to(wcs_ref[...], (tb, C, L))
        y = (jnp.einsum('bcl,blq->bcq', wcm_b, m_col, preferred_element_type=f32)
             + jnp.einsum('bcl,blq->bcq', wcs_b, s_col, preferred_element_type=f32)
             + bc_ref[...])                                            # (tb, C, 1)
        y_ref[...] = y.astype(y_ref.dtype)

    return kernel


def _pick_bags_per_step(B, L, N, itemsize, *, vmem_budget_bytes=24 * 1024 * 1024,
                        min_steps=4):
    """Largest divisor of B whose double-buffered (tb, L, N) block fits the budget,
    preferring at least `min_steps` grid steps so both v7x TensorCores get work."""
    divisors = [t for t in range(1, B + 1) if B % t == 0]
    fits = [t for t in divisors if 2 * t * L * N * itemsize <= vmem_budget_bytes]
    if not fits:
        # TODO(synk): for huge L*N add a second "arbitrary" grid axis over N-chunks
        # with running softmax/moment accumulators instead of shrinking tb further.
        return 1
    preferred = [t for t in fits if B // t >= min_steps]
    return max(preferred) if preferred else max(fits)


def attention_with_std_forward(x, params, *, bags_per_step=None,
                               matmul_dtype=jnp.float32):
    """x: (B, L, N), same layout the PyTorch module receives.  Returns (Y_out, Y_hat, A)."""
    w1, b1, w2, b2, wc, bc = params
    B, L, N = x.shape
    D = w1.shape[1]
    C = wc.shape[1]
    itemsize = jnp.dtype(x.dtype).itemsize

    tb = (_pick_bags_per_step(B, L, N, itemsize)
          if bags_per_step is None else bags_per_step)
    if B % tb != 0:
        raise ValueError(f"bags_per_step={tb} must divide batch size {B}")

    # Parameter layouts chosen so every in-kernel contraction is a canonical batched
    # matmul (contraction over the last dim of the weights / natural dims of x).
    w1t = jnp.transpose(jnp.asarray(w1))          # (D, L)
    b1c = jnp.reshape(jnp.asarray(b1), (D, 1))    # (D, 1)
    w2r = jnp.reshape(jnp.asarray(w2), (1, D))    # (1, D)
    b2s = jnp.reshape(jnp.asarray(b2), (1, 1))    # (1, 1)
    wcmT = jnp.transpose(jnp.asarray(wc)[:L, :])  # (C, L)  classifier weights on mean
    wcsT = jnp.transpose(jnp.asarray(wc)[L:, :])  # (C, L)  classifier weights on std
    bcc = jnp.reshape(jnp.asarray(bc), (C, 1))    # (C, 1)

    # VMEM budget: double-buffered x block dominates; keep headroom on v7x (64 MiB).
    block_bytes = tb * L * N * itemsize
    param_bytes = (D * L + 2 * D + 1 + 2 * C * L + C) * 4
    out_bytes = tb * (N + C) * 4
    est = 2 * block_bytes + 2 * out_bytes + param_bytes
    vmem_limit = int(min(48 * 2**20, max(32 * 2**20, 2 * est)))

    kernel = _make_kernel(tb, L, D, N, C, matmul_dtype)

    y3, a3 = pl.pallas_call(
        kernel,
        out_shape=(
            jax.ShapeDtypeStruct((B, C, 1), jnp.float32),   # class scores per bag
            jax.ShapeDtypeStruct((B, 1, N), jnp.float32),   # attention, instances on lanes
        ),
        grid_spec=pltpu.PrefetchScalarGridSpec(
            num_scalar_prefetch=0,
            grid=(B // tb,),
            in_specs=[
                pl.BlockSpec((tb, L, N), lambda i: (i, 0, 0)),   # x, natural layout
                pl.BlockSpec((D, L), lambda i: (0, 0)),          # W1^T
                pl.BlockSpec((D, 1), lambda i: (0, 0)),          # b1 (column)
                pl.BlockSpec((1, D), lambda i: (0, 0)),          # w2 (row)
                pl.BlockSpec((1, 1), lambda i: (0, 0)),          # b2
                pl.BlockSpec((C, L), lambda i: (0, 0)),          # Wc[:L]^T
                pl.BlockSpec((C, L), lambda i: (0, 0)),          # Wc[L:]^T
                pl.BlockSpec((C, 1), lambda i: (0, 0)),          # bc (column)
            ],
            out_specs=(
                pl.BlockSpec((tb, C, 1), lambda i: (i, 0, 0)),
                pl.BlockSpec((tb, 1, N), lambda i: (i, 0, 0)),
            ),
        ),
        compiler_params=pltpu.CompilerParams(
            dimension_semantics=("parallel",),
            vmem_limit_bytes=vmem_limit),
    )(x, w1t, b1c, w2r, b2s, wcmT, wcsT, bcc)

    y_out = y3.reshape(B, C)
    y_hat = jnp.argmax(y_out, axis=1) if C > 1 else y_out
    a = a3.reshape(B, N, 1)
    return y_out, y_hat, a


def make_params(key, L, D, C):
    """Deterministic synthetic parameters (Linear weights stored as (in, out))."""
    k1, k2, k3, k4, k5, k6 = jax.random.split(key, 6)
    w1 = jax.random.uniform(k1, (L, D), jnp.float32, -1.0, 1.0) / jnp.sqrt(L)
    b1 = jax.random.uniform(k2, (1, D), jnp.float32, -1.0, 1.0) / jnp.sqrt(L)
    w2 = jax.random.uniform(k3, (D, 1), jnp.float32, -1.0, 1.0) / jnp.sqrt(D)
    b2 = jax.random.uniform(k4, (1, 1), jnp.float32, -1.0, 1.0) / jnp.sqrt(D)
    wc = jax.random.uniform(k5, (2 * L, C), jnp.float32, -1.0, 1.0) / jnp.sqrt(2 * L)
    bc = jax.random.uniform(k6, (1, C), jnp.float32, -1.0, 1.0) / jnp.sqrt(2 * L)
    return (w1, b1, w2, b2, wc, bc)


def reference_forward(x, params):
    """Pure-JAX reference mirroring the PyTorch forward (silent correctness check)."""
    w1, b1, w2, b2, wc, bc = params
    hp = jax.lax.Precision.HIGHEST
    H = jnp.transpose(x, (0, 2, 1))                                      # (B, N, L)
    z = jnp.tanh(jnp.dot(H, w1, precision=hp) + b1)                      # (B, N, D)
    logits = jnp.dot(z, w2, precision=hp) + b2                           # (B, N, 1)
    A = jax.nn.softmax(logits, axis=1)                                   # (B, N, 1)
    M = jnp.einsum('abc,abd->ad', A, H, precision=hp)                    # (B, L)
    Hp_ = jnp.transpose(H, (0, 2, 1))                                    # (B, L, N)
    Mu = M[:, :, None]                                                   # (B, L, 1)
    Ncount = jnp.sum((A != 0).astype(jnp.float32), axis=1)               # (B, 1)
    upper = jnp.einsum('abc,adb->ad', A, (Hp_ - Mu) ** 2, precision=hp)  # (B, L)
    lower = (Ncount - 1.0) * jnp.sum(A, axis=1) / Ncount                 # (B, 1)
    S = jnp.sqrt(upper / lower)                                          # (B, L)
    MS = jnp.concatenate([M, S], axis=1)                                 # (B, 2L)
    Y = jnp.dot(MS, wc, precision=hp) + bc                               # (B, C)
    return Y, jnp.argmax(Y, axis=1), A


if __name__ == "__main__":
    # Small TPU-friendly synthetic shapes: hidden L=128, intermediate D=64,
    # bag size N=16, batch B=16 -> tb=4 bags/step, grid of 4 (balances 2 TCs on v7x).
    B, L, N, D, C = 16, 128, 16, 64, 2

    key = jax.random.PRNGKey(0)
    kx, kp = jax.random.split(key)
    x = jax.random.normal(kx, (B, L, N), jnp.float32)   # module input (B, hidden, n_inst)
    params = make_params(kp, L, D, C)

    # f32 MXU path: strict check against the pure-JAX reference.
    y_out, y_hat, a = attention_with_std_forward(x, params)
    jax.block_until_ready((y_out, y_hat, a))

    y_ref, yhat_ref, a_ref = reference_forward(x, params)
    assert jnp.allclose(y_out, y_ref, atol=1e-2, rtol=1e-2), \
        float(jnp.max(jnp.abs(y_out - y_ref)))
    assert jnp.allclose(a, a_ref, atol=5e-4, rtol=1e-3), \
        float(jnp.max(jnp.abs(a - a_ref)))
    # argmax may legitimately differ only when the top-2 class scores are within
    # float tolerance of each other (tie-breaking is ill-defined there).
    srt = jnp.sort(y_ref, axis=1)
    margin = srt[:, -1] - srt[:, -2]
    assert bool(jnp.all((y_hat == yhat_ref) | (margin < 2e-2)))

    # bf16 MXU operands for the attention MLP (v6e/v7x fast path): loose sanity check.
    y_bf, _, a_bf = attention_with_std_forward(x, params, matmul_dtype=jnp.bfloat16)
    jax.block_until_ready((y_bf, a_bf))
    assert jnp.allclose(y_bf, y_ref, atol=1e-1, rtol=1e-1), \
        float(jnp.max(jnp.abs(y_bf - y_ref)))

    print("KERNEL_OK")
</pallas_src>

<mosaic_0001>
module attributes {stable_mosaic.version = 11 : i64} {
  func.func @kernel(%arg0: i32, %arg1: memref<4x128x16xf32, #tpu.memory_space<vmem>>, %arg2: memref<64x128xf32, #tpu.memory_space<vmem>>, %arg3: memref<64x1xf32, #tpu.memory_space<vmem>>, %arg4: memref<1x64xf32, #tpu.memory_space<vmem>>, %arg5: memref<1x1xf32, #tpu.memory_space<vmem>>, %arg6: memref<2x128xf32, #tpu.memory_space<vmem>>, %arg7: memref<2x128xf32, #tpu.memory_space<vmem>>, %arg8: memref<2x1xf32, #tpu.memory_space<vmem>>, %arg9: memref<4x2x1xf32, #tpu.memory_space<vmem>>, %arg10: memref<4x1x16xf32, #tpu.memory_space<vmem>>) attributes {dimension_semantics = [#tpu.dimension_semantics<parallel>], iteration_bounds = array<i64: 4>, scalar_prefetch = 0 : i64, scratch_operands = 0 : i64, tpu.core_type = #tpu.core_type<tc>, window_params = [{transform_indices = @transform_0, window_bounds = array<i64: 4, 128, 16>}, {pipeline_mode = #tpu.pipeline_mode<synchronous>, transform_indices = @transform_1, window_bounds = array<i64: 64, 128>}, {pipeline_mode = #tpu.pipeline_mode<synchronous>, transform_indices = @transform_2, window_bounds = array<i64: 64, 1>}, {pipeline_mode = #tpu.pipeline_mode<synchronous>, transform_indices = @transform_3, window_bounds = array<i64: 1, 64>}, {pipeline_mode = #tpu.pipeline_mode<synchronous>, transform_indices = @transform_4, window_bounds = array<i64: 1, 1>}, {pipeline_mode = #tpu.pipeline_mode<synchronous>, transform_indices = @transform_5, window_bounds = array<i64: 2, 128>}, {pipeline_mode = #tpu.pipeline_mode<synchronous>, transform_indices = @transform_6, window_bounds = array<i64: 2, 128>}, {pipeline_mode = #tpu.pipeline_mode<synchronous>, transform_indices = @transform_7, window_bounds = array<i64: 2, 1>}, {transform_indices = @transform_8, window_bounds = array<i64: 4, 2, 1>}, {transform_indices = @transform_9, window_bounds = array<i64: 4, 1, 16>}]} {
    %c0 = arith.constant 0 : index
    %c0_0 = arith.constant 0 : index
    %c0_1 = arith.constant 0 : index
    %0 = vector.load %arg1[%c0, %c0_0, %c0_1] : memref<4x128x16xf32, #tpu.memory_space<vmem>>, vector<4x128x16xf32>
    %c0_2 = arith.constant 0 : index
    %c0_3 = arith.constant 0 : index
    %1 = vector.load %arg2[%c0_2, %c0_3] : memref<64x128xf32, #tpu.memory_space<vmem>>, vector<64x128xf32>
    %2 = vector.shape_cast %1 : vector<64x128xf32> to vector<1x64x128xf32>
    %3 = vector.broadcast %2 : vector<1x64x128xf32> to vector<4x64x128xf32>
    "tpu.trace_start"() <{level = 10 : i32, message = "bdl,bln->bdn"}> : () -> ()
    %cst = arith.constant dense<0.000000e+00> : vector<4x64x16xf32>
    %4 = tpu.matmul %3, %0, %cst {dimension_numbers = #tpu.dot_dimension_numbers<[2], [1], [1], [2], [0, 0, 0, 1, 1, 2], [0], [0]>} : vector<4x64x128xf32>, vector<4x128x16xf32>, vector<4x64x16xf32> -> vector<4x64x16xf32>
    "tpu.trace_stop"() : () -> ()
    %c0_4 = arith.constant 0 : index
    %c0_5 = arith.constant 0 : index
    %5 = vector.load %arg3[%c0_4, %c0_5] : memref<64x1xf32, #tpu.memory_space<vmem>>, vector<64x1xf32>
    %6 = vector.shape_cast %5 : vector<64x1xf32> to vector<1x64x1xf32>
    %7 = vector.broadcast %6 : vector<1x64x1xf32> to vector<4x64x16xf32>
    %8 = arith.addf %4, %7 : vector<4x64x16xf32>
    %9 = math.tanh %8 : vector<4x64x16xf32>
    %c0_6 = arith.constant 0 : index
    %c0_7 = arith.constant 0 : index
    %10 = vector.load %arg4[%c0_6, %c0_7] : memref<1x64xf32, #tpu.memory_space<vmem>>, vector<1x64xf32>
    %11 = vector.shape_cast %10 : vector<1x64xf32> to vector<1x1x64xf32>
    %12 = vector.broadcast %11 : vector<1x1x64xf32> to vector<4x1x64xf32>
    "tpu.trace_start"() <{level = 10 : i32, message = "bqd,bdn->bqn"}> : () -> ()
    %cst_8 = arith.constant dense<0.000000e+00> : vector<4x1x16xf32>
    %13 = tpu.matmul %12, %9, %cst_8 {dimension_numbers = #tpu.dot_dimension_numbers<[2], [1], [1], [2], [0, 0, 0, 1, 1, 2], [0], [0]>} : vector<4x1x64xf32>, vector<4x64x16xf32>, vector<4x1x16xf32> -> vector<4x1x16xf32>
    "tpu.trace_stop"() : () -> ()
    %c0_9 = arith.constant 0 : index
    %c0_10 = arith.constant 0 : index
    %14 = vector.load %arg5[%c0_9, %c0_10] : memref<1x1xf32, #tpu.memory_space<vmem>>, vector<1x1xf32>
    %15 = vector.shape_cast %14 : vector<1x1xf32> to vector<1x1x1xf32>
    %16 = vector.broadcast %15 : vector<1x1x1xf32> to vector<4x1x16xf32>
    %17 = arith.addf %13, %16 : vector<4x1x16xf32>
    %cst_11 = arith.constant dense<0xFF800000> : vector<4x1xf32>
    %18 = vector.multi_reduction <maximumf>, %17, %cst_11 [2] : vector<4x1x16xf32> to vector<4x1xf32>
    %19 = vector.shape_cast %18 : vector<4x1xf32> to vector<4x1x1xf32>
    %20 = vector.broadcast %19 : vector<4x1x1xf32> to vector<4x1x16xf32>
    %21 = arith.subf %17, %20 : vector<4x1x16xf32>
    %22 = math.exp %21 : vector<4x1x16xf32>
    %cst_12 = arith.constant dense<0.000000e+00> : vector<4x1xf32>
    %23 = vector.multi_reduction <add>, %22, %cst_12 [2] : vector<4x1x16xf32> to vector<4x1xf32>
    %24 = vector.shape_cast %23 : vector<4x1xf32> to vector<4x1x1xf32>
    %25 = vector.broadcast %24 : vector<4x1x1xf32> to vector<4x1x16xf32>
    %26 = arith.divf %22, %25 : vector<4x1x16xf32>
    %c0_13 = arith.constant 0 : index
    %c0_14 = arith.constant 0 : index
    %c0_15 = arith.constant 0 : index
    %27 = vector.load %arg10[%c0_13, %c0_14, %c0_15] : memref<4x1x16xf32, #tpu.memory_space<vmem>>, vector<4x1x16xf32>
    tpu.vector_store %arg10[%c0_13, %c0_14, %c0_15], %26 {strides = array<i32>} : memref<4x1x16xf32, #tpu.memory_space<vmem>>, vector<4x1x16xf32>,
    "tpu.trace_start"() <{level = 10 : i32, message = "bln,bqn->blq"}> : () -> ()
    %cst_16 = arith.constant dense<0.000000e+00> : vector<4x128x1xf32>
    %28 = tpu.matmul %0, %26, %cst_16 {dimension_numbers = #tpu.dot_dimension_numbers<[2], [2], [1], [1], [0, 0, 0, 1, 1, 1], [0], [0]>} : vector<4x128x16xf32>, vector<4x1x16xf32>, vector<4x128x1xf32> -> vector<4x128x1xf32>
    "tpu.trace_stop"() : () -> ()
    %29 = vector.broadcast %28 : vector<4x128x1xf32> to vector<4x128x16xf32>
    %30 = arith.subf %0, %29 : vector<4x128x16xf32>
    %31 = arith.mulf %30, %30 : vector<4x128x16xf32>
    "tpu.trace_start"() <{level = 10 : i32, message = "bln,bqn->blq"}> : () -> ()
    %cst_17 = arith.constant dense<0.000000e+00> : vector<4x128x1xf32>
    %32 = tpu.matmul %31, %26, %cst_17 {dimension_numbers = #tpu.dot_dimension_numbers<[2], [2], [1], [1], [0, 0, 0, 1, 1, 1], [0], [0]>} : vector<4x128x16xf32>, vector<4x1x16xf32>, vector<4x128x1xf32> -> vector<4x128x1xf32>
    "tpu.trace_stop"() : () -> ()
    %cst_18 = arith.constant dense<0.000000e+00> : vector<4x1xf32>
    %33 = vector.multi_reduction <add>, %26, %cst_18 [2] : vector<4x1x16xf32> to vector<4x1xf32>
    %34 = vector.shape_cast %33 : vector<4x1xf32> to vector<4x1x1xf32>
    %cst_19 = arith.constant 0.000000e+00 : f32
    %35 = vector.broadcast %cst_19 : f32 to vector<4x1x16xf32>
    %36 = arith.cmpf one, %26, %35 : vector<4x1x16xf32>
    %37 = arith.extui %36 : vector<4x1x16xi1> to vector<4x1x16xi32>
    %38 = arith.sitofp %37 : vector<4x1x16xi32> to vector<4x1x16xf32>
    %cst_20 = arith.constant dense<0.000000e+00> : vector<4x1xf32>
    %39 = vector.multi_reduction <add>, %38, %cst_20 [2] : vector<4x1x16xf32> to vector<4x1xf32>
    %40 = vector.shape_cast %39 : vector<4x1xf32> to vector<4x1x1xf32>
    %cst_21 = arith.constant 1.000000e+00 : f32
    %41 = vector.broadcast %cst_21 : f32 to vector<4x1x1xf32>
    %42 = arith.subf %40, %41 : vector<4x1x1xf32>
    %43 = arith.mulf %42, %34 : vector<4x1x1xf32>
    %44 = arith.divf %43, %40 : vector<4x1x1xf32>
    %45 = vector.broadcast %44 : vector<4x1x1xf32> to vector<4x128x1xf32>
    %46 = arith.divf %32, %45 : vector<4x128x1xf32>
    %47 = math.sqrt %46 : vector<4x128x1xf32>
    %c0_22 = arith.constant 0 : index
    %c0_23 = arith.constant 0 : index
    %48 = vector.load %arg6[%c0_22, %c0_23] : memref<2x128xf32, #tpu.memory_space<vmem>>, vector<2x128xf32>
    %49 = vector.shape_cast %48 : vector<2x128xf32> to vector<1x2x128xf32>
    %50 = vector.broadcast %49 : vector<1x2x128xf32> to vector<4x2x128xf32>
    %c0_24 = arith.constant 0 : index
    %c0_25 = arith.constant 0 : index
    %51 = vector.load %arg7[%c0_24, %c0_25] : memref<2x128xf32, #tpu.memory_space<vmem>>, vector<2x128xf32>
    %52 = vector.shape_cast %51 : vector<2x128xf32> to vector<1x2x128xf32>
    %53 = vector.broadcast %52 : vector<1x2x128xf32> to vector<4x2x128xf32>
    "tpu.trace_start"() <{level = 10 : i32, message = "bcl,blq->bcq"}> : () -> ()
    %cst_26 = arith.constant dense<0.000000e+00> : vector<4x2x1xf32>
    %54 = tpu.matmul %50, %28, %cst_26 {dimension_numbers = #tpu.dot_dimension_numbers<[2], [1], [1], [2], [0, 0, 0, 1, 1, 2], [0], [0]>} : vector<4x2x128xf32>, vector<4x128x1xf32>, vector<4x2x1xf32> -> vector<4x2x1xf32>
    %cst_27 = arith.constant dense<0.000000e+00> : vector<4x2x1xf32>
    %55 = tpu.matmul %53, %47, %cst_27 {dimension_numbers = #tpu.dot_dimension_numbers<[2], [1], [1], [2], [0, 0, 0, 1, 1, 2], [0], [0]>} : vector<4x2x128xf32>, vector<4x128x1xf32>, vector<4x2x1xf32> -> vector<4x2x1xf32>
    "tpu.trace_stop"() : () -> ()
    %56 = arith.addf %54, %55 : vector<4x2x1xf32>
    %c0_28 = arith.constant 0 : index
    %c0_29 = arith.constant 0 : index
    %57 = vector.load %arg8[%c0_28, %c0_29] : memref<2x1xf32, #tpu.memory_space<vmem>>, vector<2x1xf32>
    %58 = vector.shape_cast %57 : vector<2x1xf32> to vector<1x2x1xf32>
    %59 = vector.broadcast %58 : vector<1x2x1xf32> to vector<4x2x1xf32>
    %60 = arith.addf %56, %59 : vector<4x2x1xf32>
    %c0_30 = arith.constant 0 : index
    %c0_31 = arith.constant 0 : index
    %c0_32 = arith.constant 0 : index
    %61 = vector.load %arg9[%c0_30, %c0_31, %c0_32] : memref<4x2x1xf32, #tpu.memory_space<vmem>>, vector<4x2x1xf32>
    tpu.vector_store %arg9[%c0_30, %c0_31, %c0_32], %60 {strides = array<i32>} : memref<4x2x1xf32, #tpu.memory_space<vmem>>, vector<4x2x1xf32>,
    return
  }
  func.func @transform_0(%arg0: i32) -> (i32, i32, i32) {
    %c0_i32 = arith.constant 0 : i32
    %c0_i32_0 = arith.constant 0 : i32
    %c0_i32_1 = arith.constant 0 : i32
    return %arg0, %c0_i32, %c0_i32_0 : i32, i32, i32
  }
  func.func @transform_1(%arg0: i32) -> (i32, i32) {
    %c0_i32 = arith.constant 0 : i32
    %c0_i32_0 = arith.constant 0 : i32
    %c0_i32_1 = arith.constant 0 : i32
    return %c0_i32, %c0_i32_0 : i32, i32
  }
  func.func @transform_2(%arg0: i32) -> (i32, i32) {
    %c0_i32 = arith.constant 0 : i32
    %c0_i32_0 = arith.constant 0 : i32
    %c0_i32_1 = arith.constant 0 : i32
    return %c0_i32, %c0_i32_0 : i32, i32
  }
  func.func @transform_3(%arg0: i32) -> (i32, i32) {
    %c0_i32 = arith.constant 0 : i32
    %c0_i32_0 = arith.constant 0 : i32
    %c0_i32_1 = arith.constant 0 : i32
    return %c0_i32, %c0_i32_0 : i32, i32
  }
  func.func @transform_4(%arg0: i32) -> (i32, i32) {
    %c0_i32 = arith.constant 0 : i32
    %c0_i32_0 = arith.constant 0 : i32
    %c0_i32_1 = arith.constant 0 : i32
    return %c0_i32, %c0_i32_0 : i32, i32
  }
  func.func @transform_5(%arg0: i32) -> (i32, i32) {
    %c0_i32 = arith.constant 0 : i32
    %c0_i32_0 = arith.constant 0 : i32
    %c0_i32_1 = arith.constant 0 : i32
    return %c0_i32, %c0_i32_0 : i32, i32
  }
  func.func @transform_6(%arg0: i32) -> (i32, i32) {
    %c0_i32 = arith.constant 0 : i32
    %c0_i32_0 = arith.constant 0 : i32
    %c0_i32_1 = arith.constant 0 : i32
    return %c0_i32, %c0_i32_0 : i32, i32
  }
  func.func @transform_7(%arg0: i32) -> (i32, i32) {
    %c0_i32 = arith.constant 0 : i32
    %c0_i32_0 = arith.constant 0 : i32
    %c0_i32_1 = arith.constant 0 : i32
    return %c0_i32, %c0_i32_0 : i32, i32
  }
  func.func @transform_8(%arg0: i32) -> (i32, i32, i32) {
    %c0_i32 = arith.constant 0 : i32
    %c0_i32_0 = arith.constant 0 : i32
    %c0_i32_1 = arith.constant 0 : i32
    return %arg0, %c0_i32, %c0_i32_0 : i32, i32, i32
  }
  func.func @transform_9(%arg0: i32) -> (i32, i32, i32) {
    %c0_i32 = arith.constant 0 : i32
    %c0_i32_0 = arith.constant 0 : i32
    %c0_i32_1 = arith.constant 0 : i32
    return %arg0, %c0_i32, %c0_i32_0 : i32, i32, i32
  }
}

</mosaic_0001>

<llo_original>
// kernel: tpu_custom_call.1
$region0: #{tpu_custom_call.1}
  #allocation0 [shape = 'u32[]', space=smem, size = 0x4, offset = 0x4, fixed_abs, tag = 'smem constant byte address 0x4 - core index']
  #allocation1 [shape = 'u32[144,128]{1,0:T(1,128)}', space=vmem, size = 0x12000, scoped, tag = 'internal scratch']
  #allocation2 [shape = 'f32[1,1]{1,0:T(1,128)S(1)}', space=vmem, size = 0x200, scoped, tag = 'scoped memory for tpu_custom_call.1']
  %s0 = inlined_call_operand.vmem [shape: f32[16,128,16], index: 0, kind: input, shape index: {}]
  %s1 = inlined_call_operand.vmem [shape: f32[64,128], index: 1, kind: input, shape index: {}]
  %s2 = inlined_call_operand.vmem [shape: f32[64,1], index: 2, kind: input, shape index: {}]
  %s3 = inlined_call_operand.vmem [shape: f32[1,64], index: 3, kind: input, shape index: {}]
  %s4 = inlined_call_operand.<no memory space> [shape: f32[1,1], index: 4, kind: input, shape index: {}]
  %s5 = inlined_call_operand.vmem [shape: f32[2,128], index: 5, kind: input, shape index: {}]
  %s6 = inlined_call_operand.vmem [shape: f32[2,128], index: 6, kind: input, shape index: {}]
  %s7 = inlined_call_operand.vmem [shape: f32[2,1], index: 7, kind: input, shape index: {}]
  %s8 = inlined_call_operand.vmem [shape: f32[16,2,1], index: 8, kind: output, shape index: {0}]
  %s9 = inlined_call_operand.hbm [shape: f32[16,1,16], index: 9, kind: output, shape index: {1}]
  %10 = xla_tuple %s8, %s9
  %s11 = sld [smem:[#allocation0]]
  $region73: #{tpu_custom_call.1} parent=0
    _
  %s13 = ssub.s32 1, %s11
  %s14 = scalar_select 0, %s13, %s11
  %v15 = vstv %s4
  %16 = vst [vmem:[#allocation2] sm:$0x1] %v15
  $region1: #{tpu_custom_call.1} parent=0
    #allocation3 [shape = 'u8[4096]{0}', space=vmem, size = 0x1000, scoped, tag = 'output window, operand 1']
    #allocation4 [shape = 's32[2]{0}', space=sflag, size = 0x8, scoped, tag = 'scoped memory for tpu_custom_call.1']
    %17 = vsyncpa [#allocation4], 0
    %s18 = scalar_lea.sflag [#allocation4], 1
    %19 = vsyncpa %s18, 0
    loop: start=0, step=1, limit=6
    $region2: #{tpu_custom_call.1} parent=1 // loop_pre_header
      _
    $region3: #{tpu_custom_call.1} parent=1 // loop_header
      %s21 = sphi 0, %s25
      %p22 = scmp.ge.s32.totalorder %s21, 6
      %s31 = sphi 0, %s33
      %s34 = sphi 0, %s31
      %s35 = sphi 0, %s34
      %s51 = sphi 0, %s35
      %s55 = sphi 0, %s55
      %s57 = sphi 0, %s55
      %s58 = sphi 0, %s57
      %s72 = sphi 0, %s58
      %s76 = sphi 0, %s76
      %s78 = sphi 0, %s76
      %s79 = sphi 0, %s78
      %s93 = sphi 0, %s79
      %s97 = sphi 0, %s97
      %s99 = sphi 0, %s97
      %s100 = sphi 0, %s99
      %s114 = sphi 0, %s100
      %s118 = sphi 0, %s118
      %s120 = sphi 0, %s118
      %s121 = sphi 0, %s120
      %s135 = sphi 0, %s121
      %s139 = sphi 0, %s139
      %s141 = sphi 0, %s139
      %s142 = sphi 0, %s141
      %s156 = sphi 0, %s142
      %s160 = sphi 0, %s160
      %s162 = sphi 0, %s160
      %s163 = sphi 0, %s162
      %s177 = sphi 0, %s163
      %s181 = sphi 0, %s181
      %s183 = sphi 0, %s181
      %s184 = sphi 0, %s183
      %s198 = sphi 0, %s184
      %s204 = sphi 0, %s206
      %s207 = sphi 0, %s204
      %s208 = sphi 0, %s207
      %s224 = sphi 0, %s208
      %s230 = sphi 0, %s232
      %s233 = sphi 0, %s230
      %s234 = sphi 0, %s233
      %s250 = sphi 0, %s234
    $region4: #{tpu_custom_call.1} parent=1 // loop_header_branch
      %24 = sbr.rel (%p22) target = $region8
    $region5: #{tpu_custom_call.1} parent=1 // loop_body
      %s26 = ssub.s32 %s21, 1
      %s27 = ssub.s32 %s21, 2
      %s28 = sadd.s32 %s21, 1
      %s29 = ssub.s32 %s21, %s28
      %p30 = scmp.eq.s32.totalorder %s29, 0
      %s32 = sadd.s32 %s31, 1
      %s33 = scalar_select %p30, %s31, %s32
      %p36 = pneg %p30
      %p37 = scmp.eq.s32.totalorder %s21, 3
      %p38 = por %p36, %p37
      %p39 = scmp.ne.s32.totalorder %s31, %s34
      %p40 = scmp.eq.s32.totalorder %s21, 0
      %p41 = por %p39, %p40
      %p42 = scmp.ne.s32.totalorder %s31, %s34
      %p43 = scmp.eq.s32.totalorder %s26, 3
      %p44 = por %p42, %p43
      %p45 = scmp.ne.s32.totalorder %s34, %s35
      %p46 = scmp.eq.s32.totalorder %s26, 0
      %p47 = por %p45, %p46
      %p48 = scmp.ne.s32.totalorder %s34, %s35
      %p49 = scmp.eq.s32.totalorder %s27, 3
      %p50 = por %p48, %p49
      %p52 = scmp.ne.s32.totalorder %s35, %s51
      %p53 = scmp.eq.s32.totalorder %s27, 0
      %p54 = por %p52, %p53
      %s56 = sadd.s32 %s55, 1
      %p59 = scmp.eq.s32.totalorder %s21, 3
      %p60 = scmp.ne.s32.totalorder %s55, %s57
      %p61 = scmp.eq.s32.totalorder %s21, 0
      %p62 = por %p60, %p61
      %p63 = scmp.ne.s32.totalorder %s55, %s57
      %p64 = scmp.eq.s32.totalorder %s26, 3
      %p65 = por %p63, %p64
      %p66 = scmp.ne.s32.totalorder %s57, %s58
      %p67 = scmp.eq.s32.totalorder %s26, 0
      %p68 = por %p66, %p67
      %p69 = scmp.ne.s32.totalorder %s57, %s58
      %p70 = scmp.eq.s32.totalorder %s27, 3
      %p71 = por %p69, %p70
      %p73 = scmp.ne.s32.totalorder %s58, %s72
      %p74 = scmp.eq.s32.totalorder %s27, 0
      %p75 = por %p73, %p74
      %s77 = sadd.s32 %s76, 1
      %p80 = scmp.eq.s32.totalorder %s21, 3
      %p81 = scmp.ne.s32.totalorder %s76, %s78
      %p82 = scmp.eq.s32.totalorder %s21, 0
      %p83 = por %p81, %p82
      %p84 = scmp.ne.s32.totalorder %s76, %s78
      %p85 = scmp.eq.s32.totalorder %s26, 3
      %p86 = por %p84, %p85
      %p87 = scmp.ne.s32.totalorder %s78, %s79
      %p88 = scmp.eq.s32.totalorder %s26, 0
      %p89 = por %p87, %p88
      %p90 = scmp.ne.s32.totalorder %s78, %s79
      %p91 = scmp.eq.s32.totalorder %s27, 3
      %p92 = por %p90, %p91
      %p94 = scmp.ne.s32.totalorder %s79, %s93
      %p95 = scmp.eq.s32.totalorder %s27, 0
      %p96 = por %p94, %p95
      %s98 = sadd.s32 %s97, 1
      %p101 = scmp.eq.s32.totalorder %s21, 3
      %p102 = scmp.ne.s32.totalorder %s97, %s99
      %p103 = scmp.eq.s32.totalorder %s21, 0
      %p104 = por %p102, %p103
      %p105 = scmp.ne.s32.totalorder %s97, %s99
      %p106 = scmp.eq.s32.totalorder %s26, 3
      %p107 = por %p105, %p106
      %p108 = scmp.ne.s32.totalorder %s99, %s100
      %p109 = scmp.eq.s32.totalorder %s26, 0
      %p110 = por %p108, %p109
      %p111 = scmp.ne.s32.totalorder %s99, %s100
      %p112 = scmp.eq.s32.totalorder %s27, 3
      %p113 = por %p111, %p112
      %p115 = scmp.ne.s32.totalorder %s100, %s114
      %p116 = scmp.eq.s32.totalorder %s27, 0
      %p117 = por %p115, %p116
      %s119 = sadd.s32 %s118, 1
      %p122 = scmp.eq.s32.totalorder %s21, 3
      %p123 = scmp.ne.s32.totalorder %s118, %s120
      %p124 = scmp.eq.s32.totalorder %s21, 0
      %p125 = por %p123, %p124
      %p126 = scmp.ne.s32.totalorder %s118, %s120
      %p127 = scmp.eq.s32.totalorder %s26, 3
      %p128 = por %p126, %p127
      %p129 = scmp.ne.s32.totalorder %s120, %s121
      %p130 = scmp.eq.s32.totalorder %s26, 0
      %p131 = por %p129, %p130
      %p132 = scmp.ne.s32.totalorder %s120, %s121
      %p133 = scmp.eq.s32.totalorder %s27, 3
      %p134 = por %p132, %p133
      %p136 = scmp.ne.s32.totalorder %s121, %s135
      %p137 = scmp.eq.s32.totalorder %s27, 0
      %p138 = por %p136, %p137
      %s140 = sadd.s32 %s139, 1
      %p143 = scmp.eq.s32.totalorder %s21, 3
      %p144 = scmp.ne.s32.totalorder %s139, %s141
      %p145 = scmp.eq.s32.totalorder %s21, 0
      %p146 = por %p144, %p145
      %p147 = scmp.ne.s32.totalorder %s139, %s141
      %p148 = scmp.eq.s32.totalorder %s26, 3
      %p149 = por %p147, %p148
      %p150 = scmp.ne.s32.totalorder %s141, %s142
      %p151 = scmp.eq.s32.totalorder %s26, 0
      %p152 = por %p150, %p151
      %p153 = scmp.ne.s32.totalorder %s141, %s142
      %p154 = scmp.eq.s32.totalorder %s27, 3
      %p155 = por %p153, %p154
      %p157 = scmp.ne.s32.totalorder %s142, %s156
      %p158 = scmp.eq.s32.totalorder %s27, 0
      %p159 = por %p157, %p158
      %s161 = sadd.s32 %s160, 1
      %p164 = scmp.eq.s32.totalorder %s21, 3
      %p165 = scmp.ne.s32.totalorder %s160, %s162
      %p166 = scmp.eq.s32.totalorder %s21, 0
      %p167 = por %p165, %p166
      %p168 = scmp.ne.s32.totalorder %s160, %s162
      %p169 = scmp.eq.s32.totalorder %s26, 3
      %p170 = por %p168, %p169
      %p171 = scmp.ne.s32.totalorder %s162, %s163
      %p172 = scmp.eq.s32.totalorder %s26, 0
      %p173 = por %p171, %p172
      %p174 = scmp.ne.s32.totalorder %s162, %s163
      %p175 = scmp.eq.s32.totalorder %s27, 3
      %p176 = por %p174, %p175
      %p178 = scmp.ne.s32.totalorder %s163, %s177
      %p179 = scmp.eq.s32.totalorder %s27, 0
      %p180 = por %p178, %p179
      %s182 = sadd.s32 %s181, 1
      %p185 = scmp.eq.s32.totalorder %s21, 3
      %p186 = scmp.ne.s32.totalorder %s181, %s183
      %p187 = scmp.eq.s32.totalorder %s21, 0
      %p188 = por %p186, %p187
      %p189 = scmp.ne.s32.totalorder %s181, %s183
      %p190 = scmp.eq.s32.totalorder %s26, 3
      %p191 = por %p189, %p190
      %p192 = scmp.ne.s32.totalorder %s183, %s184
      %p193 = scmp.eq.s32.totalorder %s26, 0
      %p194 = por %p192, %p193
      %p195 = scmp.ne.s32.totalorder %s183, %s184
      %p196 = scmp.eq.s32.totalorder %s27, 3
      %p197 = por %p195, %p196
      %p199 = scmp.ne.s32.totalorder %s184, %s198
      %p200 = scmp.eq.s32.totalorder %s27, 0
      %p201 = por %p199, %p200
      %s202 = ssub.s32 %s21, %s28
      %p203 = scmp.eq.s32.totalorder %s202, 0
      %s205 = sadd.s32 %s204, 1
      %s206 = scalar_select %p203, %s204, %s205
      %p209 = pneg %p203
      %p210 = scmp.eq.s32.totalorder %s21, 3
      %p211 = por %p209, %p210
      %p212 = scmp.ne.s32.totalorder %s204, %s207
      %p213 = scmp.eq.s32.totalorder %s21, 0
      %p214 = por %p212, %p213
      %p215 = scmp.ne.s32.totalorder %s204, %s207
      %p216 = scmp.eq.s32.totalorder %s26, 3
      %p217 = por %p215, %p216
      %p218 = scmp.ne.s32.totalorder %s207, %s208
      %p219 = scmp.eq.s32.totalorder %s26, 0
      %p220 = por %p218, %p219
      %p221 = scmp.ne.s32.totalorder %s207, %s208
      %p222 = scmp.eq.s32.totalorder %s27, 3
      %p223 = por %p221, %p222
      %p225 = scmp.ne.s32.totalorder %s208, %s224
      %p226 = scmp.eq.s32.totalorder %s27, 0
      %p227 = por %p225, %p226
      %s228 = ssub.s32 %s21, %s28
      %p229 = scmp.eq.s32.totalorder %s228, 0
      %s231 = sadd.s32 %s230, 1
      %s232 = scalar_select %p229, %s230, %s231
      %p235 = pneg %p229
      %p236 = scmp.eq.s32.totalorder %s21, 3
      %p237 = por %p235, %p236
      %p238 = scmp.ne.s32.totalorder %s230, %s233
      %p239 = scmp.eq.s32.totalorder %s21, 0
      %p240 = por %p238, %p239
      %p241 = scmp.ne.s32.totalorder %s230, %s233
      %p242 = scmp.eq.s32.totalorder %s26, 3
      %p243 = por %p241, %p242
      %p244 = scmp.ne.s32.totalorder %s233, %s234
      %p245 = scmp.eq.s32.totalorder %s26, 0
      %p246 = por %p244, %p245
      %p247 = scmp.ne.s32.totalorder %s233, %s234
      %p248 = scmp.eq.s32.totalorder %s27, 3
      %p249 = por %p247, %p248
      %p251 = scmp.ne.s32.totalorder %s234, %s250
      %p252 = scmp.eq.s32.totalorder %s27, 0
      %p253 = por %p251, %p252
      %p254 = scmp.le.s32.totalorder 1, %s21
      %p255 = scmp.lt.s32.totalorder %s21, 5
      %p256 = pnand %p254, %p255
      %p257 = pneg %p256
      // Predicated region
      $region9: #{tpu_custom_call.1} parent=5 // pred_check
        _
      $region10: #{tpu_custom_call.1} parent=5 // pred_check_branch
        %259 = sbr.rel (%p256) target = $region12
      $region11: #{tpu_custom_call.1} parent=5 // pred_region
        %s260 = ssub.s32 %s21, 1
        // Predicated region
        $region13: #{tpu_custom_call.1} parent=11 // pred_check
          %p261 = pneg %p68
        $region14: #{tpu_custom_call.1} parent=11 // pred_check_branch
          %263 = sbr.rel (%p261) target = $region16
        $region15: #{tpu_custom_call.1} parent=11 // pred_region
          _
        $region16: #{tpu_custom_call.1} parent=11 // pred_fallthru
          _
        // Predicated region
        $region17: #{tpu_custom_call.1} parent=11 // pred_check
          %p264 = pneg %p89
        $region18: #{tpu_custom_call.1} parent=11 // pred_check_branch
          %266 = sbr.rel (%p264) target = $region20
        $region19: #{tpu_custom_call.1} parent=11 // pred_region
          _
        $region20: #{tpu_custom_call.1} parent=11 // pred_fallthru
          _
        // Predicated region
        $region21: #{tpu_custom_call.1} parent=11 // pred_check
          %p267 = pneg %p110
        $region22: #{tpu_custom_call.1} parent=11 // pred_check_branch
          %269 = sbr.rel (%p267) target = $region24
        $region23: #{tpu_custom_call.1} parent=11 // pred_region
          _
        $region24: #{tpu_custom_call.1} parent=11 // pred_fallthru
          _
        // Predicated region
        $region25: #{tpu_custom_call.1} parent=11 // pred_check
          %p270 = pneg %p131
        $region26: #{tpu_custom_call.1} parent=11 // pred_check_branch
          %272 = sbr.rel (%p270) target = $region28
        $region27: #{tpu_custom_call.1} parent=11 // pred_region
          _
        $region28: #{tpu_custom_call.1} parent=11 // pred_fallthru
          _
        // Predicated region
        $region29: #{tpu_custom_call.1} parent=11 // pred_check
          %p273 = pneg %p152
        $region30: #{tpu_custom_call.1} parent=11 // pred_check_branch
          %275 = sbr.rel (%p273) target = $region32
        $region31: #{tpu_custom_call.1} parent=11 // pred_region
          _
        $region32: #{tpu_custom_call.1} parent=11 // pred_fallthru
          _
        // Predicated region
        $region33: #{tpu_custom_call.1} parent=11 // pred_check
          %p276 = pneg %p173
        $region34: #{tpu_custom_call.1} parent=11 // pred_check_branch
          %278 = sbr.rel (%p276) target = $region36
        $region35: #{tpu_custom_call.1} parent=11 // pred_region
          _
        $region36: #{tpu_custom_call.1} parent=11 // pred_fallthru
          _
        // Predicated region
        $region37: #{tpu_custom_call.1} parent=11 // pred_check
          %p279 = pneg %p194
        $region38: #{tpu_custom_call.1} parent=11 // pred_check_branch
          %281 = sbr.rel (%p279) target = $region40
        $region39: #{tpu_custom_call.1} parent=11 // pred_region
          _
        $region40: #{tpu_custom_call.1} parent=11 // pred_fallthru
          _
      $region12: #{tpu_custom_call.1} parent=5 // pred_fallthru
        _
      %p282 = scmp.lt.s32.totalorder %s21, 4
      // Predicated region
      $region41: #{tpu_custom_call.1} parent=5 // pred_check
        %p283 = pneg %p282
      $region42: #{tpu_custom_call.1} parent=5 // pred_check_branch
        %285 = sbr.rel (%p283) target = $region44
      $region43: #{tpu_custom_call.1} parent=5 // pred_region
        // Predicated region
        $region45: #{tpu_custom_call.1} parent=43 // pred_check
          %p286 = pneg %p41
        $region46: #{tpu_custom_call.1} parent=43 // pred_check_branch
          %288 = sbr.rel (%p286) target = $region48
        $region47: #{tpu_custom_call.1} parent=43 // pred_region
          %s289 = smul.u32 4, %s21
          %p290 = scmp.lt.s32.totalorder %s289, 15
          %s291 = scalar_select %p290, %s289, 15
          %s292 = smul.addr %s291, 16
          %s293 = smul.addr %s292, 8
          %s294 = scalar_lea.vmem %s0, %s293
          %s295 = smul.u32 4, %s21
        $region48: #{tpu_custom_call.1} parent=43 // pred_fallthru
          _
      $region44: #{tpu_custom_call.1} parent=5 // pred_fallthru
        _
      %p296 = scmp.le.s32.totalorder 1, %s21
      %p297 = scmp.lt.s32.totalorder %s21, 5
      %p298 = pnand %p296, %p297
      %p299 = pneg %p298
      // Predicated region
      $region49: #{tpu_custom_call.1} parent=5 // pred_check
        _
      $region50: #{tpu_custom_call.1} parent=5 // pred_check_branch
        %301 = sbr.rel (%p298) target = $region52
      $region51: #{tpu_custom_call.1} parent=5 // pred_region
        %s302 = ssub.s32 %s21, 1
        %s303 = smul.u32 4, %s26
        %p304 = scmp.lt.s32.totalorder %s303, 15
        %s305 = scalar_select %p304, %s303, 15
        %s306 = smul.addr %s305, 16
        %s307 = smul.addr %s306, 8
        %s308 = scalar_lea.vmem %s0, %s307
        %p309 = pneg %p47
        %p310 = pneg %p44
        %p311 = pneg %p68
        %p312 = pneg %p65
        %p313 = pneg %p89
        %p314 = pneg %p86
        %p315 = pneg %p110
        %p316 = pneg %p107
        %p317 = pneg %p131
        %p318 = pneg %p128
        %p319 = pneg %p152
        %p320 = pneg %p149
        %p321 = pneg %p173
        %p322 = pneg %p170
        %p323 = pneg %p194
        %p324 = pneg %p191
        %p325 = pneg %p220
        %p326 = pneg %p217
        %s327 = smul.u32 4, %s26
        %p328 = scmp.lt.s32.totalorder %s327, 15
        %s329 = scalar_select %p328, %s327, 15
        %s330 = smul.addr %s329, 2
        %s331 = scalar_lea.vmem %s8, %s330
        %p332 = pneg %p246
        %p333 = pneg %p243
        %s334 = sand.u32 %s233, 1
        %s335 = scalar_lea.sflag [#allocation4], %s334
        %s336 = sand.u32 %s233, 1
        %s337 = smul.addr %s336, 4
        %s338 = scalar_lea.vmem [#allocation3], %s337
        %s339 = smul.u32 4, %s26
        %p340 = scmp.lt.s32.totalorder %s339, 15
        %s341 = scalar_select %p340, %s339, 15
        %s342 = smul.addr %s341, 16
        %s343 = smul.addr %s342, 8
        %s344 = scalar_lea.vmem %s0, %s343
        %s345 = smul.u32 4, %s26
        %s346 = smul.u32 4, %s26
        %p347 = scmp.lt.s32.totalorder %s346, 15
        %s348 = scalar_select %p347, %s346, 15
        %s349 = smul.addr %s348, 2
        %s350 = scalar_lea.vmem %s8, %s349
        %s351 = smul.u32 4, %s26
        %s352 = smul.u32 4, %s26
        %v353 = vld [vmem:[%s344] sm:$0xff]
        %v354 = vld [vmem:[%s344 + $0x8] sm:$0xff]
        %v355 = vld [vmem:[%s344 + $0x10] sm:$0xff]
        %v356 = vld [vmem:[%s344 + $0x18] sm:$0xff]
        %v357 = vld [vmem:[%s344 + $0x20] sm:$0xff]
        %v358 = vld [vmem:[%s344 + $0x28] sm:$0xff]
        %v359 = vld [vmem:[%s344 + $0x30] sm:$0xff]
        %v360 = vld [vmem:[%s344 + $0x38] sm:$0xff]
        %v361 = vld [vmem:[%s344 + $0x40] sm:$0xff]
        %v362 = vld [vmem:[%s344 + $0x48] sm:$0xff]
        %v363 = vld [vmem:[%s344 + $0x50] sm:$0xff]
        %v364 = vld [vmem:[%s344 + $0x58] sm:$0xff]
        %v365 = vld [vmem:[%s344 + $0x60] sm:$0xff]
        %v366 = vld [vmem:[%s344 + $0x68] sm:$0xff]
        %v367 = vld [vmem:[%s344 + $0x70] sm:$0xff]
        %v368 = vld [vmem:[%s344 + $0x78] sm:$0xff]
        %v369 = vld [vmem:[%s344 + $0x80] sm:$0xff]
        %v370 = vld [vmem:[%s344 + $0x88] sm:$0xff]
        %v371 = vld [vmem:[%s344 + $0x90] sm:$0xff]
        %v372 = vld [vmem:[%s344 + $0x98] sm:$0xff]
        %v373 = vld [vmem:[%s344 + $0xa0] sm:$0xff]
        %v374 = vld [vmem:[%s344 + $0xa8] sm:$0xff]
        %v375 = vld [vmem:[%s344 + $0xb0] sm:$0xff]
        %v376 = vld [vmem:[%s344 + $0xb8] sm:$0xff]
        %v377 = vld [vmem:[%s344 + $0xc0] sm:$0xff]
        %v378 = vld [vmem:[%s344 + $0xc8] sm:$0xff]
        %v379 = vld [vmem:[%s344 + $0xd0] sm:$0xff]
        %v380 = vld [vmem:[%s344 + $0xd8] sm:$0xff]
        %v381 = vld [vmem:[%s344 + $0xe0] sm:$0xff]
        %v382 = vld [vmem:[%s344 + $0xe8] sm:$0xff]
        %v383 = vld [vmem:[%s344 + $0xf0] sm:$0xff]
        %v384 = vld [vmem:[%s344 + $0xf8] sm:$0xff]
        %v385 = vld [vmem:[%s344 + $0x100] sm:$0xff]
        %v386 = vld [vmem:[%s344 + $0x108] sm:$0xff]
        %v387 = vld [vmem:[%s344 + $0x110] sm:$0xff]
        %v388 = vld [vmem:[%s344 + $0x118] sm:$0xff]
        %v389 = vld [vmem:[%s344 + $0x120] sm:$0xff]
        %v390 = vld [vmem:[%s344 + $0x128] sm:$0xff]
        %v391 = vld [vmem:[%s344 + $0x130] sm:$0xff]
        %v392 = vld [vmem:[%s344 + $0x138] sm:$0xff]
        %v393 = vld [vmem:[%s344 + $0x140] sm:$0xff]
        %v394 = vld [vmem:[%s344 + $0x148] sm:$0xff]
        %v395 = vld [vmem:[%s344 + $0x150] sm:$0xff]
        %v396 = vld [vmem:[%s344 + $0x158] sm:$0xff]
        %v397 = vld [vmem:[%s344 + $0x160] sm:$0xff]
        %v398 = vld [vmem:[%s344 + $0x168] sm:$0xff]
        %v399 = vld [vmem:[%s344 + $0x170] sm:$0xff]
        %v400 = vld [vmem:[%s344 + $0x178] sm:$0xff]
        %v401 = vld [vmem:[%s344 + $0x180] sm:$0xff]
        %v402 = vld [vmem:[%s344 + $0x188] sm:$0xff]
        %v403 = vld [vmem:[%s344 + $0x190] sm:$0xff]
        %v404 = vld [vmem:[%s344 + $0x198] sm:$0xff]
        %v405 = vld [vmem:[%s344 + $0x1a0] sm:$0xff]
        %v406 = vld [vmem:[%s344 + $0x1a8] sm:$0xff]
        %v407 = vld [vmem:[%s344 + $0x1b0] sm:$0xff]
        %v408 = vld [vmem:[%s344 + $0x1b8] sm:$0xff]
        %v409 = vld [vmem:[%s344 + $0x1c0] sm:$0xff]
        %v410 = vld [vmem:[%s344 + $0x1c8] sm:$0xff]
        %v411 = vld [vmem:[%s344 + $0x1d0] sm:$0xff]
        %v412 = vld [vmem:[%s344 + $0x1d8] sm:$0xff]
        %v413 = vld [vmem:[%s344 + $0x1e0] sm:$0xff]
        %v414 = vld [vmem:[%s344 + $0x1e8] sm:$0xff]
        %v415 = vld [vmem:[%s344 + $0x1f0] sm:$0xff]
        %v416 = vld [vmem:[%s344 + $0x1f8] sm:$0xff]
        %v417 = vld [vmem:[%s1] sm:$0xff]
        %v418 = vld [vmem:[%s1 + $0x8] sm:$0xff]
        %v419 = vld [vmem:[%s1 + $0x10] sm:$0xff]
        %v420 = vld [vmem:[%s1 + $0x18] sm:$0xff]
        %v421 = vld [vmem:[%s1 + $0x20] sm:$0xff]
        %v422 = vld [vmem:[%s1 + $0x28] sm:$0xff]
        %v423 = vld [vmem:[%s1 + $0x30] sm:$0xff]
        %v424 = vld [vmem:[%s1 + $0x38] sm:$0xff]
        %v425 = vld [vmem:[%s2] sm:$0xff]
        %v426 = vld [vmem:[%s2 + $0x8] sm:$0xff]
        %v427 = vld [vmem:[%s2 + $0x10] sm:$0xff]
        %v428 = vld [vmem:[%s2 + $0x18] sm:$0xff]
        %v429 = vld [vmem:[%s2 + $0x20] sm:$0xff]
        %v430 = vld [vmem:[%s2 + $0x28] sm:$0xff]
        %v431 = vld [vmem:[%s2 + $0x30] sm:$0xff]
        %v432 = vld [vmem:[%s2 + $0x38] sm:$0xff]
        %434 = vset.pattern.permute.xlu0 0
        %435 = vperm.xlu0 %434, %v425
        %v436 = vpop.permute.xlu0 %435
        %439 = vset.pattern.permute.xlu0 0
        %440 = vperm.xlu0 %439, %v426
        %v441 = vpop.permute.xlu0 %440
        %444 = vset.pattern.permute.xlu0 0
        %445 = vperm.xlu0 %444, %v427
        %v446 = vpop.permute.xlu0 %445
        %449 = vset.pattern.permute.xlu0 0
        %450 = vperm.xlu0 %449, %v428
        %v451 = vpop.permute.xlu0 %450
        %454 = vset.pattern.permute.xlu0 0
        %455 = vperm.xlu0 %454, %v429
        %v456 = vpop.permute.xlu0 %455
        %459 = vset.pattern.permute.xlu0 0
        %460 = vperm.xlu0 %459, %v430
        %v461 = vpop.permute.xlu0 %460
        %464 = vset.pattern.permute.xlu0 0
        %465 = vperm.xlu0 %464, %v431
        %v466 = vpop.permute.xlu0 %465
        %469 = vset.pattern.permute.xlu0 0
        %470 = vperm.xlu0 %469, %v432
        %v471 = vpop.permute.xlu0 %470
        %473 = vmatprep.subr.mxu0 0.0
        %474 = vmatpush1.msra.mxu0 %v353
        %475 = vmatprep.subr.mxu0 0.0
        %476 = vmatpush1.msra.mxu0 %v354
        %477 = vmatprep.subr.mxu0 0.0
        %478 = vmatpush1.msra.mxu0 %v355
        %479 = vmatprep.subr.mxu0 0.0
        %480 = vmatpush1.msra.mxu0 %v356
        %481 = vmatprep.subr.mxu0 0.0
        %482 = vmatpush1.msra.mxu0 %v357
        %483 = vmatprep.subr.mxu0 0.0
        %484 = vmatpush1.msra.mxu0 %v358
        %485 = vmatprep.subr.mxu0 0.0
        %486 = vmatpush1.msra.mxu0 %v359
        %487 = vmatprep.subr.mxu0 0.0
        %488 = vmatpush1.msra.mxu0 %v360
        %489 = vmatprep.subr.mxu0 0.0
        %490 = vmatpush1.msra.mxu0 %v361
        %491 = vmatprep.subr.mxu0 0.0
        %492 = vmatpush1.msra.mxu0 %v362
        %493 = vmatprep.subr.mxu0 0.0
        %494 = vmatpush1.msra.mxu0 %v363
        %495 = vmatprep.subr.mxu0 0.0
        %496 = vmatpush1.msra.mxu0 %v364
        %497 = vmatprep.subr.mxu0 0.0
        %498 = vmatpush1.msra.mxu0 %v365
        %499 = vmatprep.subr.mxu0 0.0
        %500 = vmatpush1.msra.mxu0 %v366
        %501 = vmatprep.subr.mxu0 0.0
        %502 = vmatpush1.msra.mxu0 %v367
        %503 = vmatprep.subr.mxu0 0.0
        %504 = vmatpush1.msra.mxu0 %v368
        %505 = vmatprep.subr.mxu0 0.0
        %506 = vmatpush1.msra.mxu0 0.0
        %507 = vmatprep.subr.mxu0 0.0
        %508 = vmatpush1.msra.mxu0 0.0
        %509 = vmatprep.subr.mxu0 0.0
        %510 = vmatpush1.msra.mxu0 0.0
        %511 = vmatprep.subr.mxu0 0.0
        %512 = vmatpush1.msra.mxu0 0.0
        %513 = vmatprep.subr.mxu0 0.0
        %514 = vmatpush1.msra.mxu0 0.0
        %515 = vmatprep.subr.mxu0 0.0
        %516 = vmatpush1.msra.mxu0 0.0
        %517 = vmatprep.subr.mxu0 0.0
        %518 = vmatpush1.msra.mxu0 0.0
        %519 = vmatprep.subr.mxu0 0.0
        %520 = vmatpush1.msra.mxu0 0.0
        %521 = vmatprep.subr.mxu0 0.0
        %522 = vmatpush1.msra.mxu0 0.0
        %523 = vmatprep.subr.mxu0 0.0
        %524 = vmatpush1.msra.mxu0 0.0
        %525 = vmatprep.subr.mxu0 0.0
        %526 = vmatpush1.msra.mxu0 0.0
        %527 = vmatprep.subr.mxu0 0.0
        %528 = vmatpush1.msra.mxu0 0.0
        %529 = vmatprep.subr.mxu0 0.0
        %530 = vmatpush1.msra.mxu0 0.0
        %531 = vmatprep.subr.mxu0 0.0
        %532 = vmatpush1.msra.mxu0 0.0
        %533 = vmatprep.subr.mxu0 0.0
        %534 = vmatpush1.msra.mxu0 0.0
        %535 = vmatprep.subr.mxu0 0.0
        %536 = vmatpush1.msra.mxu0 0.0
        %537 = vmatprep.mubr.f32.mxu0 0.0
        %538 = vmatmul.mubr.f32.gmra.mrb[0].mxu0 %v417
        %v539 = vpop.f32.mrb[0].mxu0
        %v540 = vadd.f32 %v436, %v539
        %v541 = vpop.f32.mrb[0].mxu0
        %542 = vmatprep.mubr.f32.mxu0 0.0
        %543 = vmatmul.mubr.f32.gmra.mrb[0].mxu0 %v418
        %v544 = vpop.f32.mrb[0].mxu0
        %v545 = vadd.f32 %v441, %v544
        %v546 = vpop.f32.mrb[0].mxu0
        %547 = vmatprep.mubr.f32.mxu0 0.0
        %548 = vmatmul.mubr.f32.gmra.mrb[0].mxu0 %v419
        %v549 = vpop.f32.mrb[0].mxu0
        %v550 = vadd.f32 %v446, %v549
        %v551 = vpop.f32.mrb[0].mxu0
        %552 = vmatprep.mubr.f32.mxu0 0.0
        %553 = vmatmul.mubr.f32.gmra.mrb[0].mxu0 %v420
        %v554 = vpop.f32.mrb[0].mxu0
        %v555 = vadd.f32 %v451, %v554
        %v556 = vpop.f32.mrb[0].mxu0
        %557 = vmatprep.mubr.f32.mxu0 0.0
        %558 = vmatmul.mubr.f32.gmra.mrb[0].mxu0 %v421
        %v559 = vpop.f32.mrb[0].mxu0
        %v560 = vadd.f32 %v456, %v559
        %v561 = vpop.f32.mrb[0].mxu0
        %562 = vmatprep.mubr.f32.mxu0 0.0
        %563 = vmatmul.mubr.f32.gmra.mrb[0].mxu0 %v422
        %v564 = vpop.f32.mrb[0].mxu0
        %v565 = vadd.f32 %v461, %v564
        %v566 = vpop.f32.mrb[0].mxu0
        %567 = vmatprep.mubr.f32.mxu0 0.0
        %568 = vmatmul.mubr.f32.gmra.mrb[0].mxu0 %v423
        %v569 = vpop.f32.mrb[0].mxu0
        %v570 = vadd.f32 %v466, %v569
        %v571 = vpop.f32.mrb[0].mxu0
        %572 = vmatprep.mubr.f32.mxu0 0.0
        %573 = vmatmul.mubr.f32.gmra.mrb[0].mxu0 %v424
        %v574 = vpop.f32.mrb[0].mxu0
        %v575 = vadd.f32 %v471, %v574
        %v576 = vpop.f32.mrb[0].mxu0
        %577 = vdwg.mxu0
        %578 = vmatprep.subr.mxu0 0.0
        %579 = vmatpush1.msra.mxu0 %v369
        %580 = vmatprep.subr.mxu0 0.0
        %581 = vmatpush1.msra.mxu0 %v370
        %582 = vmatprep.subr.mxu0 0.0
        %583 = vmatpush1.msra.mxu0 %v371
        %584 = vmatprep.subr.mxu0 0.0
        %585 = vmatpush1.msra.mxu0 %v372
        %586 = vmatprep.subr.mxu0 0.0
        %587 = vmatpush1.msra.mxu0 %v373
        %588 = vmatprep.subr.mxu0 0.0
        %589 = vmatpush1.msra.mxu0 %v374
        %590 = vmatprep.subr.mxu0 0.0
        %591 = vmatpush1.msra.mxu0 %v375
        %592 = vmatprep.subr.mxu0 0.0
        %593 = vmatpush1.msra.mxu0 %v376
        %594 = vmatprep.subr.mxu0 0.0
        %595 = vmatpush1.msra.mxu0 %v377
        %596 = vmatprep.subr.mxu0 0.0
        %597 = vmatpush1.msra.mxu0 %v378
        %598 = vmatprep.subr.mxu0 0.0
        %599 = vmatpush1.msra.mxu0 %v379
        %600 = vmatprep.subr.mxu0 0.0
        %601 = vmatpush1.msra.mxu0 %v380
        %602 = vmatprep.subr.mxu0 0.0
        %603 = vmatpush1.msra.mxu0 %v381
        %604 = vmatprep.subr.mxu0 0.0
        %605 = vmatpush1.msra.mxu0 %v382
        %606 = vmatprep.subr.mxu0 0.0
        %607 = vmatpush1.msra.mxu0 %v383
        %608 = vmatprep.subr.mxu0 0.0
        %609 = vmatpush1.msra.mxu0 %v384
        %610 = vmatprep.subr.mxu0 0.0
        %611 = vmatpush1.msra.mxu0 0.0
        %612 = vmatprep.subr.mxu0 0.0
        %613 = vmatpush1.msra.mxu0 0.0
        %614 = vmatprep.subr.mxu0 0.0
        %615 = vmatpush1.msra.mxu0 0.0
        %616 = vmatprep.subr.mxu0 0.0
        %617 = vmatpush1.msra.mxu0 0.0
        %618 = vmatprep.subr.mxu0 0.0
        %619 = vmatpush1.msra.mxu0 0.0
        %620 = vmatprep.subr.mxu0 0.0
        %621 = vmatpush1.msra.mxu0 0.0
        %622 = vmatprep.subr.mxu0 0.0
        %623 = vmatpush1.msra.mxu0 0.0
        %624 = vmatprep.subr.mxu0 0.0
        %625 = vmatpush1.msra.mxu0 0.0
        %626 = vmatprep.subr.mxu0 0.0
        %627 = vmatpush1.msra.mxu0 0.0
        %628 = vmatprep.subr.mxu0 0.0
        %629 = vmatpush1.msra.mxu0 0.0
        %630 = vmatprep.subr.mxu0 0.0
        %631 = vmatpush1.msra.mxu0 0.0
        %632 = vmatprep.subr.mxu0 0.0
        %633 = vmatpush1.msra.mxu0 0.0
        %634 = vmatprep.subr.mxu0 0.0
        %635 = vmatpush1.msra.mxu0 0.0
        %636 = vmatprep.subr.mxu0 0.0
        %637 = vmatpush1.msra.mxu0 0.0
        %638 = vmatprep.subr.mxu0 0.0
        %639 = vmatpush1.msra.mxu0 0.0
        %640 = vmatprep.subr.mxu0 0.0
        %641 = vmatpush1.msra.mxu0 0.0
        %642 = vmatprep.mubr.f32.mxu0 0.0
        %643 = vmatmul.mubr.f32.gmra.mrb[0].mxu0 %v417
        %v644 = vpop.f32.mrb[0].mxu0
        %v645 = vadd.f32 %v436, %v644
        %v646 = vpop.f32.mrb[0].mxu0
        %647 = vmatprep.mubr.f32.mxu0 0.0
        %648 = vmatmul.mubr.f32.gmra.mrb[0].mxu0 %v418
        %v649 = vpop.f32.mrb[0].mxu0
        %v650 = vadd.f32 %v441, %v649
        %v651 = vpop.f32.mrb[0].mxu0
        %652 = vmatprep.mubr.f32.mxu0 0.0
        %653 = vmatmul.mubr.f32.gmra.mrb[0].mxu0 %v419
        %v654 = vpop.f32.mrb[0].mxu0
        %v655 = vadd.f32 %v446, %v654
        %v656 = vpop.f32.mrb[0].mxu0
        %657 = vmatprep.mubr.f32.mxu0 0.0
        %658 = vmatmul.mubr.f32.gmra.mrb[0].mxu0 %v420
        %v659 = vpop.f32.mrb[0].mxu0
        %v660 = vadd.f32 %v451, %v659
        %v661 = vpop.f32.mrb[0].mxu0
        %662 = vmatprep.mubr.f32.mxu0 0.0
        %663 = vmatmul.mubr.f32.gmra.mrb[0].mxu0 %v421
        %v664 = vpop.f32.mrb[0].mxu0
        %v665 = vadd.f32 %v456, %v664
        %v666 = vpop.f32.mrb[0].mxu0
        %667 = vmatprep.mubr.f32.mxu0 0.0
        %668 = vmatmul.mubr.f32.gmra.mrb[0].mxu0 %v422
        %v669 = vpop.f32.mrb[0].mxu0
        %v670 = vadd.f32 %v461, %v669
        %v671 = vpop.f32.mrb[0].mxu0
        %672 = vmatprep.mubr.f32.mxu0 0.0
        %673 = vmatmul.mubr.f32.gmra.mrb[0].mxu0 %v423
        %v674 = vpop.f32.mrb[0].mxu0
        %v675 = vadd.f32 %v466, %v674
        %v676 = vpop.f32.mrb[0].mxu0
        %677 = vmatprep.mubr.f32.mxu0 0.0
        %678 = vmatmul.mubr.f32.gmra.mrb[0].mxu0 %v424
        %v679 = vpop.f32.mrb[0].mxu0
        %v680 = vadd.f32 %v471, %v679
        %v681 = vpop.f32.mrb[0].mxu0
        %682 = vdwg.mxu0
        %683 = vmatprep.subr.mxu0 0.0
        %684 = vmatpush1.msra.mxu0 %v385
        %685 = vmatprep.subr.mxu0 0.0
        %686 = vmatpush1.msra.mxu0 %v386
        %687 = vmatprep.subr.mxu0 0.0
        %688 = vmatpush1.msra.mxu0 %v387
        %689 = vmatprep.subr.mxu0 0.0
        %690 = vmatpush1.msra.mxu0 %v388
        %691 = vmatprep.subr.mxu0 0.0
        %692 = vmatpush1.msra.mxu0 %v389
        %693 = vmatprep.subr.mxu0 0.0
        %694 = vmatpush1.msra.mxu0 %v390
        %695 = vmatprep.subr.mxu0 0.0
        %696 = vmatpush1.msra.mxu0 %v391
        %697 = vmatprep.subr.mxu0 0.0
        %698 = vmatpush1.msra.mxu0 %v392
        %699 = vmatprep.subr.mxu0 0.0
        %700 = vmatpush1.msra.mxu0 %v393
        %701 = vmatprep.subr.mxu0 0.0
        %702 = vmatpush1.msra.mxu0 %v394
        %703 = vmatprep.subr.mxu0 0.0
        %704 = vmatpush1.msra.mxu0 %v395
        %705 = vmatprep.subr.mxu0 0.0
        %706 = vmatpush1.msra.mxu0 %v396
        %707 = vmatprep.subr.mxu0 0.0
        %708 = vmatpush1.msra.mxu0 %v397
        %709 = vmatprep.subr.mxu0 0.0
        %710 = vmatpush1.msra.mxu0 %v398
        %711 = vmatprep.subr.mxu0 0.0
        %712 = vmatpush1.msra.mxu0 %v399
        %713 = vmatprep.subr.mxu0 0.0
        %714 = vmatpush1.msra.mxu0 %v400
        %715 = vmatprep.subr.mxu0 0.0
        %716 = vmatpush1.msra.mxu0 0.0
        %717 = vmatprep.subr.mxu0 0.0
        %718 = vmatpush1.msra.mxu0 0.0
        %719 = vmatprep.subr.mxu0 0.0
        %720 = vmatpush1.msra.mxu0 0.0
        %721 = vmatprep.subr.mxu0 0.0
        %722 = vmatpush1.msra.mxu0 0.0
        %723 = vmatprep.subr.mxu0 0.0
        %724 = vmatpush1.msra.mxu0 0.0
        %725 = vmatprep.subr.mxu0 0.0
        %726 = vmatpush1.msra.mxu0 0.0
        %727 = vmatprep.subr.mxu0 0.0
        %728 = vmatpush1.msra.mxu0 0.0
        %729 = vmatprep.subr.mxu0 0.0
        %730 = vmatpush1.msra.mxu0 0.0
        %731 = vmatprep.subr.mxu0 0.0
        %732 = vmatpush1.msra.mxu0 0.0
        %733 = vmatprep.subr.mxu0 0.0
        %734 = vmatpush1.msra.mxu0 0.0
        %735 = vmatprep.subr.mxu0 0.0
        %736 = vmatpush1.msra.mxu0 0.0
        %737 = vmatprep.subr.mxu0 0.0
        %738 = vmatpush1.msra.mxu0 0.0
        %739 = vmatprep.subr.mxu0 0.0
        %740 = vmatpush1.msra.mxu0 0.0
        %741 = vmatprep.subr.mxu0 0.0
        %742 = vmatpush1.msra.mxu0 0.0
        %743 = vmatprep.subr.mxu0 0.0
        %744 = vmatpush1.msra.mxu0 0.0
        %745 = vmatprep.subr.mxu0 0.0
        %746 = vmatpush1.msra.mxu0 0.0
        %747 = vmatprep.mubr.f32.mxu0 0.0
        %748 = vmatmul.mubr.f32.gmra.mrb[0].mxu0 %v417
        %v749 = vpop.f32.mrb[0].mxu0
        %v750 = vadd.f32 %v436, %v749
        %v751 = vpop.f32.mrb[0].mxu0
        %752 = vmatprep.mubr.f32.mxu0 0.0
        %753 = vmatmul.mubr.f32.gmra.mrb[0].mxu0 %v418
        %v754 = vpop.f32.mrb[0].mxu0
        %v755 = vadd.f32 %v441, %v754
        %v756 = vpop.f32.mrb[0].mxu0
        %757 = vmatprep.mubr.f32.mxu0 0.0
        %758 = vmatmul.mubr.f32.gmra.mrb[0].mxu0 %v419
        %v759 = vpop.f32.mrb[0].mxu0
        %v760 = vadd.f32 %v446, %v759
        %v761 = vpop.f32.mrb[0].mxu0
        %762 = vmatprep.mubr.f32.mxu0 0.0
        %763 = vmatmul.mubr.f32.gmra.mrb[0].mxu0 %v420
        %v764 = vpop.f32.mrb[0].mxu0
        %v765 = vadd.f32 %v451, %v764
        %v766 = vpop.f32.mrb[0].mxu0
        %767 = vmatprep.mubr.f32.mxu0 0.0
        %768 = vmatmul.mubr.f32.gmra.mrb[0].mxu0 %v421
        %v769 = vpop.f32.mrb[0].mxu0
        %v770 = vadd.f32 %v456, %v769
        %v771 = vpop.f32.mrb[0].mxu0
        %772 = vmatprep.mubr.f32.mxu0 0.0
        %773 = vmatmul.mubr.f32.gmra.mrb[0].mxu0 %v422
        %v774 = vpop.f32.mrb[0].mxu0
        %v775 = vadd.f32 %v461, %v774
        %v776 = vpop.f32.mrb[0].mxu0
        %777 = vmatprep.mubr.f32.mxu0 0.0
        %778 = vmatmul.mubr.f32.gmra.mrb[0].mxu0 %v423
        %v779 = vpop.f32.mrb[0].mxu0
        %v780 = vadd.f32 %v466, %v779
        %v781 = vpop.f32.mrb[0].mxu0
        %782 = vmatprep.mubr.f32.mxu0 0.0
        %783 = vmatmul.mubr.f32.gmra.mrb[0].mxu0 %v424
        %v784 = vpop.f32.mrb[0].mxu0
        %v785 = vadd.f32 %v471, %v784
        %v786 = vpop.f32.mrb[0].mxu0
        %787 = vdwg.mxu0
        %788 = vmatprep.subr.mxu0 0.0
        %789 = vmatpush1.msra.mxu0 %v401
        %790 = vmatprep.subr.mxu0 0.0
        %791 = vmatpush1.msra.mxu0 %v402
        %792 = vmatprep.subr.mxu0 0.0
        %793 = vmatpush1.msra.mxu0 %v403
        %794 = vmatprep.subr.mxu0 0.0
        %795 = vmatpush1.msra.mxu0 %v404
        %796 = vmatprep.subr.mxu0 0.0
        %797 = vmatpush1.msra.mxu0 %v405
        %798 = vmatprep.subr.mxu0 0.0
        %799 = vmatpush1.msra.mxu0 %v406
        %800 = vmatprep.subr.mxu0 0.0
        %801 = vmatpush1.msra.mxu0 %v407
        %802 = vmatprep.subr.mxu0 0.0
        %803 = vmatpush1.msra.mxu0 %v408
        %804 = vmatprep.subr.mxu0 0.0
        %805 = vmatpush1.msra.mxu0 %v409
        %806 = vmatprep.subr.mxu0 0.0
        %807 = vmatpush1.msra.mxu0 %v410
        %808 = vmatprep.subr.mxu0 0.0
        %809 = vmatpush1.msra.mxu0 %v411
        %810 = vmatprep.subr.mxu0 0.0
        %811 = vmatpush1.msra.mxu0 %v412
        %812 = vmatprep.subr.mxu0 0.0
        %813 = vmatpush1.msra.mxu0 %v413
        %814 = vmatprep.subr.mxu0 0.0
        %815 = vmatpush1.msra.mxu0 %v414
        %816 = vmatprep.subr.mxu0 0.0
        %817 = vmatpush1.msra.mxu0 %v415
        %818 = vmatprep.subr.mxu0 0.0
        %819 = vmatpush1.msra.mxu0 %v416
        %820 = vmatprep.subr.mxu0 0.0
        %821 = vmatpush1.msra.mxu0 0.0
        %822 = vmatprep.subr.mxu0 0.0
        %823 = vmatpush1.msra.mxu0 0.0
        %824 = vmatprep.subr.mxu0 0.0
        %825 = vmatpush1.msra.mxu0 0.0
        %826 = vmatprep.subr.mxu0 0.0
        %827 = vmatpush1.msra.mxu0 0.0
        %828 = vmatprep.subr.mxu0 0.0
        %829 = vmatpush1.msra.mxu0 0.0
        %830 = vmatprep.subr.mxu0 0.0
        %831 = vmatpush1.msra.mxu0 0.0
        %832 = vmatprep.subr.mxu0 0.0
        %833 = vmatpush1.msra.mxu0 0.0
        %834 = vmatprep.subr.mxu0 0.0
        %835 = vmatpush1.msra.mxu0 0.0
        %836 = vmatprep.subr.mxu0 0.0
        %837 = vmatpush1.msra.mxu0 0.0
        %838 = vmatprep.subr.mxu0 0.0
        %839 = vmatpush1.msra.mxu0 0.0
        %840 = vmatprep.subr.mxu0 0.0
        %841 = vmatpush1.msra.mxu0 0.0
        %842 = vmatprep.subr.mxu0 0.0
        %843 = vmatpush1.msra.mxu0 0.0
        %844 = vmatprep.subr.mxu0 0.0
        %845 = vmatpush1.msra.mxu0 0.0
        %846 = vmatprep.subr.mxu0 0.0
        %847 = vmatpush1.msra.mxu0 0.0
        %848 = vmatprep.subr.mxu0 0.0
        %849 = vmatpush1.msra.mxu0 0.0
        %850 = vmatprep.subr.mxu0 0.0
        %851 = vmatpush1.msra.mxu0 0.0
        %852 = vmatprep.mubr.f32.mxu0 0.0
        %853 = vmatmul.mubr.f32.gmra.mrb[0].mxu0 %v417
        %v854 = vpop.f32.mrb[0].mxu0
        %v855 = vadd.f32 %v436, %v854
        %v856 = vpop.f32.mrb[0].mxu0
        %857 = vmatprep.mubr.f32.mxu0 0.0
        %858 = vmatmul.mubr.f32.gmra.mrb[0].mxu0 %v418
        %v859 = vpop.f32.mrb[0].mxu0
        %v860 = vadd.f32 %v441, %v859
        %v861 = vpop.f32.mrb[0].mxu0
        %862 = vmatprep.mubr.f32.mxu0 0.0
        %863 = vmatmul.mubr.f32.gmra.mrb[0].mxu0 %v419
        %v864 = vpop.f32.mrb[0].mxu0
        %v865 = vadd.f32 %v446, %v864
        %v866 = vpop.f32.mrb[0].mxu0
        %867 = vmatprep.mubr.f32.mxu0 0.0
        %868 = vmatmul.mubr.f32.gmra.mrb[0].mxu0 %v420
        %v869 = vpop.f32.mrb[0].mxu0
        %v870 = vadd.f32 %v451, %v869
        %v871 = vpop.f32.mrb[0].mxu0
        %872 = vmatprep.mubr.f32.mxu0 0.0
        %873 = vmatmul.mubr.f32.gmra.mrb[0].mxu0 %v421
        %v874 = vpop.f32.mrb[0].mxu0
        %v875 = vadd.f32 %v456, %v874
        %v876 = vpop.f32.mrb[0].mxu0
        %877 = vmatprep.mubr.f32.mxu0 0.0
        %878 = vmatmul.mubr.f32.gmra.mrb[0].mxu0 %v422
        %v879 = vpop.f32.mrb[0].mxu0
        %v880 = vadd.f32 %v461, %v879
        %v881 = vpop.f32.mrb[0].mxu0
        %882 = vmatprep.mubr.f32.mxu0 0.0
        %883 = vmatmul.mubr.f32.gmra.mrb[0].mxu0 %v423
        %v884 = vpop.f32.mrb[0].mxu0
        %v885 = vadd.f32 %v466, %v884
        %v886 = vpop.f32.mrb[0].mxu0
        %887 = vmatprep.mubr.f32.mxu0 0.0
        %888 = vmatmul.mubr.f32.gmra.mrb[0].mxu0 %v424
        %v889 = vpop.f32.mrb[0].mxu0
        %v890 = vadd.f32 %v471, %v889
        %v891 = vpop.f32.mrb[0].mxu0
        %892 = vdwg.mxu0
        %v893 = vtanh.pop %v540
        %v894 = vtanh.pop %v545
        %v895 = vtanh.pop %v550
        %v896 = vtanh.pop %v555
        %v897 = vtanh.pop %v560
        %v898 = vtanh.pop %v565
        %v899 = vtanh.pop %v570
        %v900 = vtanh.pop %v575
        %v901 = vtanh.pop %v645
        %v902 = vtanh.pop %v650
        %v903 = vtanh.pop %v655
        %v904 = vtanh.pop %v660
        %v905 = vtanh.pop %v665
        %v906 = vtanh.pop %v670
        %v907 = vtanh.pop %v675
        %v908 = vtanh.pop %v680
        %v909 = vtanh.pop %v750
        %v910 = vtanh.pop %v755
        %v911 = vtanh.pop %v760
        %v912 = vtanh.pop %v765
        %v913 = vtanh.pop %v770
        %v914 = vtanh.pop %v775
        %v915 = vtanh.pop %v780
        %v916 = vtanh.pop %v785
        %v917 = vtanh.pop %v855
        %v918 = vtanh.pop %v860
        %v919 = vtanh.pop %v865
        %v920 = vtanh.pop %v870
        %v921 = vtanh.pop %v875
        %v922 = vtanh.pop %v880
        %v923 = vtanh.pop %v885
        %v924 = vtanh.pop %v890
        %v925 = vld [vmem:[%s3] sm:$0x1]
        %v926 = vld [vmem:[#allocation2] sm:$0x1]
        %928 = vset.pattern.permute.xlu0 0
        %929 = vperm.xlu0 %928, %v926
        %v930 = vpop.permute.xlu0 %929
        %v932 = vlaneseq
        %v933 = vshrl.u32 %v932, 7
        %v934 = vsub.s32 0, %v933
        %v935 = vrot.slane %v930, %v934
        %vm936 = vcmask 523264
        %v938 = vsel %vm936, %v925, 0
        %940 = vmatprep.subr.mxu0 0.0
        %941 = vmatpush1.msra.mxu0 %v893
        %942 = vmatprep.subr.mxu0 0.0
        %943 = vmatpush1.msra.mxu0 %v894
        %944 = vmatprep.subr.mxu0 0.0
        %945 = vmatpush1.msra.mxu0 %v895
        %946 = vmatprep.subr.mxu0 0.0
        %947 = vmatpush1.msra.mxu0 %v896
        %948 = vmatprep.subr.mxu0 0.0
        %949 = vmatpush1.msra.mxu0 %v897
        %950 = vmatprep.subr.mxu0 0.0
        %951 = vmatpush1.msra.mxu0 %v898
        %952 = vmatprep.subr.mxu0 0.0
        %953 = vmatpush1.msra.mxu0 %v899
        %954 = vmatprep.subr.mxu0 0.0
        %955 = vmatpush1.msra.mxu0 %v900
        %956 = vmatprep.subr.mxu0 0.0
        %957 = vmatpush1.msra.mxu0 0.0
        %958 = vmatprep.subr.mxu0 0.0
        %959 = vmatpush1.msra.mxu0 0.0
        %960 = vmatprep.subr.mxu0 0.0
        %961 = vmatpush1.msra.mxu0 0.0
        %962 = vmatprep.subr.mxu0 0.0
        %963 = vmatpush1.msra.mxu0 0.0
        %964 = vmatprep.subr.mxu0 0.0
        %965 = vmatpush1.msra.mxu0 0.0
        %966 = vmatprep.subr.mxu0 0.0
        %967 = vmatpush1.msra.mxu0 0.0
        %968 = vmatprep.subr.mxu0 0.0
        %969 = vmatpush1.msra.mxu0 0.0
        %970 = vmatprep.subr.mxu0 0.0
        %971 = vmatpush1.msra.mxu0 0.0
        %972 = vmatprep.subr.mxu0 0.0
        %973 = vmatpush1.msra.mxu0 0.0
        %974 = vmatprep.subr.mxu0 0.0
        %975 = vmatpush1.msra.mxu0 0.0
        %976 = vmatprep.subr.mxu0 0.0
        %977 = vmatpush1.msra.mxu0 0.0
        %978 = vmatprep.subr.mxu0 0.0
        %979 = vmatpush1.msra.mxu0 0.0
        %980 = vmatprep.subr.mxu0 0.0
        %981 = vmatpush1.msra.mxu0 0.0
        %982 = vmatprep.subr.mxu0 0.0
        %983 = vmatpush1.msra.mxu0 0.0
        %984 = vmatprep.subr.mxu0 0.0
        %985 = vmatpush1.msra.mxu0 0.0
        %986 = vmatprep.subr.mxu0 0.0
        %987 = vmatpush1.msra.mxu0 0.0
        %988 = vmatprep.subr.mxu0 0.0
        %989 = vmatpush1.msra.mxu0 0.0
        %990 = vmatprep.subr.mxu0 0.0
        %991 = vmatpush1.msra.mxu0 0.0
        %992 = vmatprep.subr.mxu0 0.0
        %993 = vmatpush1.msra.mxu0 0.0
        %994 = vmatprep.subr.mxu0 0.0
        %995 = vmatpush1.msra.mxu0 0.0
        %996 = vmatprep.subr.mxu0 0.0
        %997 = vmatpush1.msra.mxu0 0.0
        %998 = vmatprep.subr.mxu0 0.0
        %999 = vmatpush1.msra.mxu0 0.0
        %1000 = vmatprep.subr.mxu0 0.0
        %1001 = vmatpush1.msra.mxu0 0.0
        %1002 = vmatprep.subr.mxu0 0.0
        %1003 = vmatpush1.msra.mxu0 0.0
        %1004 = vmatprep.mubr.f32.mxu0 0.0
        %1005 = vmatmul.mubr.f32.gmra.mrb[0].mxu0 %v938
        %v1006 = vpop.f32.mrb[0].mxu0
        %v1007 = vadd.f32 %v935, %v1006
        %v1008 = vpop.f32.mrb[0].mxu0
        %1009 = vdwg.mxu0
        %1010 = vmatprep.subr.mxu0 0.0
        %1011 = vmatpush1.msra.mxu0 %v901
        %1012 = vmatprep.subr.mxu0 0.0
        %1013 = vmatpush1.msra.mxu0 %v902
        %1014 = vmatprep.subr.mxu0 0.0
        %1015 = vmatpush1.msra.mxu0 %v903
        %1016 = vmatprep.subr.mxu0 0.0
        %1017 = vmatpush1.msra.mxu0 %v904
        %1018 = vmatprep.subr.mxu0 0.0
        %1019 = vmatpush1.msra.mxu0 %v905
        %1020 = vmatprep.subr.mxu0 0.0
        %1021 = vmatpush1.msra.mxu0 %v906
        %1022 = vmatprep.subr.mxu0 0.0
        %1023 = vmatpush1.msra.mxu0 %v907
        %1024 = vmatprep.subr.mxu0 0.0
        %1025 = vmatpush1.msra.mxu0 %v908
        %1026 = vmatprep.subr.mxu0 0.0
        %1027 = vmatpush1.msra.mxu0 0.0
        %1028 = vmatprep.subr.mxu0 0.0
        %1029 = vmatpush1.msra.mxu0 0.0
        %1030 = vmatprep.subr.mxu0 0.0
        %1031 = vmatpush1.msra.mxu0 0.0
        %1032 = vmatprep.subr.mxu0 0.0
        %1033 = vmatpush1.msra.mxu0 0.0
        %1034 = vmatprep.subr.mxu0 0.0
        %1035 = vmatpush1.msra.mxu0 0.0
        %1036 = vmatprep.subr.mxu0 0.0
        %1037 = vmatpush1.msra.mxu0 0.0
        %1038 = vmatprep.subr.mxu0 0.0
        %1039 = vmatpush1.msra.mxu0 0.0
        %1040 = vmatprep.subr.mxu0 0.0
        %1041 = vmatpush1.msra.mxu0 0.0
        %1042 = vmatprep.subr.mxu0 0.0
        %1043 = vmatpush1.msra.mxu0 0.0
        %1044 = vmatprep.subr.mxu0 0.0
        %1045 = vmatpush1.msra.mxu0 0.0
        %1046 = vmatprep.subr.mxu0 0.0
        %1047 = vmatpush1.msra.mxu0 0.0
        %1048 = vmatprep.subr.mxu0 0.0
        %1049 = vmatpush1.msra.mxu0 0.0
        %1050 = vmatprep.subr.mxu0 0.0
        %1051 = vmatpush1.msra.mxu0 0.0
        %1052 = vmatprep.subr.mxu0 0.0
        %1053 = vmatpush1.msra.mxu0 0.0
        %1054 = vmatprep.subr.mxu0 0.0
        %1055 = vmatpush1.msra.mxu0 0.0
        %1056 = vmatprep.subr.mxu0 0.0
        %1057 = vmatpush1.msra.mxu0 0.0
        %1058 = vmatprep.subr.mxu0 0.0
        %1059 = vmatpush1.msra.mxu0 0.0
        %1060 = vmatprep.subr.mxu0 0.0
        %1061 = vmatpush1.msra.mxu0 0.0
        %1062 = vmatprep.subr.mxu0 0.0
        %1063 = vmatpush1.msra.mxu0 0.0
        %1064 = vmatprep.subr.mxu0 0.0
        %1065 = vmatpush1.msra.mxu0 0.0
        %1066 = vmatprep.subr.mxu0 0.0
        %1067 = vmatpush1.msra.mxu0 0.0
        %1068 = vmatprep.subr.mxu0 0.0
        %1069 = vmatpush1.msra.mxu0 0.0
        %1070 = vmatprep.subr.mxu0 0.0
        %1071 = vmatpush1.msra.mxu0 0.0
        %1072 = vmatprep.subr.mxu0 0.0
        %1073 = vmatpush1.msra.mxu0 0.0
        %1074 = vmatprep.mubr.f32.mxu0 0.0
        %1075 = vmatmul.mubr.f32.gmra.mrb[0].mxu0 %v938
        %v1076 = vpop.f32.mrb[0].mxu0
        %v1077 = vadd.f32 %v935, %v1076
        %v1078 = vpop.f32.mrb[0].mxu0
        %1079 = vdwg.mxu0
        %1080 = vmatprep.subr.mxu0 0.0
        %1081 = vmatpush1.msra.mxu0 %v909
        %1082 = vmatprep.subr.mxu0 0.0
        %1083 = vmatpush1.msra.mxu0 %v910
        %1084 = vmatprep.subr.mxu0 0.0
        %1085 = vmatpush1.msra.mxu0 %v911
        %1086 = vmatprep.subr.mxu0 0.0
        %1087 = vmatpush1.msra.mxu0 %v912
        %1088 = vmatprep.subr.mxu0 0.0
        %1089 = vmatpush1.msra.mxu0 %v913
        %1090 = vmatprep.subr.mxu0 0.0
        %1091 = vmatpush1.msra.mxu0 %v914
        %1092 = vmatprep.subr.mxu0 0.0
        %1093 = vmatpush1.msra.mxu0 %v915
        %1094 = vmatprep.subr.mxu0 0.0
        %1095 = vmatpush1.msra.mxu0 %v916
        %1096 = vmatprep.subr.mxu0 0.0
        %1097 = vmatpush1.msra.mxu0 0.0
        %1098 = vmatprep.subr.mxu0 0.0
        %1099 = vmatpush1.msra.mxu0 0.0
        %1100 = vmatprep.subr.mxu0 0.0
        %1101 = vmatpush1.msra.mxu0 0.0
        %1102 = vmatprep.subr.mxu0 0.0
        %1103 = vmatpush1.msra.mxu0 0.0
        %1104 = vmatprep.subr.mxu0 0.0
        %1105 = vmatpush1.msra.mxu0 0.0
        %1106 = vmatprep.subr.mxu0 0.0
        %1107 = vmatpush1.msra.mxu0 0.0
        %1108 = vmatprep.subr.mxu0 0.0
        %1109 = vmatpush1.msra.mxu0 0.0
        %1110 = vmatprep.subr.mxu0 0.0
        %1111 = vmatpush1.msra.mxu0 0.0
        %1112 = vmatprep.subr.mxu0 0.0
        %1113 = vmatpush1.msra.mxu0 0.0
        %1114 = vmatprep.subr.mxu0 0.0
        %1115 = vmatpush1.msra.mxu0 0.0
        %1116 = vmatprep.subr.mxu0 0.0
        %1117 = vmatpush1.msra.mxu0 0.0
        %1118 = vmatprep.subr.mxu0 0.0
        %1119 = vmatpush1.msra.mxu0 0.0
        %1120 = vmatprep.subr.mxu0 0.0
        %1121 = vmatpush1.msra.mxu0 0.0
        %1122 = vmatprep.subr.mxu0 0.0
        %1123 = vmatpush1.msra.mxu0 0.0
        %1124 = vmatprep.subr.mxu0 0.0
        %1125 = vmatpush1.msra.mxu0 0.0
        %1126 = vmatprep.subr.mxu0 0.0
        %1127 = vmatpush1.msra.mxu0 0.0
        %1128 = vmatprep.subr.mxu0 0.0
        %1129 = vmatpush1.msra.mxu0 0.0
        %1130 = vmatprep.subr.mxu0 0.0
        %1131 = vmatpush1.msra.mxu0 0.0
        %1132 = vmatprep.subr.mxu0 0.0
        %1133 = vmatpush1.msra.mxu0 0.0
        %1134 = vmatprep.subr.mxu0 0.0
        %1135 = vmatpush1.msra.mxu0 0.0
        %1136 = vmatprep.subr.mxu0 0.0
        %1137 = vmatpush1.msra.mxu0 0.0
        %1138 = vmatprep.subr.mxu0 0.0
        %1139 = vmatpush1.msra.mxu0 0.0
        %1140 = vmatprep.subr.mxu0 0.0
        %1141 = vmatpush1.msra.mxu0 0.0
        %1142 = vmatprep.subr.mxu0 0.0
        %1143 = vmatpush1.msra.mxu0 0.0
        %1144 = vmatprep.mubr.f32.mxu0 0.0
        %1145 = vmatmul.mubr.f32.gmra.mrb[0].mxu0 %v938
        %v1146 = vpop.f32.mrb[0].mxu0
        %v1147 = vadd.f32 %v935, %v1146
        %v1148 = vpop.f32.mrb[0].mxu0
        %1149 = vdwg.mxu0
        %1150 = vmatprep.subr.mxu0 0.0
        %1151 = vmatpush1.msra.mxu0 %v917
        %1152 = vmatprep.subr.mxu0 0.0
        %1153 = vmatpush1.msra.mxu0 %v918
        %1154 = vmatprep.subr.mxu0 0.0
        %1155 = vmatpush1.msra.mxu0 %v919
        %1156 = vmatprep.subr.mxu0 0.0
        %1157 = vmatpush1.msra.mxu0 %v920
        %1158 = vmatprep.subr.mxu0 0.0
        %1159 = vmatpush1.msra.mxu0 %v921
        %1160 = vmatprep.subr.mxu0 0.0
        %1161 = vmatpush1.msra.mxu0 %v922
        %1162 = vmatprep.subr.mxu0 0.0
        %1163 = vmatpush1.msra.mxu0 %v923
        %1164 = vmatprep.subr.mxu0 0.0
        %1165 = vmatpush1.msra.mxu0 %v924
        %1166 = vmatprep.subr.mxu0 0.0
        %1167 = vmatpush1.msra.mxu0 0.0
        %1168 = vmatprep.subr.mxu0 0.0
        %1169 = vmatpush1.msra.mxu0 0.0
        %1170 = vmatprep.subr.mxu0 0.0
        %1171 = vmatpush1.msra.mxu0 0.0
        %1172 = vmatprep.subr.mxu0 0.0
        %1173 = vmatpush1.msra.mxu0 0.0
        %1174 = vmatprep.subr.mxu0 0.0
        %1175 = vmatpush1.msra.mxu0 0.0
        %1176 = vmatprep.subr.mxu0 0.0
        %1177 = vmatpush1.msra.mxu0 0.0
        %1178 = vmatprep.subr.mxu0 0.0
        %1179 = vmatpush1.msra.mxu0 0.0
        %1180 = vmatprep.subr.mxu0 0.0
        %1181 = vmatpush1.msra.mxu0 0.0
        %1182 = vmatprep.subr.mxu0 0.0
        %1183 = vmatpush1.msra.mxu0 0.0
        %1184 = vmatprep.subr.mxu0 0.0
        %1185 = vmatpush1.msra.mxu0 0.0
        %1186 = vmatprep.subr.mxu0 0.0
        %1187 = vmatpush1.msra.mxu0 0.0
        %1188 = vmatprep.subr.mxu0 0.0
        %1189 = vmatpush1.msra.mxu0 0.0
        %1190 = vmatprep.subr.mxu0 0.0
        %1191 = vmatpush1.msra.mxu0 0.0
        %1192 = vmatprep.subr.mxu0 0.0
        %1193 = vmatpush1.msra.mxu0 0.0
        %1194 = vmatprep.subr.mxu0 0.0
        %1195 = vmatpush1.msra.mxu0 0.0
        %1196 = vmatprep.subr.mxu0 0.0
        %1197 = vmatpush1.msra.mxu0 0.0
        %1198 = vmatprep.subr.mxu0 0.0
        %1199 = vmatpush1.msra.mxu0 0.0
        %1200 = vmatprep.subr.mxu0 0.0
        %1201 = vmatpush1.msra.mxu0 0.0
        %1202 = vmatprep.subr.mxu0 0.0
        %1203 = vmatpush1.msra.mxu0 0.0
        %1204 = vmatprep.subr.mxu0 0.0
        %1205 = vmatpush1.msra.mxu0 0.0
        %1206 = vmatprep.subr.mxu0 0.0
        %1207 = vmatpush1.msra.mxu0 0.0
        %1208 = vmatprep.subr.mxu0 0.0
        %1209 = vmatpush1.msra.mxu0 0.0
        %1210 = vmatprep.subr.mxu0 0.0
        %1211 = vmatpush1.msra.mxu0 0.0
        %1212 = vmatprep.subr.mxu0 0.0
        %1213 = vmatpush1.msra.mxu0 0.0
        %1214 = vmatprep.mubr.f32.mxu0 0.0
        %1215 = vmatmul.mubr.f32.gmra.mrb[0].mxu0 %v938
        %v1216 = vpop.f32.mrb[0].mxu0
        %v1217 = vadd.f32 %v935, %v1216
        %v1218 = vpop.f32.mrb[0].mxu0
        %1219 = vdwg.mxu0
        %vm1220 = vcmask 122880
        %v1221 = vsel %vm1220, %v1007, -inf
        %1222 = vmax.xlane.f32.xlu0 %v1221
        %v1223 = vpop.xlane.xlu0 %1222
        %v1224 = vsel %vm1220, %v1077, -inf
        %1225 = vmax.xlane.f32.xlu0 %v1224
        %v1226 = vpop.xlane.xlu0 %1225
        %v1227 = vsel %vm1220, %v1147, -inf
        %1228 = vmax.xlane.f32.xlu0 %v1227
        %v1229 = vpop.xlane.xlu0 %1228
        %v1230 = vsel %vm1220, %v1217, -inf
        %1231 = vmax.xlane.f32.xlu0 %v1230
        %v1232 = vpop.xlane.xlu0 %1231
        %v1233 = vsub.f32 %v1007, %v1223
        %v1234 = vsub.f32 %v1077, %v1226
        %v1235 = vsub.f32 %v1147, %v1229
        %v1236 = vsub.f32 %v1217, %v1232
        %v1237 = vmul.f32 %v1233, 1.442695
        %v1238 = vpow.pop %v1237
        %v1239 = vmul.f32 %v1234, 1.442695
        %v1240 = vpow.pop %v1239
        %v1241 = vmul.f32 %v1235, 1.442695
        %v1242 = vpow.pop %v1241
        %v1243 = vmul.f32 %v1236, 1.442695
        %v1244 = vpow.pop %v1243
        %v1245 = vsel %vm1220, %v1238, 0.0
        %1246 = vadd.xlane.f32.xlu0 %v1245
        %v1247 = vpop.xlane.xlu0 %1246
        %v1248 = vsel %vm1220, %v1240, 0.0
        %1249 = vadd.xlane.f32.xlu0 %v1248
        %v1250 = vpop.xlane.xlu0 %1249
        %v1251 = vsel %vm1220, %v1242, 0.0
        %1252 = vadd.xlane.f32.xlu0 %v1251
        %v1253 = vpop.xlane.xlu0 %1252
        %v1254 = vsel %vm1220, %v1244, 0.0
        %1255 = vadd.xlane.f32.xlu0 %v1254
        %v1256 = vpop.xlane.xlu0 %1255
        %v1257 = vrcp.pop %v1247
        %v1258 = vmul.f32 %v1238, %v1257
        %v1259 = vrcp.pop %v1250
        %v1260 = vmul.f32 %v1240, %v1259
        %v1261 = vrcp.pop %v1253
        %v1262 = vmul.f32 %v1242, %v1261
        %v1263 = vrcp.pop %v1256
        %v1264 = vmul.f32 %v1244, %v1263
        %1265 = vst.msk [vmem:[%s338] sm:$0x1] %vm1220, %v1258
        %1266 = vst.msk [vmem:[%s338 + $0x1] sm:$0x1] %vm1220, %v1260
        %1267 = vst.msk [vmem:[%s338 + $0x2] sm:$0x1] %vm1220, %v1262
        %1268 = vst.msk [vmem:[%s338 + $0x3] sm:$0x1] %vm1220, %v1264
        %v1269 = vlaneseq
        %v1270 = vshrl.u32 %v1269, 7
        %v1271 = vsub.s32 0, %v1270
        %v1272 = vrot.slane %v1258, %v1271
        %v1273 = vmul.f32 %v353, %v1272
        %v1274 = vmul.f32 %v354, %v1272
        %v1275 = vmul.f32 %v355, %v1272
        %v1276 = vmul.f32 %v356, %v1272
        %v1277 = vmul.f32 %v357, %v1272
        %v1278 = vmul.f32 %v358, %v1272
        %v1279 = vmul.f32 %v359, %v1272
        %v1280 = vmul.f32 %v360, %v1272
        %v1281 = vmul.f32 %v361, %v1272
        %v1282 = vmul.f32 %v362, %v1272
        %v1283 = vmul.f32 %v363, %v1272
        %v1284 = vmul.f32 %v364, %v1272
        %v1285 = vmul.f32 %v365, %v1272
        %v1286 = vmul.f32 %v366, %v1272
        %v1287 = vmul.f32 %v367, %v1272
        %v1288 = vmul.f32 %v368, %v1272
        %vm1289 = vcmask 130048
        %v1290 = vsel %vm1289, %v1273, 0.0
        %1291 = vadd.xlane.f32.xlu0 %v1290
        %v1292 = vpop.xlane.xlu0 %1291
        %v1293 = vsel %vm1289, %v1274, 0.0
        %1294 = vadd.xlane.f32.xlu0 %v1293
        %v1295 = vpop.xlane.xlu0 %1294
        %v1296 = vsel %vm1289, %v1275, 0.0
        %1297 = vadd.xlane.f32.xlu0 %v1296
        %v1298 = vpop.xlane.xlu0 %1297
        %v1299 = vsel %vm1289, %v1276, 0.0
        %1300 = vadd.xlane.f32.xlu0 %v1299
        %v1301 = vpop.xlane.xlu0 %1300
        %v1302 = vsel %vm1289, %v1277, 0.0
        %1303 = vadd.xlane.f32.xlu0 %v1302
        %v1304 = vpop.xlane.xlu0 %1303
        %v1305 = vsel %vm1289, %v1278, 0.0
        %1306 = vadd.xlane.f32.xlu0 %v1305
        %v1307 = vpop.xlane.xlu0 %1306
        %v1308 = vsel %vm1289, %v1279, 0.0
        %1309 = vadd.xlane.f32.xlu0 %v1308
        %v1310 = vpop.xlane.xlu0 %1309
        %v1311 = vsel %vm1289, %v1280, 0.0
        %1312 = vadd.xlane.f32.xlu0 %v1311
        %v1313 = vpop.xlane.xlu0 %1312
        %v1314 = vsel %vm1289, %v1281, 0.0
        %1315 = vadd.xlane.f32.xlu0 %v1314
        %v1316 = vpop.xlane.xlu0 %1315
        %v1317 = vsel %vm1289, %v1282, 0.0
        %1318 = vadd.xlane.f32.xlu0 %v1317
        %v1319 = vpop.xlane.xlu0 %1318
        %v1320 = vsel %vm1289, %v1283, 0.0
        %1321 = vadd.xlane.f32.xlu0 %v1320
        %v1322 = vpop.xlane.xlu0 %1321
        %v1323 = vsel %vm1289, %v1284, 0.0
        %1324 = vadd.xlane.f32.xlu0 %v1323
        %v1325 = vpop.xlane.xlu0 %1324
        %v1326 = vsel %vm1289, %v1285, 0.0
        %1327 = vadd.xlane.f32.xlu0 %v1326
        %v1328 = vpop.xlane.xlu0 %1327
        %v1329 = vsel %vm1289, %v1286, 0.0
        %1330 = vadd.xlane.f32.xlu0 %v1329
        %v1331 = vpop.xlane.xlu0 %1330
        %v1332 = vsel %vm1289, %v1287, 0.0
        %1333 = vadd.xlane.f32.xlu0 %v1332
        %v1334 = vpop.xlane.xlu0 %1333
        %v1335 = vsel %vm1289, %v1288, 0.0
        %1336 = vadd.xlane.f32.xlu0 %v1335
        %v1337 = vpop.xlane.xlu0 %1336
        %v1338 = vlaneseq
        %v1339 = vshrl.u32 %v1338, 7
        %v1340 = vsub.s32 0, %v1339
        %v1341 = vrot.slane %v1260, %v1340
        %v1342 = vmul.f32 %v369, %v1341
        %v1343 = vmul.f32 %v370, %v1341
        %v1344 = vmul.f32 %v371, %v1341
        %v1345 = vmul.f32 %v372, %v1341
        %v1346 = vmul.f32 %v373, %v1341
        %v1347 = vmul.f32 %v374, %v1341
        %v1348 = vmul.f32 %v375, %v1341
        %v1349 = vmul.f32 %v376, %v1341
        %v1350 = vmul.f32 %v377, %v1341
        %v1351 = vmul.f32 %v378, %v1341
        %v1352 = vmul.f32 %v379, %v1341
        %v1353 = vmul.f32 %v380, %v1341
        %v1354 = vmul.f32 %v381, %v1341
        %v1355 = vmul.f32 %v382, %v1341
        %v1356 = vmul.f32 %v383, %v1341
        %v1357 = vmul.f32 %v384, %v1341
        %v1358 = vsel %vm1289, %v1342, 0.0
        %1359 = vadd.xlane.f32.xlu0 %v1358
        %v1360 = vpop.xlane.xlu0 %1359
        %v1361 = vsel %vm1289, %v1343, 0.0
        %1362 = vadd.xlane.f32.xlu0 %v1361
        %v1363 = vpop.xlane.xlu0 %1362
        %v1364 = vsel %vm1289, %v1344, 0.0
        %1365 = vadd.xlane.f32.xlu0 %v1364
        %v1366 = vpop.xlane.xlu0 %1365
        %v1367 = vsel %vm1289, %v1345, 0.0
        %1368 = vadd.xlane.f32.xlu0 %v1367
        %v1369 = vpop.xlane.xlu0 %1368
        %v1370 = vsel %vm1289, %v1346, 0.0
        %1371 = vadd.xlane.f32.xlu0 %v1370
        %v1372 = vpop.xlane.xlu0 %1371
        %v1373 = vsel %vm1289, %v1347, 0.0
        %1374 = vadd.xlane.f32.xlu0 %v1373
        %v1375 = vpop.xlane.xlu0 %1374
        %v1376 = vsel %vm1289, %v1348, 0.0
        %1377 = vadd.xlane.f32.xlu0 %v1376
        %v1378 = vpop.xlane.xlu0 %1377
        %v1379 = vsel %vm1289, %v1349, 0.0
        %1380 = vadd.xlane.f32.xlu0 %v1379
        %v1381 = vpop.xlane.xlu0 %1380
        %v1382 = vsel %vm1289, %v1350, 0.0
        %1383 = vadd.xlane.f32.xlu0 %v1382
        %v1384 = vpop.xlane.xlu0 %1383
        %v1385 = vsel %vm1289, %v1351, 0.0
        %1386 = vadd.xlane.f32.xlu0 %v1385
        %v1387 = vpop.xlane.xlu0 %1386
        %v1388 = vsel %vm1289, %v1352, 0.0
        %1389 = vadd.xlane.f32.xlu0 %v1388
        %v1390 = vpop.xlane.xlu0 %1389
        %v1391 = vsel %vm1289, %v1353, 0.0
        %1392 = vadd.xlane.f32.xlu0 %v1391
        %v1393 = vpop.xlane.xlu0 %1392
        %v1394 = vsel %vm1289, %v1354, 0.0
        %1395 = vadd.xlane.f32.xlu0 %v1394
        %v1396 = vpop.xlane.xlu0 %1395
        %v1397 = vsel %vm1289, %v1355, 0.0
        %1398 = vadd.xlane.f32.xlu0 %v1397
        %v1399 = vpop.xlane.xlu0 %1398
        %v1400 = vsel %vm1289, %v1356, 0.0
        %1401 = vadd.xlane.f32.xlu0 %v1400
        %v1402 = vpop.xlane.xlu0 %1401
        %v1403 = vsel %vm1289, %v1357, 0.0
        %1404 = vadd.xlane.f32.xlu0 %v1403
        %v1405 = vpop.xlane.xlu0 %1404
        %v1406 = vlaneseq
        %v1407 = vshrl.u32 %v1406, 7
        %v1408 = vsub.s32 0, %v1407
        %v1409 = vrot.slane %v1262, %v1408
        %v1410 = vmul.f32 %v385, %v1409
        %v1411 = vmul.f32 %v386, %v1409
        %v1412 = vmul.f32 %v387, %v1409
        %v1413 = vmul.f32 %v388, %v1409
        %v1414 = vmul.f32 %v389, %v1409
        %v1415 = vmul.f32 %v390, %v1409
        %v1416 = vmul.f32 %v391, %v1409
        %v1417 = vmul.f32 %v392, %v1409
        %v1418 = vmul.f32 %v393, %v1409
        %v1419 = vmul.f32 %v394, %v1409
        %v1420 = vmul.f32 %v395, %v1409
        %v1421 = vmul.f32 %v396, %v1409
        %v1422 = vmul.f32 %v397, %v1409
        %v1423 = vmul.f32 %v398, %v1409
        %v1424 = vmul.f32 %v399, %v1409
        %v1425 = vmul.f32 %v400, %v1409
        %v1426 = vsel %vm1289, %v1410, 0.0
        %1427 = vadd.xlane.f32.xlu0 %v1426
        %v1428 = vpop.xlane.xlu0 %1427
        %v1429 = vsel %vm1289, %v1411, 0.0
        %1430 = vadd.xlane.f32.xlu0 %v1429
        %v1431 = vpop.xlane.xlu0 %1430
        %v1432 = vsel %vm1289, %v1412, 0.0
        %1433 = vadd.xlane.f32.xlu0 %v1432
        %v1434 = vpop.xlane.xlu0 %1433
        %v1435 = vsel %vm1289, %v1413, 0.0
        %1436 = vadd.xlane.f32.xlu0 %v1435
        %v1437 = vpop.xlane.xlu0 %1436
        %v1438 = vsel %vm1289, %v1414, 0.0
        %1439 = vadd.xlane.f32.xlu0 %v1438
        %v1440 = vpop.xlane.xlu0 %1439
        %v1441 = vsel %vm1289, %v1415, 0.0
        %1442 = vadd.xlane.f32.xlu0 %v1441
        %v1443 = vpop.xlane.xlu0 %1442
        %v1444 = vsel %vm1289, %v1416, 0.0
        %1445 = vadd.xlane.f32.xlu0 %v1444
        %v1446 = vpop.xlane.xlu0 %1445
        %v1447 = vsel %vm1289, %v1417, 0.0
        %1448 = vadd.xlane.f32.xlu0 %v1447
        %v1449 = vpop.xlane.xlu0 %1448
        %v1450 = vsel %vm1289, %v1418, 0.0
        %1451 = vadd.xlane.f32.xlu0 %v1450
        %v1452 = vpop.xlane.xlu0 %1451
        %v1453 = vsel %vm1289, %v1419, 0.0
        %1454 = vadd.xlane.f32.xlu0 %v1453
        %v1455 = vpop.xlane.xlu0 %1454
        %v1456 = vsel %vm1289, %v1420, 0.0
        %1457 = vadd.xlane.f32.xlu0 %v1456
        %v1458 = vpop.xlane.xlu0 %1457
        %v1459 = vsel %vm1289, %v1421, 0.0
        %1460 = vadd.xlane.f32.xlu0 %v1459
        %v1461 = vpop.xlane.xlu0 %1460
        %v1462 = vsel %vm1289, %v1422, 0.0
        %1463 = vadd.xlane.f32.xlu0 %v1462
        %v1464 = vpop.xlane.xlu0 %1463
        %v1465 = vsel %vm1289, %v1423, 0.0
        %1466 = vadd.xlane.f32.xlu0 %v1465
        %v1467 = vpop.xlane.xlu0 %1466
        %v1468 = vsel %vm1289, %v1424, 0.0
        %1469 = vadd.xlane.f32.xlu0 %v1468
        %v1470 = vpop.xlane.xlu0 %1469
        %v1471 = vsel %vm1289, %v1425, 0.0
        %1472 = vadd.xlane.f32.xlu0 %v1471
        %v1473 = vpop.xlane.xlu0 %1472
        %v1474 = vlaneseq
        %v1475 = vshrl.u32 %v1474, 7
        %v1476 = vsub.s32 0, %v1475
        %v1477 = vrot.slane %v1264, %v1476
        %v1478 = vmul.f32 %v401, %v1477
        %v1479 = vmul.f32 %v402, %v1477
        %v1480 = vmul.f32 %v403, %v1477
        %v1481 = vmul.f32 %v404, %v1477
        %v1482 = vmul.f32 %v405, %v1477
        %v1483 = vmul.f32 %v406, %v1477
        %v1484 = vmul.f32 %v407, %v1477
        %v1485 = vmul.f32 %v408, %v1477
        %v1486 = vmul.f32 %v409, %v1477
        %v1487 = vmul.f32 %v410, %v1477
        %v1488 = vmul.f32 %v411, %v1477
        %v1489 = vmul.f32 %v412, %v1477
        %v1490 = vmul.f32 %v413, %v1477
        %v1491 = vmul.f32 %v414, %v1477
        %v1492 = vmul.f32 %v415, %v1477
        %v1493 = vmul.f32 %v416, %v1477
        %v1494 = vsel %vm1289, %v1478, 0.0
        %1495 = vadd.xlane.f32.xlu0 %v1494
        %v1496 = vpop.xlane.xlu0 %1495
        %v1497 = vsel %vm1289, %v1479, 0.0
        %1498 = vadd.xlane.f32.xlu0 %v1497
        %v1499 = vpop.xlane.xlu0 %1498
        %v1500 = vsel %vm1289, %v1480, 0.0
        %1501 = vadd.xlane.f32.xlu0 %v1500
        %v1502 = vpop.xlane.xlu0 %1501
        %v1503 = vsel %vm1289, %v1481, 0.0
        %1504 = vadd.xlane.f32.xlu0 %v1503
        %v1505 = vpop.xlane.xlu0 %1504
        %v1506 = vsel %vm1289, %v1482, 0.0
        %1507 = vadd.xlane.f32.xlu0 %v1506
        %v1508 = vpop.xlane.xlu0 %1507
        %v1509 = vsel %vm1289, %v1483, 0.0
        %1510 = vadd.xlane.f32.xlu0 %v1509
        %v1511 = vpop.xlane.xlu0 %1510
        %v1512 = vsel %vm1289, %v1484, 0.0
        %1513 = vadd.xlane.f32.xlu0 %v1512
        %v1514 = vpop.xlane.xlu0 %1513
        %v1515 = vsel %vm1289, %v1485, 0.0
        %1516 = vadd.xlane.f32.xlu0 %v1515
        %v1517 = vpop.xlane.xlu0 %1516
        %v1518 = vsel %vm1289, %v1486, 0.0
        %1519 = vadd.xlane.f32.xlu0 %v1518
        %v1520 = vpop.xlane.xlu0 %1519
        %v1521 = vsel %vm1289, %v1487, 0.0
        %1522 = vadd.xlane.f32.xlu0 %v1521
        %v1523 = vpop.xlane.xlu0 %1522
        %v1524 = vsel %vm1289, %v1488, 0.0
        %1525 = vadd.xlane.f32.xlu0 %v1524
        %v1526 = vpop.xlane.xlu0 %1525
        %v1527 = vsel %vm1289, %v1489, 0.0
        %1528 = vadd.xlane.f32.xlu0 %v1527
        %v1529 = vpop.xlane.xlu0 %1528
        %v1530 = vsel %vm1289, %v1490, 0.0
        %1531 = vadd.xlane.f32.xlu0 %v1530
        %v1532 = vpop.xlane.xlu0 %1531
        %v1533 = vsel %vm1289, %v1491, 0.0
        %1534 = vadd.xlane.f32.xlu0 %v1533
        %v1535 = vpop.xlane.xlu0 %1534
        %v1536 = vsel %vm1289, %v1492, 0.0
        %1537 = vadd.xlane.f32.xlu0 %v1536
        %v1538 = vpop.xlane.xlu0 %1537
        %v1539 = vsel %vm1289, %v1493, 0.0
        %1540 = vadd.xlane.f32.xlu0 %v1539
        %v1541 = vpop.xlane.xlu0 %1540
        %1543 = vset.pattern.permute.xlu0 0
        %1544 = vperm.xlu0 %1543, %v1292
        %v1545 = vpop.permute.xlu0 %1544
        %1548 = vset.pattern.permute.xlu0 0
        %1549 = vperm.xlu0 %1548, %v1295
        %v1550 = vpop.permute.xlu0 %1549
        %1553 = vset.pattern.permute.xlu0 0
        %1554 = vperm.xlu0 %1553, %v1298
        %v1555 = vpop.permute.xlu0 %1554
        %1558 = vset.pattern.permute.xlu0 0
        %1559 = vperm.xlu0 %1558, %v1301
        %v1560 = vpop.permute.xlu0 %1559
        %1563 = vset.pattern.permute.xlu0 0
        %1564 = vperm.xlu0 %1563, %v1304
        %v1565 = vpop.permute.xlu0 %1564
        %1568 = vset.pattern.permute.xlu0 0
        %1569 = vperm.xlu0 %1568, %v1307
        %v1570 = vpop.permute.xlu0 %1569
        %1573 = vset.pattern.permute.xlu0 0
        %1574 = vperm.xlu0 %1573, %v1310
        %v1575 = vpop.permute.xlu0 %1574
        %1578 = vset.pattern.permute.xlu0 0
        %1579 = vperm.xlu0 %1578, %v1313
        %v1580 = vpop.permute.xlu0 %1579
        %1583 = vset.pattern.permute.xlu0 0
        %1584 = vperm.xlu0 %1583, %v1316
        %v1585 = vpop.permute.xlu0 %1584
        %1588 = vset.pattern.permute.xlu0 0
        %1589 = vperm.xlu0 %1588, %v1319
        %v1590 = vpop.permute.xlu0 %1589
        %1593 = vset.pattern.permute.xlu0 0
        %1594 = vperm.xlu0 %1593, %v1322
        %v1595 = vpop.permute.xlu0 %1594
        %1598 = vset.pattern.permute.xlu0 0
        %1599 = vperm.xlu0 %1598, %v1325
        %v1600 = vpop.permute.xlu0 %1599
        %1603 = vset.pattern.permute.xlu0 0
        %1604 = vperm.xlu0 %1603, %v1328
        %v1605 = vpop.permute.xlu0 %1604
        %1608 = vset.pattern.permute.xlu0 0
        %1609 = vperm.xlu0 %1608, %v1331
        %v1610 = vpop.permute.xlu0 %1609
        %1613 = vset.pattern.permute.xlu0 0
        %1614 = vperm.xlu0 %1613, %v1334
        %v1615 = vpop.permute.xlu0 %1614
        %1618 = vset.pattern.permute.xlu0 0
        %1619 = vperm.xlu0 %1618, %v1337
        %v1620 = vpop.permute.xlu0 %1619
        %1623 = vset.pattern.permute.xlu0 0
        %1624 = vperm.xlu0 %1623, %v1360
        %v1625 = vpop.permute.xlu0 %1624
        %1628 = vset.pattern.permute.xlu0 0
        %1629 = vperm.xlu0 %1628, %v1363
        %v1630 = vpop.permute.xlu0 %1629
        %1633 = vset.pattern.permute.xlu0 0
        %1634 = vperm.xlu0 %1633, %v1366
        %v1635 = vpop.permute.xlu0 %1634
        %1638 = vset.pattern.permute.xlu0 0
        %1639 = vperm.xlu0 %1638, %v1369
        %v1640 = vpop.permute.xlu0 %1639
        %1643 = vset.pattern.permute.xlu0 0
        %1644 = vperm.xlu0 %1643, %v1372
        %v1645 = vpop.permute.xlu0 %1644
        %1648 = vset.pattern.permute.xlu0 0
        %1649 = vperm.xlu0 %1648, %v1375
        %v1650 = vpop.permute.xlu0 %1649
        %1653 = vset.pattern.permute.xlu0 0
        %1654 = vperm.xlu0 %1653, %v1378
        %v1655 = vpop.permute.xlu0 %1654
        %1658 = vset.pattern.permute.xlu0 0
        %1659 = vperm.xlu0 %1658, %v1381
        %v1660 = vpop.permute.xlu0 %1659
        %1663 = vset.pattern.permute.xlu0 0
        %1664 = vperm.xlu0 %1663, %v1384
        %v1665 = vpop.permute.xlu0 %1664
        %1668 = vset.pattern.permute.xlu0 0
        %1669 = vperm.xlu0 %1668, %v1387
        %v1670 = vpop.permute.xlu0 %1669
        %1673 = vset.pattern.permute.xlu0 0
        %1674 = vperm.xlu0 %1673, %v1390
        %v1675 = vpop.permute.xlu0 %1674
        %1678 = vset.pattern.permute.xlu0 0
        %1679 = vperm.xlu0 %1678, %v1393
        %v1680 = vpop.permute.xlu0 %1679
        %1683 = vset.pattern.permute.xlu0 0
        %1684 = vperm.xlu0 %1683, %v1396
        %v1685 = vpop.permute.xlu0 %1684
        %1688 = vset.pattern.permute.xlu0 0
        %1689 = vperm.xlu0 %1688, %v1399
        %v1690 = vpop.permute.xlu0 %1689
        %1693 = vset.pattern.permute.xlu0 0
        %1694 = vperm.xlu0 %1693, %v1402
        %v1695 = vpop.permute.xlu0 %1694
        %1698 = vset.pattern.permute.xlu0 0
        %1699 = vperm.xlu0 %1698, %v1405
        %v1700 = vpop.permute.xlu0 %1699
        %1703 = vset.pattern.permute.xlu0 0
        %1704 = vperm.xlu0 %1703, %v1428
        %v1705 = vpop.permute.xlu0 %1704
        %1708 = vset.pattern.permute.xlu0 0
        %1709 = vperm.xlu0 %1708, %v1431
        %v1710 = vpop.permute.xlu0 %1709
        %1713 = vset.pattern.permute.xlu0 0
        %1714 = vperm.xlu0 %1713, %v1434
        %v1715 = vpop.permute.xlu0 %1714
        %1718 = vset.pattern.permute.xlu0 0
        %1719 = vperm.xlu0 %1718, %v1437
        %v1720 = vpop.permute.xlu0 %1719
        %1723 = vset.pattern.permute.xlu0 0
        %1724 = vperm.xlu0 %1723, %v1440
        %v1725 = vpop.permute.xlu0 %1724
        %1728 = vset.pattern.permute.xlu0 0
        %1729 = vperm.xlu0 %1728, %v1443
        %v1730 = vpop.permute.xlu0 %1729
        %1733 = vset.pattern.permute.xlu0 0
        %1734 = vperm.xlu0 %1733, %v1446
        %v1735 = vpop.permute.xlu0 %1734
        %1738 = vset.pattern.permute.xlu0 0
        %1739 = vperm.xlu0 %1738, %v1449
        %v1740 = vpop.permute.xlu0 %1739
        %1743 = vset.pattern.permute.xlu0 0
        %1744 = vperm.xlu0 %1743, %v1452
        %v1745 = vpop.permute.xlu0 %1744
        %1748 = vset.pattern.permute.xlu0 0
        %1749 = vperm.xlu0 %1748, %v1455
        %v1750 = vpop.permute.xlu0 %1749
        %1753 = vset.pattern.permute.xlu0 0
        %1754 = vperm.xlu0 %1753, %v1458
        %v1755 = vpop.permute.xlu0 %1754
        %1758 = vset.pattern.permute.xlu0 0
        %1759 = vperm.xlu0 %1758, %v1461
        %v1760 = vpop.permute.xlu0 %1759
        %1763 = vset.pattern.permute.xlu0 0
        %1764 = vperm.xlu0 %1763, %v1464
        %v1765 = vpop.permute.xlu0 %1764
        %1768 = vset.pattern.permute.xlu0 0
        %1769 = vperm.xlu0 %1768, %v1467
        %v1770 = vpop.permute.xlu0 %1769
        %1773 = vset.pattern.permute.xlu0 0
        %1774 = vperm.xlu0 %1773, %v1470
        %v1775 = vpop.permute.xlu0 %1774
        %1778 = vset.pattern.permute.xlu0 0
        %1779 = vperm.xlu0 %1778, %v1473
        %v1780 = vpop.permute.xlu0 %1779
        %1783 = vset.pattern.permute.xlu0 0
        %1784 = vperm.xlu0 %1783, %v1496
        %v1785 = vpop.permute.xlu0 %1784
        %1788 = vset.pattern.permute.xlu0 0
        %1789 = vperm.xlu0 %1788, %v1499
        %v1790 = vpop.permute.xlu0 %1789
        %1793 = vset.pattern.permute.xlu0 0
        %1794 = vperm.xlu0 %1793, %v1502
        %v1795 = vpop.permute.xlu0 %1794
        %1798 = vset.pattern.permute.xlu0 0
        %1799 = vperm.xlu0 %1798, %v1505
        %v1800 = vpop.permute.xlu0 %1799
        %1803 = vset.pattern.permute.xlu0 0
        %1804 = vperm.xlu0 %1803, %v1508
        %v1805 = vpop.permute.xlu0 %1804
        %1808 = vset.pattern.permute.xlu0 0
        %1809 = vperm.xlu0 %1808, %v1511
        %v1810 = vpop.permute.xlu0 %1809
        %1813 = vset.pattern.permute.xlu0 0
        %1814 = vperm.xlu0 %1813, %v1514
        %v1815 = vpop.permute.xlu0 %1814
        %1818 = vset.pattern.permute.xlu0 0
        %1819 = vperm.xlu0 %1818, %v1517
        %v1820 = vpop.permute.xlu0 %1819
        %1823 = vset.pattern.permute.xlu0 0
        %1824 = vperm.xlu0 %1823, %v1520
        %v1825 = vpop.permute.xlu0 %1824
        %1828 = vset.pattern.permute.xlu0 0
        %1829 = vperm.xlu0 %1828, %v1523
        %v1830 = vpop.permute.xlu0 %1829
        %1833 = vset.pattern.permute.xlu0 0
        %1834 = vperm.xlu0 %1833, %v1526
        %v1835 = vpop.permute.xlu0 %1834
        %1838 = vset.pattern.permute.xlu0 0
        %1839 = vperm.xlu0 %1838, %v1529
        %v1840 = vpop.permute.xlu0 %1839
        %1843 = vset.pattern.permute.xlu0 0
        %1844 = vperm.xlu0 %1843, %v1532
        %v1845 = vpop.permute.xlu0 %1844
        %1848 = vset.pattern.permute.xlu0 0
        %1849 = vperm.xlu0 %1848, %v1535
        %v1850 = vpop.permute.xlu0 %1849
        %1853 = vset.pattern.permute.xlu0 0
        %1854 = vperm.xlu0 %1853, %v1538
        %v1855 = vpop.permute.xlu0 %1854
        %1858 = vset.pattern.permute.xlu0 0
        %1859 = vperm.xlu0 %1858, %v1541
        %v1860 = vpop.permute.xlu0 %1859
        %v1862 = vsub.f32 %v353, %v1545
        %v1863 = vsub.f32 %v354, %v1550
        %v1864 = vsub.f32 %v355, %v1555
        %v1865 = vsub.f32 %v356, %v1560
        %v1866 = vsub.f32 %v357, %v1565
        %v1867 = vsub.f32 %v358, %v1570
        %v1868 = vsub.f32 %v359, %v1575
        %v1869 = vsub.f32 %v360, %v1580
        %v1870 = vsub.f32 %v361, %v1585
        %v1871 = vsub.f32 %v362, %v1590
        %v1872 = vsub.f32 %v363, %v1595
        %v1873 = vsub.f32 %v364, %v1600
        %v1874 = vsub.f32 %v365, %v1605
        %v1875 = vsub.f32 %v366, %v1610
        %v1876 = vsub.f32 %v367, %v1615
        %v1877 = vsub.f32 %v368, %v1620
        %v1878 = vsub.f32 %v369, %v1625
        %v1879 = vsub.f32 %v370, %v1630
        %v1880 = vsub.f32 %v371, %v1635
        %v1881 = vsub.f32 %v372, %v1640
        %v1882 = vsub.f32 %v373, %v1645
        %v1883 = vsub.f32 %v374, %v1650
        %v1884 = vsub.f32 %v375, %v1655
        %v1885 = vsub.f32 %v376, %v1660
        %v1886 = vsub.f32 %v377, %v1665
        %v1887 = vsub.f32 %v378, %v1670
        %v1888 = vsub.f32 %v379, %v1675
        %v1889 = vsub.f32 %v380, %v1680
        %v1890 = vsub.f32 %v381, %v1685
        %v1891 = vsub.f32 %v382, %v1690
        %v1892 = vsub.f32 %v383, %v1695
        %v1893 = vsub.f32 %v384, %v1700
        %v1894 = vsub.f32 %v385, %v1705
        %v1895 = vsub.f32 %v386, %v1710
        %v1896 = vsub.f32 %v387, %v1715
        %v1897 = vsub.f32 %v388, %v1720
        %v1898 = vsub.f32 %v389, %v1725
        %v1899 = vsub.f32 %v390, %v1730
        %v1900 = vsub.f32 %v391, %v1735
        %v1901 = vsub.f32 %v392, %v1740
        %v1902 = vsub.f32 %v393, %v1745
        %v1903 = vsub.f32 %v394, %v1750
        %v1904 = vsub.f32 %v395, %v1755
        %v1905 = vsub.f32 %v396, %v1760
        %v1906 = vsub.f32 %v397, %v1765
        %v1907 = vsub.f32 %v398, %v1770
        %v1908 = vsub.f32 %v399, %v1775
        %v1909 = vsub.f32 %v400, %v1780
        %v1910 = vsub.f32 %v401, %v1785
        %v1911 = vsub.f32 %v402, %v1790
        %v1912 = vsub.f32 %v403, %v1795
        %v1913 = vsub.f32 %v404, %v1800
        %v1914 = vsub.f32 %v405, %v1805
        %v1915 = vsub.f32 %v406, %v1810
        %v1916 = vsub.f32 %v407, %v1815
        %v1917 = vsub.f32 %v408, %v1820
        %v1918 = vsub.f32 %v409, %v1825
        %v1919 = vsub.f32 %v410, %v1830
        %v1920 = vsub.f32 %v411, %v1835
        %v1921 = vsub.f32 %v412, %v1840
        %v1922 = vsub.f32 %v413, %v1845
        %v1923 = vsub.f32 %v414, %v1850
        %v1924 = vsub.f32 %v415, %v1855
        %v1925 = vsub.f32 %v416, %v1860
        %v1926 = vmul.f32 %v1862, %v1862
        %v1927 = vmul.f32 %v1863, %v1863
        %v1928 = vmul.f32 %v1864, %v1864
        %v1929 = vmul.f32 %v1865, %v1865
        %v1930 = vmul.f32 %v1866, %v1866
        %v1931 = vmul.f32 %v1867, %v1867
        %v1932 = vmul.f32 %v1868, %v1868
        %v1933 = vmul.f32 %v1869, %v1869
        %v1934 = vmul.f32 %v1870, %v1870
        %v1935 = vmul.f32 %v1871, %v1871
        %v1936 = vmul.f32 %v1872, %v1872
        %v1937 = vmul.f32 %v1873, %v1873
        %v1938 = vmul.f32 %v1874, %v1874
        %v1939 = vmul.f32 %v1875, %v1875
        %v1940 = vmul.f32 %v1876, %v1876
        %v1941 = vmul.f32 %v1877, %v1877
        %v1942 = vmul.f32 %v1878, %v1878
        %v1943 = vmul.f32 %v1879, %v1879
        %v1944 = vmul.f32 %v1880, %v1880
        %v1945 = vmul.f32 %v1881, %v1881
        %v1946 = vmul.f32 %v1882, %v1882
        %v1947 = vmul.f32 %v1883, %v1883
        %v1948 = vmul.f32 %v1884, %v1884
        %v1949 = vmul.f32 %v1885, %v1885
        %v1950 = vmul.f32 %v1886, %v1886
        %v1951 = vmul.f32 %v1887, %v1887
        %v1952 = vmul.f32 %v1888, %v1888
        %v1953 = vmul.f32 %v1889, %v1889
        %v1954 = vmul.f32 %v1890, %v1890
        %v1955 = vmul.f32 %v1891, %v1891
        %v1956 = vmul.f32 %v1892, %v1892
        %v1957 = vmul.f32 %v1893, %v1893
        %v1958 = vmul.f32 %v1894, %v1894
        %v1959 = vmul.f32 %v1895, %v1895
        %v1960 = vmul.f32 %v1896, %v1896
        %v1961 = vmul.f32 %v1897, %v1897
        %v1962 = vmul.f32 %v1898, %v1898
        %v1963 = vmul.f32 %v1899, %v1899
        %v1964 = vmul.f32 %v1900, %v1900
        %v1965 = vmul.f32 %v1901, %v1901
        %v1966 = vmul.f32 %v1902, %v1902
        %v1967 = vmul.f32 %v1903, %v1903
        %v1968 = vmul.f32 %v1904, %v1904
        %v1969 = vmul.f32 %v1905, %v1905
        %v1970 = vmul.f32 %v1906, %v1906
        %v1971 = vmul.f32 %v1907, %v1907
        %v1972 = vmul.f32 %v1908, %v1908
        %v1973 = vmul.f32 %v1909, %v1909
        %v1974 = vmul.f32 %v1910, %v1910
        %v1975 = vmul.f32 %v1911, %v1911
        %v1976 = vmul.f32 %v1912, %v1912
        %v1977 = vmul.f32 %v1913, %v1913
        %v1978 = vmul.f32 %v1914, %v1914
        %v1979 = vmul.f32 %v1915, %v1915
        %v1980 = vmul.f32 %v1916, %v1916
        %v1981 = vmul.f32 %v1917, %v1917
        %v1982 = vmul.f32 %v1918, %v1918
        %v1983 = vmul.f32 %v1919, %v1919
        %v1984 = vmul.f32 %v1920, %v1920
        %v1985 = vmul.f32 %v1921, %v1921
        %v1986 = vmul.f32 %v1922, %v1922
        %v1987 = vmul.f32 %v1923, %v1923
        %v1988 = vmul.f32 %v1924, %v1924
        %v1989 = vmul.f32 %v1925, %v1925
        %v1990 = vmul.f32 %v1926, %v1272
        %v1991 = vmul.f32 %v1927, %v1272
        %v1992 = vmul.f32 %v1928, %v1272
        %v1993 = vmul.f32 %v1929, %v1272
        %v1994 = vmul.f32 %v1930, %v1272
        %v1995 = vmul.f32 %v1931, %v1272
        %v1996 = vmul.f32 %v1932, %v1272
        %v1997 = vmul.f32 %v1933, %v1272
        %v1998 = vmul.f32 %v1934, %v1272
        %v1999 = vmul.f32 %v1935, %v1272
        %v2000 = vmul.f32 %v1936, %v1272
        %v2001 = vmul.f32 %v1937, %v1272
        %v2002 = vmul.f32 %v1938, %v1272
        %v2003 = vmul.f32 %v1939, %v1272
        %v2004 = vmul.f32 %v1940, %v1272
        %v2005 = vmul.f32 %v1941, %v1272
        %v2006 = vsel %vm1289, %v1990, 0.0
        %2007 = vadd.xlane.f32.xlu0 %v2006
        %v2008 = vpop.xlane.xlu0 %2007
        %v2009 = vsel %vm1289, %v1991, 0.0
        %2010 = vadd.xlane.f32.xlu0 %v2009
        %v2011 = vpop.xlane.xlu0 %2010
        %v2012 = vsel %vm1289, %v1992, 0.0
        %2013 = vadd.xlane.f32.xlu0 %v2012
        %v2014 = vpop.xlane.xlu0 %2013
        %v2015 = vsel %vm1289, %v1993, 0.0
        %2016 = vadd.xlane.f32.xlu0 %v2015
        %v2017 = vpop.xlane.xlu0 %2016
        %v2018 = vsel %vm1289, %v1994, 0.0
        %2019 = vadd.xlane.f32.xlu0 %v2018
        %v2020 = vpop.xlane.xlu0 %2019
        %v2021 = vsel %vm1289, %v1995, 0.0
        %2022 = vadd.xlane.f32.xlu0 %v2021
        %v2023 = vpop.xlane.xlu0 %2022
        %v2024 = vsel %vm1289, %v1996, 0.0
        %2025 = vadd.xlane.f32.xlu0 %v2024
        %v2026 = vpop.xlane.xlu0 %2025
        %v2027 = vsel %vm1289, %v1997, 0.0
        %2028 = vadd.xlane.f32.xlu0 %v2027
        %v2029 = vpop.xlane.xlu0 %2028
        %v2030 = vsel %vm1289, %v1998, 0.0
        %2031 = vadd.xlane.f32.xlu0 %v2030
        %v2032 = vpop.xlane.xlu0 %2031
        %v2033 = vsel %vm1289, %v1999, 0.0
        %2034 = vadd.xlane.f32.xlu0 %v2033
        %v2035 = vpop.xlane.xlu0 %2034
        %v2036 = vsel %vm1289, %v2000, 0.0
        %2037 = vadd.xlane.f32.xlu0 %v2036
        %v2038 = vpop.xlane.xlu0 %2037
        %v2039 = vsel %vm1289, %v2001, 0.0
        %2040 = vadd.xlane.f32.xlu0 %v2039
        %v2041 = vpop.xlane.xlu0 %2040
        %v2042 = vsel %vm1289, %v2002, 0.0
        %2043 = vadd.xlane.f32.xlu0 %v2042
        %v2044 = vpop.xlane.xlu0 %2043
        %v2045 = vsel %vm1289, %v2003, 0.0
        %2046 = vadd.xlane.f32.xlu0 %v2045
        %v2047 = vpop.xlane.xlu0 %2046
        %v2048 = vsel %vm1289, %v2004, 0.0
        %2049 = vadd.xlane.f32.xlu0 %v2048
        %v2050 = vpop.xlane.xlu0 %2049
        %v2051 = vsel %vm1289, %v2005, 0.0
        %2052 = vadd.xlane.f32.xlu0 %v2051
        %v2053 = vpop.xlane.xlu0 %2052
        %v2054 = vmul.f32 %v1942, %v1341
        %v2055 = vmul.f32 %v1943, %v1341
        %v2056 = vmul.f32 %v1944, %v1341
        %v2057 = vmul.f32 %v1945, %v1341
        %v2058 = vmul.f32 %v1946, %v1341
        %v2059 = vmul.f32 %v1947, %v1341
        %v2060 = vmul.f32 %v1948, %v1341
        %v2061 = vmul.f32 %v1949, %v1341
        %v2062 = vmul.f32 %v1950, %v1341
        %v2063 = vmul.f32 %v1951, %v1341
        %v2064 = vmul.f32 %v1952, %v1341
        %v2065 = vmul.f32 %v1953, %v1341
        %v2066 = vmul.f32 %v1954, %v1341
        %v2067 = vmul.f32 %v1955, %v1341
        %v2068 = vmul.f32 %v1956, %v1341
        %v2069 = vmul.f32 %v1957, %v1341
        %v2070 = vsel %vm1289, %v2054, 0.0
        %2071 = vadd.xlane.f32.xlu0 %v2070
        %v2072 = vpop.xlane.xlu0 %2071
        %v2073 = vsel %vm1289, %v2055, 0.0
        %2074 = vadd.xlane.f32.xlu0 %v2073
        %v2075 = vpop.xlane.xlu0 %2074
        %v2076 = vsel %vm1289, %v2056, 0.0
        %2077 = vadd.xlane.f32.xlu0 %v2076
        %v2078 = vpop.xlane.xlu0 %2077
        %v2079 = vsel %vm1289, %v2057, 0.0
        %2080 = vadd.xlane.f32.xlu0 %v2079
        %v2081 = vpop.xlane.xlu0 %2080
        %v2082 = vsel %vm1289, %v2058, 0.0
        %2083 = vadd.xlane.f32.xlu0 %v2082
        %v2084 = vpop.xlane.xlu0 %2083
        %v2085 = vsel %vm1289, %v2059, 0.0
        %2086 = vadd.xlane.f32.xlu0 %v2085
        %v2087 = vpop.xlane.xlu0 %2086
        %v2088 = vsel %vm1289, %v2060, 0.0
        %2089 = vadd.xlane.f32.xlu0 %v2088
        %v2090 = vpop.xlane.xlu0 %2089
        %v2091 = vsel %vm1289, %v2061, 0.0
        %2092 = vadd.xlane.f32.xlu0 %v2091
        %v2093 = vpop.xlane.xlu0 %2092
        %v2094 = vsel %vm1289, %v2062, 0.0
        %2095 = vadd.xlane.f32.xlu0 %v2094
        %v2096 = vpop.xlane.xlu0 %2095
        %v2097 = vsel %vm1289, %v2063, 0.0
        %2098 = vadd.xlane.f32.xlu0 %v2097
        %v2099 = vpop.xlane.xlu0 %2098
        %v2100 = vsel %vm1289, %v2064, 0.0
        %2101 = vadd.xlane.f32.xlu0 %v2100
        %v2102 = vpop.xlane.xlu0 %2101
        %v2103 = vsel %vm1289, %v2065, 0.0
        %2104 = vadd.xlane.f32.xlu0 %v2103
        %v2105 = vpop.xlane.xlu0 %2104
        %v2106 = vsel %vm1289, %v2066, 0.0
        %2107 = vadd.xlane.f32.xlu0 %v2106
        %v2108 = vpop.xlane.xlu0 %2107
        %v2109 = vsel %vm1289, %v2067, 0.0
        %2110 = vadd.xlane.f32.xlu0 %v2109
        %v2111 = vpop.xlane.xlu0 %2110
        %v2112 = vsel %vm1289, %v2068, 0.0
        %2113 = vadd.xlane.f32.xlu0 %v2112
        %v2114 = vpop.xlane.xlu0 %2113
        %v2115 = vsel %vm1289, %v2069, 0.0
        %2116 = vadd.xlane.f32.xlu0 %v2115
        %v2117 = vpop.xlane.xlu0 %2116
        %v2118 = vmul.f32 %v1958, %v1409
        %v2119 = vmul.f32 %v1959, %v1409
        %v2120 = vmul.f32 %v1960, %v1409
        %v2121 = vmul.f32 %v1961, %v1409
        %v2122 = vmul.f32 %v1962, %v1409
        %v2123 = vmul.f32 %v1963, %v1409
        %v2124 = vmul.f32 %v1964, %v1409
        %v2125 = vmul.f32 %v1965, %v1409
        %v2126 = vmul.f32 %v1966, %v1409
        %v2127 = vmul.f32 %v1967, %v1409
        %v2128 = vmul.f32 %v1968, %v1409
        %v2129 = vmul.f32 %v1969, %v1409
        %v2130 = vmul.f32 %v1970, %v1409
        %v2131 = vmul.f32 %v1971, %v1409
        %v2132 = vmul.f32 %v1972, %v1409
        %v2133 = vmul.f32 %v1973, %v1409
        %v2134 = vsel %vm1289, %v2118, 0.0
        %2135 = vadd.xlane.f32.xlu0 %v2134
        %v2136 = vpop.xlane.xlu0 %2135
        %v2137 = vsel %vm1289, %v2119, 0.0
        %2138 = vadd.xlane.f32.xlu0 %v2137
        %v2139 = vpop.xlane.xlu0 %2138
        %v2140 = vsel %vm1289, %v2120, 0.0
        %2141 = vadd.xlane.f32.xlu0 %v2140
        %v2142 = vpop.xlane.xlu0 %2141
        %v2143 = vsel %vm1289, %v2121, 0.0
        %2144 = vadd.xlane.f32.xlu0 %v2143
        %v2145 = vpop.xlane.xlu0 %2144
        %v2146 = vsel %vm1289, %v2122, 0.0
        %2147 = vadd.xlane.f32.xlu0 %v2146
        %v2148 = vpop.xlane.xlu0 %2147
        %v2149 = vsel %vm1289, %v2123, 0.0
        %2150 = vadd.xlane.f32.xlu0 %v2149
        %v2151 = vpop.xlane.xlu0 %2150
        %v2152 = vsel %vm1289, %v2124, 0.0
        %2153 = vadd.xlane.f32.xlu0 %v2152
        %v2154 = vpop.xlane.xlu0 %2153
        %v2155 = vsel %vm1289, %v2125, 0.0
        %2156 = vadd.xlane.f32.xlu0 %v2155
        %v2157 = vpop.xlane.xlu0 %2156
        %v2158 = vsel %vm1289, %v2126, 0.0
        %2159 = vadd.xlane.f32.xlu0 %v2158
        %v2160 = vpop.xlane.xlu0 %2159
        %v2161 = vsel %vm1289, %v2127, 0.0
        %2162 = vadd.xlane.f32.xlu0 %v2161
        %v2163 = vpop.xlane.xlu0 %2162
        %v2164 = vsel %vm1289, %v2128, 0.0
        %2165 = vadd.xlane.f32.xlu0 %v2164
        %v2166 = vpop.xlane.xlu0 %2165
        %v2167 = vsel %vm1289, %v2129, 0.0
        %2168 = vadd.xlane.f32.xlu0 %v2167
        %v2169 = vpop.xlane.xlu0 %2168
        %v2170 = vsel %vm1289, %v2130, 0.0
        %2171 = vadd.xlane.f32.xlu0 %v2170
        %v2172 = vpop.xlane.xlu0 %2171
        %v2173 = vsel %vm1289, %v2131, 0.0
        %2174 = vadd.xlane.f32.xlu0 %v2173
        %v2175 = vpop.xlane.xlu0 %2174
        %v2176 = vsel %vm1289, %v2132, 0.0
        %2177 = vadd.xlane.f32.xlu0 %v2176
        %v2178 = vpop.xlane.xlu0 %2177
        %v2179 = vsel %vm1289, %v2133, 0.0
        %2180 = vadd.xlane.f32.xlu0 %v2179
        %v2181 = vpop.xlane.xlu0 %2180
        %v2182 = vmul.f32 %v1974, %v1477
        %v2183 = vmul.f32 %v1975, %v1477
        %v2184 = vmul.f32 %v1976, %v1477
        %v2185 = vmul.f32 %v1977, %v1477
        %v2186 = vmul.f32 %v1978, %v1477
        %v2187 = vmul.f32 %v1979, %v1477
        %v2188 = vmul.f32 %v1980, %v1477
        %v2189 = vmul.f32 %v1981, %v1477
        %v2190 = vmul.f32 %v1982, %v1477
        %v2191 = vmul.f32 %v1983, %v1477
        %v2192 = vmul.f32 %v1984, %v1477
        %v2193 = vmul.f32 %v1985, %v1477
        %v2194 = vmul.f32 %v1986, %v1477
        %v2195 = vmul.f32 %v1987, %v1477
        %v2196 = vmul.f32 %v1988, %v1477
        %v2197 = vmul.f32 %v1989, %v1477
        %v2198 = vsel %vm1289, %v2182, 0.0
        %2199 = vadd.xlane.f32.xlu0 %v2198
        %v2200 = vpop.xlane.xlu0 %2199
        %v2201 = vsel %vm1289, %v2183, 0.0
        %2202 = vadd.xlane.f32.xlu0 %v2201
        %v2203 = vpop.xlane.xlu0 %2202
        %v2204 = vsel %vm1289, %v2184, 0.0
        %2205 = vadd.xlane.f32.xlu0 %v2204
        %v2206 = vpop.xlane.xlu0 %2205
        %v2207 = vsel %vm1289, %v2185, 0.0
        %2208 = vadd.xlane.f32.xlu0 %v2207
        %v2209 = vpop.xlane.xlu0 %2208
        %v2210 = vsel %vm1289, %v2186, 0.0
        %2211 = vadd.xlane.f32.xlu0 %v2210
        %v2212 = vpop.xlane.xlu0 %2211
        %v2213 = vsel %vm1289, %v2187, 0.0
        %2214 = vadd.xlane.f32.xlu0 %v2213
        %v2215 = vpop.xlane.xlu0 %2214
        %v2216 = vsel %vm1289, %v2188, 0.0
        %2217 = vadd.xlane.f32.xlu0 %v2216
        %v2218 = vpop.xlane.xlu0 %2217
        %v2219 = vsel %vm1289, %v2189, 0.0
        %2220 = vadd.xlane.f32.xlu0 %v2219
        %v2221 = vpop.xlane.xlu0 %2220
        %v2222 = vsel %vm1289, %v2190, 0.0
        %2223 = vadd.xlane.f32.xlu0 %v2222
        %v2224 = vpop.xlane.xlu0 %2223
        %v2225 = vsel %vm1289, %v2191, 0.0
        %2226 = vadd.xlane.f32.xlu0 %v2225
        %v2227 = vpop.xlane.xlu0 %2226
        %v2228 = vsel %vm1289, %v2192, 0.0
        %2229 = vadd.xlane.f32.xlu0 %v2228
        %v2230 = vpop.xlane.xlu0 %2229
        %v2231 = vsel %vm1289, %v2193, 0.0
        %2232 = vadd.xlane.f32.xlu0 %v2231
        %v2233 = vpop.xlane.xlu0 %2232
        %v2234 = vsel %vm1289, %v2194, 0.0
        %2235 = vadd.xlane.f32.xlu0 %v2234
        %v2236 = vpop.xlane.xlu0 %2235
        %v2237 = vsel %vm1289, %v2195, 0.0
        %2238 = vadd.xlane.f32.xlu0 %v2237
        %v2239 = vpop.xlane.xlu0 %2238
        %v2240 = vsel %vm1289, %v2196, 0.0
        %2241 = vadd.xlane.f32.xlu0 %v2240
        %v2242 = vpop.xlane.xlu0 %2241
        %v2243 = vsel %vm1289, %v2197, 0.0
        %2244 = vadd.xlane.f32.xlu0 %v2243
        %v2245 = vpop.xlane.xlu0 %2244
        %v2246 = vsel %vm1220, %v1258, 0.0
        %2247 = vadd.xlane.f32.xlu0 %v2246
        %v2248 = vpop.xlane.xlu0 %2247
        %v2249 = vsel %vm1220, %v1260, 0.0
        %2250 = vadd.xlane.f32.xlu0 %v2249
        %v2251 = vpop.xlane.xlu0 %2250
        %v2252 = vsel %vm1220, %v1262, 0.0
        %2253 = vadd.xlane.f32.xlu0 %v2252
        %v2254 = vpop.xlane.xlu0 %2253
        %v2255 = vsel %vm1220, %v1264, 0.0
        %2256 = vadd.xlane.f32.xlu0 %v2255
        %v2257 = vpop.xlane.xlu0 %2256
        %vm2258 = vcmp.ne.f32.partialorder %v1258, 0.0
        %vm2259 = vcmp.ne.f32.partialorder %v1260, 0.0
        %vm2260 = vcmp.ne.f32.partialorder %v1262, 0.0
        %vm2261 = vcmp.ne.f32.partialorder %v1264, 0.0
        %v2262 = vsel %vm2258, 1, 0
        %v2263 = vsel %vm2259, 1, 0
        %v2264 = vsel %vm2260, 1, 0
        %v2265 = vsel %vm2261, 1, 0
        %v2266 = vcvt.s32.f32 %v2262
        %v2267 = vcvt.s32.f32 %v2263
        %v2268 = vcvt.s32.f32 %v2264
        %v2269 = vcvt.s32.f32 %v2265
        %v2270 = vsel %vm1220, %v2266, 0.0
        %2271 = vadd.xlane.f32.xlu0 %v2270
        %v2272 = vpop.xlane.xlu0 %2271
        %v2273 = vsel %vm1220, %v2267, 0.0
        %2274 = vadd.xlane.f32.xlu0 %v2273
        %v2275 = vpop.xlane.xlu0 %2274
        %v2276 = vsel %vm1220, %v2268, 0.0
        %2277 = vadd.xlane.f32.xlu0 %v2276
        %v2278 = vpop.xlane.xlu0 %2277
        %v2279 = vsel %vm1220, %v2269, 0.0
        %2280 = vadd.xlane.f32.xlu0 %v2279
        %v2281 = vpop.xlane.xlu0 %2280
        %v2282 = vsub.f32 %v2272, 1.0
        %v2283 = vsub.f32 %v2275, 1.0
        %v2284 = vsub.f32 %v2278, 1.0
        %v2285 = vsub.f32 %v2281, 1.0
        %v2286 = vmul.f32 %v2282, %v2248
        %v2287 = vmul.f32 %v2283, %v2251
        %v2288 = vmul.f32 %v2284, %v2254
        %v2289 = vmul.f32 %v2285, %v2257
        %v2290 = vrcp.pop %v2272
        %v2291 = vmul.f32 %v2286, %v2290
        %v2292 = vrcp.pop %v2275
        %v2293 = vmul.f32 %v2287, %v2292
        %v2294 = vrcp.pop %v2278
        %v2295 = vmul.f32 %v2288, %v2294
        %v2296 = vrcp.pop %v2281
        %v2297 = vmul.f32 %v2289, %v2296
        %v2298 = vlaneseq
        %v2299 = vshrl.u32 %v2298, 7
        %v2300 = vsub.s32 0, %v2299
        %v2301 = vrot.slane %v2291, %v2300
        %v2302 = vlaneseq
        %v2303 = vshrl.u32 %v2302, 7
        %v2304 = vsub.s32 0, %v2303
        %v2305 = vrot.slane %v2293, %v2304
        %v2306 = vlaneseq
        %v2307 = vshrl.u32 %v2306, 7
        %v2308 = vsub.s32 0, %v2307
        %v2309 = vrot.slane %v2295, %v2308
        %v2310 = vlaneseq
        %v2311 = vshrl.u32 %v2310, 7
        %v2312 = vsub.s32 0, %v2311
        %v2313 = vrot.slane %v2297, %v2312
        %v2314 = vrcp.pop %v2301
        %v2315 = vmul.f32 %v2008, %v2314
        %v2316 = vmul.f32 %v2011, %v2314
        %v2317 = vmul.f32 %v2014, %v2314
        %v2318 = vmul.f32 %v2017, %v2314
        %v2319 = vmul.f32 %v2020, %v2314
        %v2320 = vmul.f32 %v2023, %v2314
        %v2321 = vmul.f32 %v2026, %v2314
        %v2322 = vmul.f32 %v2029, %v2314
        %v2323 = vmul.f32 %v2032, %v2314
        %v2324 = vmul.f32 %v2035, %v2314
        %v2325 = vmul.f32 %v2038, %v2314
        %v2326 = vmul.f32 %v2041, %v2314
        %v2327 = vmul.f32 %v2044, %v2314
        %v2328 = vmul.f32 %v2047, %v2314
        %v2329 = vmul.f32 %v2050, %v2314
        %v2330 = vmul.f32 %v2053, %v2314
        %v2331 = vrcp.pop %v2305
        %v2332 = vmul.f32 %v2072, %v2331
        %v2333 = vmul.f32 %v2075, %v2331
        %v2334 = vmul.f32 %v2078, %v2331
        %v2335 = vmul.f32 %v2081, %v2331
        %v2336 = vmul.f32 %v2084, %v2331
        %v2337 = vmul.f32 %v2087, %v2331
        %v2338 = vmul.f32 %v2090, %v2331
        %v2339 = vmul.f32 %v2093, %v2331
        %v2340 = vmul.f32 %v2096, %v2331
        %v2341 = vmul.f32 %v2099, %v2331
        %v2342 = vmul.f32 %v2102, %v2331
        %v2343 = vmul.f32 %v2105, %v2331
        %v2344 = vmul.f32 %v2108, %v2331
        %v2345 = vmul.f32 %v2111, %v2331
        %v2346 = vmul.f32 %v2114, %v2331
        %v2347 = vmul.f32 %v2117, %v2331
        %v2348 = vrcp.pop %v2309
        %v2349 = vmul.f32 %v2136, %v2348
        %v2350 = vmul.f32 %v2139, %v2348
        %v2351 = vmul.f32 %v2142, %v2348
        %v2352 = vmul.f32 %v2145, %v2348
        %v2353 = vmul.f32 %v2148, %v2348
        %v2354 = vmul.f32 %v2151, %v2348
        %v2355 = vmul.f32 %v2154, %v2348
        %v2356 = vmul.f32 %v2157, %v2348
        %v2357 = vmul.f32 %v2160, %v2348
        %v2358 = vmul.f32 %v2163, %v2348
        %v2359 = vmul.f32 %v2166, %v2348
        %v2360 = vmul.f32 %v2169, %v2348
        %v2361 = vmul.f32 %v2172, %v2348
        %v2362 = vmul.f32 %v2175, %v2348
        %v2363 = vmul.f32 %v2178, %v2348
        %v2364 = vmul.f32 %v2181, %v2348
        %v2365 = vrcp.pop %v2313
        %v2366 = vmul.f32 %v2200, %v2365
        %v2367 = vmul.f32 %v2203, %v2365
        %v2368 = vmul.f32 %v2206, %v2365
        %v2369 = vmul.f32 %v2209, %v2365
        %v2370 = vmul.f32 %v2212, %v2365
        %v2371 = vmul.f32 %v2215, %v2365
        %v2372 = vmul.f32 %v2218, %v2365
        %v2373 = vmul.f32 %v2221, %v2365
        %v2374 = vmul.f32 %v2224, %v2365
        %v2375 = vmul.f32 %v2227, %v2365
        %v2376 = vmul.f32 %v2230, %v2365
        %v2377 = vmul.f32 %v2233, %v2365
        %v2378 = vmul.f32 %v2236, %v2365
        %v2379 = vmul.f32 %v2239, %v2365
        %v2380 = vmul.f32 %v2242, %v2365
        %v2381 = vmul.f32 %v2245, %v2365
        %v2382 = vrsqrt.pop %v2315
        %v2383 = vmul.f32 %v2315, %v2382
        %vm2384 = vcmp.eq.f32.partialorder %v2315, inf
        %v2385 = vsel %vm2384, %v2315, %v2383
        %vm2386 = vcmp.eq.f32.partialorder %v2315, 0.0
        %v2387 = vand.u32 %v2315, 2147483648
        %v2388 = vsel %vm2386, %v2387, %v2385
        %v2389 = vrsqrt.pop %v2316
        %v2390 = vmul.f32 %v2316, %v2389
        %vm2391 = vcmp.eq.f32.partialorder %v2316, inf
        %v2392 = vsel %vm2391, %v2316, %v2390
        %vm2393 = vcmp.eq.f32.partialorder %v2316, 0.0
        %v2394 = vand.u32 %v2316, 2147483648
        %v2395 = vsel %vm2393, %v2394, %v2392
        %v2396 = vrsqrt.pop %v2317
        %v2397 = vmul.f32 %v2317, %v2396
        %vm2398 = vcmp.eq.f32.partialorder %v2317, inf
        %v2399 = vsel %vm2398, %v2317, %v2397
        %vm2400 = vcmp.eq.f32.partialorder %v2317, 0.0
        %v2401 = vand.u32 %v2317, 2147483648
        %v2402 = vsel %vm2400, %v2401, %v2399
        %v2403 = vrsqrt.pop %v2318
        %v2404 = vmul.f32 %v2318, %v2403
        %vm2405 = vcmp.eq.f32.partialorder %v2318, inf
        %v2406 = vsel %vm2405, %v2318, %v2404
        %vm2407 = vcmp.eq.f32.partialorder %v2318, 0.0
        %v2408 = vand.u32 %v2318, 2147483648
        %v2409 = vsel %vm2407, %v2408, %v2406
        %v2410 = vrsqrt.pop %v2319
        %v2411 = vmul.f32 %v2319, %v2410
        %vm2412 = vcmp.eq.f32.partialorder %v2319, inf
        %v2413 = vsel %vm2412, %v2319, %v2411
        %vm2414 = vcmp.eq.f32.partialorder %v2319, 0.0
        %v2415 = vand.u32 %v2319, 2147483648
        %v2416 = vsel %vm2414, %v2415, %v2413
        %v2417 = vrsqrt.pop %v2320
        %v2418 = vmul.f32 %v2320, %v2417
        %vm2419 = vcmp.eq.f32.partialorder %v2320, inf
        %v2420 = vsel %vm2419, %v2320, %v2418
        %vm2421 = vcmp.eq.f32.partialorder %v2320, 0.0
        %v2422 = vand.u32 %v2320, 2147483648
        %v2423 = vsel %vm2421, %v2422, %v2420
        %v2424 = vrsqrt.pop %v2321
        %v2425 = vmul.f32 %v2321, %v2424
        %vm2426 = vcmp.eq.f32.partialorder %v2321, inf
        %v2427 = vsel %vm2426, %v2321, %v2425
        %vm2428 = vcmp.eq.f32.partialorder %v2321, 0.0
        %v2429 = vand.u32 %v2321, 2147483648
        %v2430 = vsel %vm2428, %v2429, %v2427
        %v2431 = vrsqrt.pop %v2322
        %v2432 = vmul.f32 %v2322, %v2431
        %vm2433 = vcmp.eq.f32.partialorder %v2322, inf
        %v2434 = vsel %vm2433, %v2322, %v2432
        %vm2435 = vcmp.eq.f32.partialorder %v2322, 0.0
        %v2436 = vand.u32 %v2322, 2147483648
        %v2437 = vsel %vm2435, %v2436, %v2434
        %v2438 = vrsqrt.pop %v2323
        %v2439 = vmul.f32 %v2323, %v2438
        %vm2440 = vcmp.eq.f32.partialorder %v2323, inf
        %v2441 = vsel %vm2440, %v2323, %v2439
        %vm2442 = vcmp.eq.f32.partialorder %v2323, 0.0
        %v2443 = vand.u32 %v2323, 2147483648
        %v2444 = vsel %vm2442, %v2443, %v2441
        %v2445 = vrsqrt.pop %v2324
        %v2446 = vmul.f32 %v2324, %v2445
        %vm2447 = vcmp.eq.f32.partialorder %v2324, inf
        %v2448 = vsel %vm2447, %v2324, %v2446
        %vm2449 = vcmp.eq.f32.partialorder %v2324, 0.0
        %v2450 = vand.u32 %v2324, 2147483648
        %v2451 = vsel %vm2449, %v2450, %v2448
        %v2452 = vrsqrt.pop %v2325
        %v2453 = vmul.f32 %v2325, %v2452
        %vm2454 = vcmp.eq.f32.partialorder %v2325, inf
        %v2455 = vsel %vm2454, %v2325, %v2453
        %vm2456 = vcmp.eq.f32.partialorder %v2325, 0.0
        %v2457 = vand.u32 %v2325, 2147483648
        %v2458 = vsel %vm2456, %v2457, %v2455
        %v2459 = vrsqrt.pop %v2326
        %v2460 = vmul.f32 %v2326, %v2459
        %vm2461 = vcmp.eq.f32.partialorder %v2326, inf
        %v2462 = vsel %vm2461, %v2326, %v2460
        %vm2463 = vcmp.eq.f32.partialorder %v2326, 0.0
        %v2464 = vand.u32 %v2326, 2147483648
        %v2465 = vsel %vm2463, %v2464, %v2462
        %v2466 = vrsqrt.pop %v2327
        %v2467 = vmul.f32 %v2327, %v2466
        %vm2468 = vcmp.eq.f32.partialorder %v2327, inf
        %v2469 = vsel %vm2468, %v2327, %v2467
        %vm2470 = vcmp.eq.f32.partialorder %v2327, 0.0
        %v2471 = vand.u32 %v2327, 2147483648
        %v2472 = vsel %vm2470, %v2471, %v2469
        %v2473 = vrsqrt.pop %v2328
        %v2474 = vmul.f32 %v2328, %v2473
        %vm2475 = vcmp.eq.f32.partialorder %v2328, inf
        %v2476 = vsel %vm2475, %v2328, %v2474
        %vm2477 = vcmp.eq.f32.partialorder %v2328, 0.0
        %v2478 = vand.u32 %v2328, 2147483648
        %v2479 = vsel %vm2477, %v2478, %v2476
        %v2480 = vrsqrt.pop %v2329
        %v2481 = vmul.f32 %v2329, %v2480
        %vm2482 = vcmp.eq.f32.partialorder %v2329, inf
        %v2483 = vsel %vm2482, %v2329, %v2481
        %vm2484 = vcmp.eq.f32.partialorder %v2329, 0.0
        %v2485 = vand.u32 %v2329, 2147483648
        %v2486 = vsel %vm2484, %v2485, %v2483
        %v2487 = vrsqrt.pop %v2330
        %v2488 = vmul.f32 %v2330, %v2487
        %vm2489 = vcmp.eq.f32.partialorder %v2330, inf
        %v2490 = vsel %vm2489, %v2330, %v2488
        %vm2491 = vcmp.eq.f32.partialorder %v2330, 0.0
        %v2492 = vand.u32 %v2330, 2147483648
        %v2493 = vsel %vm2491, %v2492, %v2490
        %v2494 = vrsqrt.pop %v2332
        %v2495 = vmul.f32 %v2332, %v2494
        %vm2496 = vcmp.eq.f32.partialorder %v2332, inf
        %v2497 = vsel %vm2496, %v2332, %v2495
        %vm2498 = vcmp.eq.f32.partialorder %v2332, 0.0
        %v2499 = vand.u32 %v2332, 2147483648
        %v2500 = vsel %vm2498, %v2499, %v2497
        %v2501 = vrsqrt.pop %v2333
        %v2502 = vmul.f32 %v2333, %v2501
        %vm2503 = vcmp.eq.f32.partialorder %v2333, inf
        %v2504 = vsel %vm2503, %v2333, %v2502
        %vm2505 = vcmp.eq.f32.partialorder %v2333, 0.0
        %v2506 = vand.u32 %v2333, 2147483648
        %v2507 = vsel %vm2505, %v2506, %v2504
        %v2508 = vrsqrt.pop %v2334
        %v2509 = vmul.f32 %v2334, %v2508
        %vm2510 = vcmp.eq.f32.partialorder %v2334, inf
        %v2511 = vsel %vm2510, %v2334, %v2509
        %vm2512 = vcmp.eq.f32.partialorder %v2334, 0.0
        %v2513 = vand.u32 %v2334, 2147483648
        %v2514 = vsel %vm2512, %v2513, %v2511
        %v2515 = vrsqrt.pop %v2335
        %v2516 = vmul.f32 %v2335, %v2515
        %vm2517 = vcmp.eq.f32.partialorder %v2335, inf
        %v2518 = vsel %vm2517, %v2335, %v2516
        %vm2519 = vcmp.eq.f32.partialorder %v2335, 0.0
        %v2520 = vand.u32 %v2335, 2147483648
        %v2521 = vsel %vm2519, %v2520, %v2518
        %v2522 = vrsqrt.pop %v2336
        %v2523 = vmul.f32 %v2336, %v2522
        %vm2524 = vcmp.eq.f32.partialorder %v2336, inf
        %v2525 = vsel %vm2524, %v2336, %v2523
        %vm2526 = vcmp.eq.f32.partialorder %v2336, 0.0
        %v2527 = vand.u32 %v2336, 2147483648
        %v2528 = vsel %vm2526, %v2527, %v2525
        %v2529 = vrsqrt.pop %v2337
        %v2530 = vmul.f32 %v2337, %v2529
        %vm2531 = vcmp.eq.f32.partialorder %v2337, inf
        %v2532 = vsel %vm2531, %v2337, %v2530
        %vm2533 = vcmp.eq.f32.partialorder %v2337, 0.0
        %v2534 = vand.u32 %v2337, 2147483648
        %v2535 = vsel %vm2533, %v2534, %v2532
        %v2536 = vrsqrt.pop %v2338
        %v2537 = vmul.f32 %v2338, %v2536
        %vm2538 = vcmp.eq.f32.partialorder %v2338, inf
        %v2539 = vsel %vm2538, %v2338, %v2537
        %vm2540 = vcmp.eq.f32.partialorder %v2338, 0.0
        %v2541 = vand.u32 %v2338, 2147483648
        %v2542 = vsel %vm2540, %v2541, %v2539
        %v2543 = vrsqrt.pop %v2339
        %v2544 = vmul.f32 %v2339, %v2543
        %vm2545 = vcmp.eq.f32.partialorder %v2339, inf
        %v2546 = vsel %vm2545, %v2339, %v2544
        %vm2547 = vcmp.eq.f32.partialorder %v2339, 0.0
        %v2548 = vand.u32 %v2339, 2147483648
        %v2549 = vsel %vm2547, %v2548, %v2546
        %v2550 = vrsqrt.pop %v2340
        %v2551 = vmul.f32 %v2340, %v2550
        %vm2552 = vcmp.eq.f32.partialorder %v2340, inf
        %v2553 = vsel %vm2552, %v2340, %v2551
        %vm2554 = vcmp.eq.f32.partialorder %v2340, 0.0
        %v2555 = vand.u32 %v2340, 2147483648
        %v2556 = vsel %vm2554, %v2555, %v2553
        %v2557 = vrsqrt.pop %v2341
        %v2558 = vmul.f32 %v2341, %v2557
        %vm2559 = vcmp.eq.f32.partialorder %v2341, inf
        %v2560 = vsel %vm2559, %v2341, %v2558
        %vm2561 = vcmp.eq.f32.partialorder %v2341, 0.0
        %v2562 = vand.u32 %v2341, 2147483648
        %v2563 = vsel %vm2561, %v2562, %v2560
        %v2564 = vrsqrt.pop %v2342
        %v2565 = vmul.f32 %v2342, %v2564
        %vm2566 = vcmp.eq.f32.partialorder %v2342, inf
        %v2567 = vsel %vm2566, %v2342, %v2565
        %vm2568 = vcmp.eq.f32.partialorder %v2342, 0.0
        %v2569 = vand.u32 %v2342, 2147483648
        %v2570 = vsel %vm2568, %v2569, %v2567
        %v2571 = vrsqrt.pop %v2343
        %v2572 = vmul.f32 %v2343, %v2571
        %vm2573 = vcmp.eq.f32.partialorder %v2343, inf
        %v2574 = vsel %vm2573, %v2343, %v2572
        %vm2575 = vcmp.eq.f32.partialorder %v2343, 0.0
        %v2576 = vand.u32 %v2343, 2147483648
        %v2577 = vsel %vm2575, %v2576, %v2574
        %v2578 = vrsqrt.pop %v2344
        %v2579 = vmul.f32 %v2344, %v2578
        %vm2580 = vcmp.eq.f32.partialorder %v2344, inf
        %v2581 = vsel %vm2580, %v2344, %v2579
        %vm2582 = vcmp.eq.f32.partialorder %v2344, 0.0
        %v2583 = vand.u32 %v2344, 2147483648
        %v2584 = vsel %vm2582, %v2583, %v2581
        %v2585 = vrsqrt.pop %v2345
        %v2586 = vmul.f32 %v2345, %v2585
        %vm2587 = vcmp.eq.f32.partialorder %v2345, inf
        %v2588 = vsel %vm2587, %v2345, %v2586
        %vm2589 = vcmp.eq.f32.partialorder %v2345, 0.0
        %v2590 = vand.u32 %v2345, 2147483648
        %v2591 = vsel %vm2589, %v2590, %v2588
        %v2592 = vrsqrt.pop %v2346
        %v2593 = vmul.f32 %v2346, %v2592
        %vm2594 = vcmp.eq.f32.partialorder %v2346, inf
        %v2595 = vsel %vm2594, %v2346, %v2593
        %vm2596 = vcmp.eq.f32.partialorder %v2346, 0.0
        %v2597 = vand.u32 %v2346, 2147483648
        %v2598 = vsel %vm2596, %v2597, %v2595
        %v2599 = vrsqrt.pop %v2347
        %v2600 = vmul.f32 %v2347, %v2599
        %vm2601 = vcmp.eq.f32.partialorder %v2347, inf
        %v2602 = vsel %vm2601, %v2347, %v2600
        %vm2603 = vcmp.eq.f32.partialorder %v2347, 0.0
        %v2604 = vand.u32 %v2347, 2147483648
        %v2605 = vsel %vm2603, %v2604, %v2602
        %v2606 = vrsqrt.pop %v2349
        %v2607 = vmul.f32 %v2349, %v2606
        %vm2608 = vcmp.eq.f32.partialorder %v2349, inf
        %v2609 = vsel %vm2608, %v2349, %v2607
        %vm2610 = vcmp.eq.f32.partialorder %v2349, 0.0
        %v2611 = vand.u32 %v2349, 2147483648
        %v2612 = vsel %vm2610, %v2611, %v2609
        %v2613 = vrsqrt.pop %v2350
        %v2614 = vmul.f32 %v2350, %v2613
        %vm2615 = vcmp.eq.f32.partialorder %v2350, inf
        %v2616 = vsel %vm2615, %v2350, %v2614
        %vm2617 = vcmp.eq.f32.partialorder %v2350, 0.0
        %v2618 = vand.u32 %v2350, 2147483648
        %v2619 = vsel %vm2617, %v2618, %v2616
        %v2620 = vrsqrt.pop %v2351
        %v2621 = vmul.f32 %v2351, %v2620
        %vm2622 = vcmp.eq.f32.partialorder %v2351, inf
        %v2623 = vsel %vm2622, %v2351, %v2621
        %vm2624 = vcmp.eq.f32.partialorder %v2351, 0.0
        %v2625 = vand.u32 %v2351, 2147483648
        %v2626 = vsel %vm2624, %v2625, %v2623
        %v2627 = vrsqrt.pop %v2352
        %v2628 = vmul.f32 %v2352, %v2627
        %vm2629 = vcmp.eq.f32.partialorder %v2352, inf
        %v2630 = vsel %vm2629, %v2352, %v2628
        %vm2631 = vcmp.eq.f32.partialorder %v2352, 0.0
        %v2632 = vand.u32 %v2352, 2147483648
        %v2633 = vsel %vm2631, %v2632, %v2630
        %v2634 = vrsqrt.pop %v2353
        %v2635 = vmul.f32 %v2353, %v2634
        %vm2636 = vcmp.eq.f32.partialorder %v2353, inf
        %v2637 = vsel %vm2636, %v2353, %v2635
        %vm2638 = vcmp.eq.f32.partialorder %v2353, 0.0
        %v2639 = vand.u32 %v2353, 2147483648
        %v2640 = vsel %vm2638, %v2639, %v2637
        %v2641 = vrsqrt.pop %v2354
        %v2642 = vmul.f32 %v2354, %v2641
        %vm2643 = vcmp.eq.f32.partialorder %v2354, inf
        %v2644 = vsel %vm2643, %v2354, %v2642
        %vm2645 = vcmp.eq.f32.partialorder %v2354, 0.0
        %v2646 = vand.u32 %v2354, 2147483648
        %v2647 = vsel %vm2645, %v2646, %v2644
        %v2648 = vrsqrt.pop %v2355
        %v2649 = vmul.f32 %v2355, %v2648
        %vm2650 = vcmp.eq.f32.partialorder %v2355, inf
        %v2651 = vsel %vm2650, %v2355, %v2649
        %vm2652 = vcmp.eq.f32.partialorder %v2355, 0.0
        %v2653 = vand.u32 %v2355, 2147483648
        %v2654 = vsel %vm2652, %v2653, %v2651
        %v2655 = vrsqrt.pop %v2356
        %v2656 = vmul.f32 %v2356, %v2655
        %vm2657 = vcmp.eq.f32.partialorder %v2356, inf
        %v2658 = vsel %vm2657, %v2356, %v2656
        %vm2659 = vcmp.eq.f32.partialorder %v2356, 0.0
        %v2660 = vand.u32 %v2356, 2147483648
        %v2661 = vsel %vm2659, %v2660, %v2658
        %v2662 = vrsqrt.pop %v2357
        %v2663 = vmul.f32 %v2357, %v2662
        %vm2664 = vcmp.eq.f32.partialorder %v2357, inf
        %v2665 = vsel %vm2664, %v2357, %v2663
        %vm2666 = vcmp.eq.f32.partialorder %v2357, 0.0
        %v2667 = vand.u32 %v2357, 2147483648
        %v2668 = vsel %vm2666, %v2667, %v2665
        %v2669 = vrsqrt.pop %v2358
        %v2670 = vmul.f32 %v2358, %v2669
        %vm2671 = vcmp.eq.f32.partialorder %v2358, inf
        %v2672 = vsel %vm2671, %v2358, %v2670
        %vm2673 = vcmp.eq.f32.partialorder %v2358, 0.0
        %v2674 = vand.u32 %v2358, 2147483648
        %v2675 = vsel %vm2673, %v2674, %v2672
        %v2676 = vrsqrt.pop %v2359
        %v2677 = vmul.f32 %v2359, %v2676
        %vm2678 = vcmp.eq.f32.partialorder %v2359, inf
        %v2679 = vsel %vm2678, %v2359, %v2677
        %vm2680 = vcmp.eq.f32.partialorder %v2359, 0.0
        %v2681 = vand.u32 %v2359, 2147483648
        %v2682 = vsel %vm2680, %v2681, %v2679
        %v2683 = vrsqrt.pop %v2360
        %v2684 = vmul.f32 %v2360, %v2683
        %vm2685 = vcmp.eq.f32.partialorder %v2360, inf
        %v2686 = vsel %vm2685, %v2360, %v2684
        %vm2687 = vcmp.eq.f32.partialorder %v2360, 0.0
        %v2688 = vand.u32 %v2360, 2147483648
        %v2689 = vsel %vm2687, %v2688, %v2686
        %v2690 = vrsqrt.pop %v2361
        %v2691 = vmul.f32 %v2361, %v2690
        %vm2692 = vcmp.eq.f32.partialorder %v2361, inf
        %v2693 = vsel %vm2692, %v2361, %v2691
        %vm2694 = vcmp.eq.f32.partialorder %v2361, 0.0
        %v2695 = vand.u32 %v2361, 2147483648
        %v2696 = vsel %vm2694, %v2695, %v2693
        %v2697 = vrsqrt.pop %v2362
        %v2698 = vmul.f32 %v2362, %v2697
        %vm2699 = vcmp.eq.f32.partialorder %v2362, inf
        %v2700 = vsel %vm2699, %v2362, %v2698
        %vm2701 = vcmp.eq.f32.partialorder %v2362, 0.0
        %v2702 = vand.u32 %v2362, 2147483648
        %v2703 = vsel %vm2701, %v2702, %v2700
        %v2704 = vrsqrt.pop %v2363
        %v2705 = vmul.f32 %v2363, %v2704
        %vm2706 = vcmp.eq.f32.partialorder %v2363, inf
        %v2707 = vsel %vm2706, %v2363, %v2705
        %vm2708 = vcmp.eq.f32.partialorder %v2363, 0.0
        %v2709 = vand.u32 %v2363, 2147483648
        %v2710 = vsel %vm2708, %v2709, %v2707
        %v2711 = vrsqrt.pop %v2364
        %v2712 = vmul.f32 %v2364, %v2711
        %vm2713 = vcmp.eq.f32.partialorder %v2364, inf
        %v2714 = vsel %vm2713, %v2364, %v2712
        %vm2715 = vcmp.eq.f32.partialorder %v2364, 0.0
        %v2716 = vand.u32 %v2364, 2147483648
        %v2717 = vsel %vm2715, %v2716, %v2714
        %v2718 = vrsqrt.pop %v2366
        %v2719 = vmul.f32 %v2366, %v2718
        %vm2720 = vcmp.eq.f32.partialorder %v2366, inf
        %v2721 = vsel %vm2720, %v2366, %v2719
        %vm2722 = vcmp.eq.f32.partialorder %v2366, 0.0
        %v2723 = vand.u32 %v2366, 2147483648
        %v2724 = vsel %vm2722, %v2723, %v2721
        %v2725 = vrsqrt.pop %v2367
        %v2726 = vmul.f32 %v2367, %v2725
        %vm2727 = vcmp.eq.f32.partialorder %v2367, inf
        %v2728 = vsel %vm2727, %v2367, %v2726
        %vm2729 = vcmp.eq.f32.partialorder %v2367, 0.0
        %v2730 = vand.u32 %v2367, 2147483648
        %v2731 = vsel %vm2729, %v2730, %v2728
        %v2732 = vrsqrt.pop %v2368
        %v2733 = vmul.f32 %v2368, %v2732
        %vm2734 = vcmp.eq.f32.partialorder %v2368, inf
        %v2735 = vsel %vm2734, %v2368, %v2733
        %vm2736 = vcmp.eq.f32.partialorder %v2368, 0.0
        %v2737 = vand.u32 %v2368, 2147483648
        %v2738 = vsel %vm2736, %v2737, %v2735
        %v2739 = vrsqrt.pop %v2369
        %v2740 = vmul.f32 %v2369, %v2739
        %vm2741 = vcmp.eq.f32.partialorder %v2369, inf
        %v2742 = vsel %vm2741, %v2369, %v2740
        %vm2743 = vcmp.eq.f32.partialorder %v2369, 0.0
        %v2744 = vand.u32 %v2369, 2147483648
        %v2745 = vsel %vm2743, %v2744, %v2742
        %v2746 = vrsqrt.pop %v2370
        %v2747 = vmul.f32 %v2370, %v2746
        %vm2748 = vcmp.eq.f32.partialorder %v2370, inf
        %v2749 = vsel %vm2748, %v2370, %v2747
        %vm2750 = vcmp.eq.f32.partialorder %v2370, 0.0
        %v2751 = vand.u32 %v2370, 2147483648
        %v2752 = vsel %vm2750, %v2751, %v2749
        %v2753 = vrsqrt.pop %v2371
        %v2754 = vmul.f32 %v2371, %v2753
        %vm2755 = vcmp.eq.f32.partialorder %v2371, inf
        %v2756 = vsel %vm2755, %v2371, %v2754
        %vm2757 = vcmp.eq.f32.partialorder %v2371, 0.0
        %v2758 = vand.u32 %v2371, 2147483648
        %v2759 = vsel %vm2757, %v2758, %v2756
        %v2760 = vrsqrt.pop %v2372
        %v2761 = vmul.f32 %v2372, %v2760
        %vm2762 = vcmp.eq.f32.partialorder %v2372, inf
        %v2763 = vsel %vm2762, %v2372, %v2761
        %vm2764 = vcmp.eq.f32.partialorder %v2372, 0.0
        %v2765 = vand.u32 %v2372, 2147483648
        %v2766 = vsel %vm2764, %v2765, %v2763
        %v2767 = vrsqrt.pop %v2373
        %v2768 = vmul.f32 %v2373, %v2767
        %vm2769 = vcmp.eq.f32.partialorder %v2373, inf
        %v2770 = vsel %vm2769, %v2373, %v2768
        %vm2771 = vcmp.eq.f32.partialorder %v2373, 0.0
        %v2772 = vand.u32 %v2373, 2147483648
        %v2773 = vsel %vm2771, %v2772, %v2770
        %v2774 = vrsqrt.pop %v2374
        %v2775 = vmul.f32 %v2374, %v2774
        %vm2776 = vcmp.eq.f32.partialorder %v2374, inf
        %v2777 = vsel %vm2776, %v2374, %v2775
        %vm2778 = vcmp.eq.f32.partialorder %v2374, 0.0
        %v2779 = vand.u32 %v2374, 2147483648
        %v2780 = vsel %vm2778, %v2779, %v2777
        %v2781 = vrsqrt.pop %v2375
        %v2782 = vmul.f32 %v2375, %v2781
        %vm2783 = vcmp.eq.f32.partialorder %v2375, inf
        %v2784 = vsel %vm2783, %v2375, %v2782
        %vm2785 = vcmp.eq.f32.partialorder %v2375, 0.0
        %v2786 = vand.u32 %v2375, 2147483648
        %v2787 = vsel %vm2785, %v2786, %v2784
        %v2788 = vrsqrt.pop %v2376
        %v2789 = vmul.f32 %v2376, %v2788
        %vm2790 = vcmp.eq.f32.partialorder %v2376, inf
        %v2791 = vsel %vm2790, %v2376, %v2789
        %vm2792 = vcmp.eq.f32.partialorder %v2376, 0.0
        %v2793 = vand.u32 %v2376, 2147483648
        %v2794 = vsel %vm2792, %v2793, %v2791
        %v2795 = vrsqrt.pop %v2377
        %v2796 = vmul.f32 %v2377, %v2795
        %vm2797 = vcmp.eq.f32.partialorder %v2377, inf
        %v2798 = vsel %vm2797, %v2377, %v2796
        %vm2799 = vcmp.eq.f32.partialorder %v2377, 0.0
        %v2800 = vand.u32 %v2377, 2147483648
        %v2801 = vsel %vm2799, %v2800, %v2798
        %v2802 = vrsqrt.pop %v2378
        %v2803 = vmul.f32 %v2378, %v2802
        %vm2804 = vcmp.eq.f32.partialorder %v2378, inf
        %v2805 = vsel %vm2804, %v2378, %v2803
        %vm2806 = vcmp.eq.f32.partialorder %v2378, 0.0
        %v2807 = vand.u32 %v2378, 2147483648
        %v2808 = vsel %vm2806, %v2807, %v2805
        %v2809 = vrsqrt.pop %v2379
        %v2810 = vmul.f32 %v2379, %v2809
        %vm2811 = vcmp.eq.f32.partialorder %v2379, inf
        %v2812 = vsel %vm2811, %v2379, %v2810
        %vm2813 = vcmp.eq.f32.partialorder %v2379, 0.0
        %v2814 = vand.u32 %v2379, 2147483648
        %v2815 = vsel %vm2813, %v2814, %v2812
        %v2816 = vrsqrt.pop %v2380
        %v2817 = vmul.f32 %v2380, %v2816
        %vm2818 = vcmp.eq.f32.partialorder %v2380, inf
        %v2819 = vsel %vm2818, %v2380, %v2817
        %vm2820 = vcmp.eq.f32.partialorder %v2380, 0.0
        %v2821 = vand.u32 %v2380, 2147483648
        %v2822 = vsel %vm2820, %v2821, %v2819
        %v2823 = vrsqrt.pop %v2381
        %v2824 = vmul.f32 %v2381, %v2823
        %vm2825 = vcmp.eq.f32.partialorder %v2381, inf
        %v2826 = vsel %vm2825, %v2381, %v2824
        %vm2827 = vcmp.eq.f32.partialorder %v2381, 0.0
        %v2828 = vand.u32 %v2381, 2147483648
        %v2829 = vsel %vm2827, %v2828, %v2826
        %v2830 = vld [vmem:[%s5] sm:$0x3]
        %v2831 = vld [vmem:[%s6] sm:$0x3]
        %2832 = vmatprep.subr.mxu0 0.0
        %2833 = vmatpush1.msra.mxu0 %v2388
        %2834 = vmatprep.subr.mxu0 0.0
        %2835 = vmatpush1.msra.mxu0 %v2395
        %2836 = vmatprep.subr.mxu0 0.0
        %2837 = vmatpush1.msra.mxu0 %v2402
        %2838 = vmatprep.subr.mxu0 0.0
        %2839 = vmatpush1.msra.mxu0 %v2409
        %2840 = vmatprep.subr.mxu0 0.0
        %2841 = vmatpush1.msra.mxu0 %v2416
        %2842 = vmatprep.subr.mxu0 0.0
        %2843 = vmatpush1.msra.mxu0 %v2423
        %2844 = vmatprep.subr.mxu0 0.0
        %2845 = vmatpush1.msra.mxu0 %v2430
        %2846 = vmatprep.subr.mxu0 0.0
        %2847 = vmatpush1.msra.mxu0 %v2437
        %2848 = vmatprep.subr.mxu0 0.0
        %2849 = vmatpush1.msra.mxu0 %v2444
        %2850 = vmatprep.subr.mxu0 0.0
        %2851 = vmatpush1.msra.mxu0 %v2451
        %2852 = vmatprep.subr.mxu0 0.0
        %2853 = vmatpush1.msra.mxu0 %v2458
        %2854 = vmatprep.subr.mxu0 0.0
        %2855 = vmatpush1.msra.mxu0 %v2465
        %2856 = vmatprep.subr.mxu0 0.0
        %2857 = vmatpush1.msra.mxu0 %v2472
        %2858 = vmatprep.subr.mxu0 0.0
        %2859 = vmatpush1.msra.mxu0 %v2479
        %2860 = vmatprep.subr.mxu0 0.0
        %2861 = vmatpush1.msra.mxu0 %v2486
        %2862 = vmatprep.subr.mxu0 0.0
        %2863 = vmatpush1.msra.mxu0 %v2493
        %2864 = vmatprep.subr.mxu0 0.0
        %2865 = vmatpush1.msra.mxu0 0.0
        %2866 = vmatprep.subr.mxu0 0.0
        %2867 = vmatpush1.msra.mxu0 0.0
        %2868 = vmatprep.subr.mxu0 0.0
        %2869 = vmatpush1.msra.mxu0 0.0
        %2870 = vmatprep.subr.mxu0 0.0
        %2871 = vmatpush1.msra.mxu0 0.0
        %2872 = vmatprep.subr.mxu0 0.0
        %2873 = vmatpush1.msra.mxu0 0.0
        %2874 = vmatprep.subr.mxu0 0.0
        %2875 = vmatpush1.msra.mxu0 0.0
        %2876 = vmatprep.subr.mxu0 0.0
        %2877 = vmatpush1.msra.mxu0 0.0
        %2878 = vmatprep.subr.mxu0 0.0
        %2879 = vmatpush1.msra.mxu0 0.0
        %2880 = vmatprep.subr.mxu0 0.0
        %2881 = vmatpush1.msra.mxu0 0.0
        %2882 = vmatprep.subr.mxu0 0.0
        %2883 = vmatpush1.msra.mxu0 0.0
        %2884 = vmatprep.subr.mxu0 0.0
        %2885 = vmatpush1.msra.mxu0 0.0
        %2886 = vmatprep.subr.mxu0 0.0
        %2887 = vmatpush1.msra.mxu0 0.0
        %2888 = vmatprep.subr.mxu0 0.0
        %2889 = vmatpush1.msra.mxu0 0.0
        %2890 = vmatprep.subr.mxu0 0.0
        %2891 = vmatpush1.msra.mxu0 0.0
        %2892 = vmatprep.subr.mxu0 0.0
        %2893 = vmatpush1.msra.mxu0 0.0
        %2894 = vmatprep.subr.mxu0 0.0
        %2895 = vmatpush1.msra.mxu0 0.0
        %2896 = vmatprep.mubr.f32.mxu0 0.0
        %2897 = vmatmul.mubr.f32.gmra.mrb[0].mxu0 %v2831
        %v2898 = vpop.f32.mrb[0].mxu0
        %v2899 = vadd.f32 0.0, %v2898
        %v2900 = vpop.f32.mrb[0].mxu0
        %2901 = vdwg.mxu0
        %2902 = vmatprep.subr.mxu0 0.0
        %2903 = vmatpush1.msra.mxu0 %v2500
        %2904 = vmatprep.subr.mxu0 0.0
        %2905 = vmatpush1.msra.mxu0 %v2507
        %2906 = vmatprep.subr.mxu0 0.0
        %2907 = vmatpush1.msra.mxu0 %v2514
        %2908 = vmatprep.subr.mxu0 0.0
        %2909 = vmatpush1.msra.mxu0 %v2521
        %2910 = vmatprep.subr.mxu0 0.0
        %2911 = vmatpush1.msra.mxu0 %v2528
        %2912 = vmatprep.subr.mxu0 0.0
        %2913 = vmatpush1.msra.mxu0 %v2535
        %2914 = vmatprep.subr.mxu0 0.0
        %2915 = vmatpush1.msra.mxu0 %v2542
        %2916 = vmatprep.subr.mxu0 0.0
        %2917 = vmatpush1.msra.mxu0 %v2549
        %2918 = vmatprep.subr.mxu0 0.0
        %2919 = vmatpush1.msra.mxu0 %v2556
        %2920 = vmatprep.subr.mxu0 0.0
        %2921 = vmatpush1.msra.mxu0 %v2563
        %2922 = vmatprep.subr.mxu0 0.0
        %2923 = vmatpush1.msra.mxu0 %v2570
        %2924 = vmatprep.subr.mxu0 0.0
        %2925 = vmatpush1.msra.mxu0 %v2577
        %2926 = vmatprep.subr.mxu0 0.0
        %2927 = vmatpush1.msra.mxu0 %v2584
        %2928 = vmatprep.subr.mxu0 0.0
        %2929 = vmatpush1.msra.mxu0 %v2591
        %2930 = vmatprep.subr.mxu0 0.0
        %2931 = vmatpush1.msra.mxu0 %v2598
        %2932 = vmatprep.subr.mxu0 0.0
        %2933 = vmatpush1.msra.mxu0 %v2605
        %2934 = vmatprep.subr.mxu0 0.0
        %2935 = vmatpush1.msra.mxu0 0.0
        %2936 = vmatprep.subr.mxu0 0.0
        %2937 = vmatpush1.msra.mxu0 0.0
        %2938 = vmatprep.subr.mxu0 0.0
        %2939 = vmatpush1.msra.mxu0 0.0
        %2940 = vmatprep.subr.mxu0 0.0
        %2941 = vmatpush1.msra.mxu0 0.0
        %2942 = vmatprep.subr.mxu0 0.0
        %2943 = vmatpush1.msra.mxu0 0.0
        %2944 = vmatprep.subr.mxu0 0.0
        %2945 = vmatpush1.msra.mxu0 0.0
        %2946 = vmatprep.subr.mxu0 0.0
        %2947 = vmatpush1.msra.mxu0 0.0
        %2948 = vmatprep.subr.mxu0 0.0
        %2949 = vmatpush1.msra.mxu0 0.0
        %2950 = vmatprep.subr.mxu0 0.0
        %2951 = vmatpush1.msra.mxu0 0.0
        %2952 = vmatprep.subr.mxu0 0.0
        %2953 = vmatpush1.msra.mxu0 0.0
        %2954 = vmatprep.subr.mxu0 0.0
        %2955 = vmatpush1.msra.mxu0 0.0
        %2956 = vmatprep.subr.mxu0 0.0
        %2957 = vmatpush1.msra.mxu0 0.0
        %2958 = vmatprep.subr.mxu0 0.0
        %2959 = vmatpush1.msra.mxu0 0.0
        %2960 = vmatprep.subr.mxu0 0.0
        %2961 = vmatpush1.msra.mxu0 0.0
        %2962 = vmatprep.subr.mxu0 0.0
        %2963 = vmatpush1.msra.mxu0 0.0
        %2964 = vmatprep.subr.mxu0 0.0
        %2965 = vmatpush1.msra.mxu0 0.0
        %2966 = vmatprep.mubr.f32.mxu0 0.0
        %2967 = vmatmul.mubr.f32.gmra.mrb[0].mxu0 %v2831
        %v2968 = vpop.f32.mrb[0].mxu0
        %v2969 = vadd.f32 0.0, %v2968
        %v2970 = vpop.f32.mrb[0].mxu0
        %2971 = vdwg.mxu0
        %2972 = vmatprep.subr.mxu0 0.0
        %2973 = vmatpush1.msra.mxu0 %v2612
        %2974 = vmatprep.subr.mxu0 0.0
        %2975 = vmatpush1.msra.mxu0 %v2619
        %2976 = vmatprep.subr.mxu0 0.0
        %2977 = vmatpush1.msra.mxu0 %v2626
        %2978 = vmatprep.subr.mxu0 0.0
        %2979 = vmatpush1.msra.mxu0 %v2633
        %2980 = vmatprep.subr.mxu0 0.0
        %2981 = vmatpush1.msra.mxu0 %v2640
        %2982 = vmatprep.subr.mxu0 0.0
        %2983 = vmatpush1.msra.mxu0 %v2647
        %2984 = vmatprep.subr.mxu0 0.0
        %2985 = vmatpush1.msra.mxu0 %v2654
        %2986 = vmatprep.subr.mxu0 0.0
        %2987 = vmatpush1.msra.mxu0 %v2661
        %2988 = vmatprep.subr.mxu0 0.0
        %2989 = vmatpush1.msra.mxu0 %v2668
        %2990 = vmatprep.subr.mxu0 0.0
        %2991 = vmatpush1.msra.mxu0 %v2675
        %2992 = vmatprep.subr.mxu0 0.0
        %2993 = vmatpush1.msra.mxu0 %v2682
        %2994 = vmatprep.subr.mxu0 0.0
        %2995 = vmatpush1.msra.mxu0 %v2689
        %2996 = vmatprep.subr.mxu0 0.0
        %2997 = vmatpush1.msra.mxu0 %v2696
        %2998 = vmatprep.subr.mxu0 0.0
        %2999 = vmatpush1.msra.mxu0 %v2703
        %3000 = vmatprep.subr.mxu0 0.0
        %3001 = vmatpush1.msra.mxu0 %v2710
        %3002 = vmatprep.subr.mxu0 0.0
        %3003 = vmatpush1.msra.mxu0 %v2717
        %3004 = vmatprep.subr.mxu0 0.0
        %3005 = vmatpush1.msra.mxu0 0.0
        %3006 = vmatprep.subr.mxu0 0.0
        %3007 = vmatpush1.msra.mxu0 0.0
        %3008 = vmatprep.subr.mxu0 0.0
        %3009 = vmatpush1.msra.mxu0 0.0
        %3010 = vmatprep.subr.mxu0 0.0
        %3011 = vmatpush1.msra.mxu0 0.0
        %3012 = vmatprep.subr.mxu0 0.0
        %3013 = vmatpush1.msra.mxu0 0.0
        %3014 = vmatprep.subr.mxu0 0.0
        %3015 = vmatpush1.msra.mxu0 0.0
        %3016 = vmatprep.subr.mxu0 0.0
        %3017 = vmatpush1.msra.mxu0 0.0
        %3018 = vmatprep.subr.mxu0 0.0
        %3019 = vmatpush1.msra.mxu0 0.0
        %3020 = vmatprep.subr.mxu0 0.0
        %3021 = vmatpush1.msra.mxu0 0.0
        %3022 = vmatprep.subr.mxu0 0.0
        %3023 = vmatpush1.msra.mxu0 0.0
        %3024 = vmatprep.subr.mxu0 0.0
        %3025 = vmatpush1.msra.mxu0 0.0
        %3026 = vmatprep.subr.mxu0 0.0
        %3027 = vmatpush1.msra.mxu0 0.0
        %3028 = vmatprep.subr.mxu0 0.0
        %3029 = vmatpush1.msra.mxu0 0.0
        %3030 = vmatprep.subr.mxu0 0.0
        %3031 = vmatpush1.msra.mxu0 0.0
        %3032 = vmatprep.subr.mxu0 0.0
        %3033 = vmatpush1.msra.mxu0 0.0
        %3034 = vmatprep.subr.mxu0 0.0
        %3035 = vmatpush1.msra.mxu0 0.0
        %3036 = vmatprep.mubr.f32.mxu0 0.0
        %3037 = vmatmul.mubr.f32.gmra.mrb[0].mxu0 %v2831
        %v3038 = vpop.f32.mrb[0].mxu0
        %v3039 = vadd.f32 0.0, %v3038
        %v3040 = vpop.f32.mrb[0].mxu0
        %3041 = vdwg.mxu0
        %3042 = vmatprep.subr.mxu0 0.0
        %3043 = vmatpush1.msra.mxu0 %v2724
        %3044 = vmatprep.subr.mxu0 0.0
        %3045 = vmatpush1.msra.mxu0 %v2731
        %3046 = vmatprep.subr.mxu0 0.0
        %3047 = vmatpush1.msra.mxu0 %v2738
        %3048 = vmatprep.subr.mxu0 0.0
        %3049 = vmatpush1.msra.mxu0 %v2745
        %3050 = vmatprep.subr.mxu0 0.0
        %3051 = vmatpush1.msra.mxu0 %v2752
        %3052 = vmatprep.subr.mxu0 0.0
        %3053 = vmatpush1.msra.mxu0 %v2759
        %3054 = vmatprep.subr.mxu0 0.0
        %3055 = vmatpush1.msra.mxu0 %v2766
        %3056 = vmatprep.subr.mxu0 0.0
        %3057 = vmatpush1.msra.mxu0 %v2773
        %3058 = vmatprep.subr.mxu0 0.0
        %3059 = vmatpush1.msra.mxu0 %v2780
        %3060 = vmatprep.subr.mxu0 0.0
        %3061 = vmatpush1.msra.mxu0 %v2787
        %3062 = vmatprep.subr.mxu0 0.0
        %3063 = vmatpush1.msra.mxu0 %v2794
        %3064 = vmatprep.subr.mxu0 0.0
        %3065 = vmatpush1.msra.mxu0 %v2801
        %3066 = vmatprep.subr.mxu0 0.0
        %3067 = vmatpush1.msra.mxu0 %v2808
        %3068 = vmatprep.subr.mxu0 0.0
        %3069 = vmatpush1.msra.mxu0 %v2815
        %3070 = vmatprep.subr.mxu0 0.0
        %3071 = vmatpush1.msra.mxu0 %v2822
        %3072 = vmatprep.subr.mxu0 0.0
        %3073 = vmatpush1.msra.mxu0 %v2829
        %3074 = vmatprep.subr.mxu0 0.0
        %3075 = vmatpush1.msra.mxu0 0.0
        %3076 = vmatprep.subr.mxu0 0.0
        %3077 = vmatpush1.msra.mxu0 0.0
        %3078 = vmatprep.subr.mxu0 0.0
        %3079 = vmatpush1.msra.mxu0 0.0
        %3080 = vmatprep.subr.mxu0 0.0
        %3081 = vmatpush1.msra.mxu0 0.0
        %3082 = vmatprep.subr.mxu0 0.0
        %3083 = vmatpush1.msra.mxu0 0.0
        %3084 = vmatprep.subr.mxu0 0.0
        %3085 = vmatpush1.msra.mxu0 0.0
        %3086 = vmatprep.subr.mxu0 0.0
        %3087 = vmatpush1.msra.mxu0 0.0
        %3088 = vmatprep.subr.mxu0 0.0
        %3089 = vmatpush1.msra.mxu0 0.0
        %3090 = vmatprep.subr.mxu0 0.0
        %3091 = vmatpush1.msra.mxu0 0.0
        %3092 = vmatprep.subr.mxu0 0.0
        %3093 = vmatpush1.msra.mxu0 0.0
        %3094 = vmatprep.subr.mxu0 0.0
        %3095 = vmatpush1.msra.mxu0 0.0
        %3096 = vmatprep.subr.mxu0 0.0
        %3097 = vmatpush1.msra.mxu0 0.0
        %3098 = vmatprep.subr.mxu0 0.0
        %3099 = vmatpush1.msra.mxu0 0.0
        %3100 = vmatprep.subr.mxu0 0.0
        %3101 = vmatpush1.msra.mxu0 0.0
        %3102 = vmatprep.subr.mxu0 0.0
        %3103 = vmatpush1.msra.mxu0 0.0
        %3104 = vmatprep.subr.mxu0 0.0
        %3105 = vmatpush1.msra.mxu0 0.0
        %3106 = vmatprep.mubr.f32.mxu0 0.0
        %3107 = vmatmul.mubr.f32.gmra.mrb[0].mxu0 %v2831
        %v3108 = vpop.f32.mrb[0].mxu0
        %v3109 = vadd.f32 0.0, %v3108
        %v3110 = vpop.f32.mrb[0].mxu0
        %3111 = vdwg.mxu0
        %3112 = vmatprep.subr.mxu0 0.0
        %3113 = vmatpush1.msra.mxu0 %v1292
        %3114 = vmatprep.subr.mxu0 0.0
        %3115 = vmatpush1.msra.mxu0 %v1295
        %3116 = vmatprep.subr.mxu0 0.0
        %3117 = vmatpush1.msra.mxu0 %v1298
        %3118 = vmatprep.subr.mxu0 0.0
        %3119 = vmatpush1.msra.mxu0 %v1301
        %3120 = vmatprep.subr.mxu0 0.0
        %3121 = vmatpush1.msra.mxu0 %v1304
        %3122 = vmatprep.subr.mxu0 0.0
        %3123 = vmatpush1.msra.mxu0 %v1307
        %3124 = vmatprep.subr.mxu0 0.0
        %3125 = vmatpush1.msra.mxu0 %v1310
        %3126 = vmatprep.subr.mxu0 0.0
        %3127 = vmatpush1.msra.mxu0 %v1313
        %3128 = vmatprep.subr.mxu0 0.0
        %3129 = vmatpush1.msra.mxu0 %v1316
        %3130 = vmatprep.subr.mxu0 0.0
        %3131 = vmatpush1.msra.mxu0 %v1319
        %3132 = vmatprep.subr.mxu0 0.0
        %3133 = vmatpush1.msra.mxu0 %v1322
        %3134 = vmatprep.subr.mxu0 0.0
        %3135 = vmatpush1.msra.mxu0 %v1325
        %3136 = vmatprep.subr.mxu0 0.0
        %3137 = vmatpush1.msra.mxu0 %v1328
        %3138 = vmatprep.subr.mxu0 0.0
        %3139 = vmatpush1.msra.mxu0 %v1331
        %3140 = vmatprep.subr.mxu0 0.0
        %3141 = vmatpush1.msra.mxu0 %v1334
        %3142 = vmatprep.subr.mxu0 0.0
        %3143 = vmatpush1.msra.mxu0 %v1337
        %3144 = vmatprep.subr.mxu0 0.0
        %3145 = vmatpush1.msra.mxu0 0.0
        %3146 = vmatprep.subr.mxu0 0.0
        %3147 = vmatpush1.msra.mxu0 0.0
        %3148 = vmatprep.subr.mxu0 0.0
        %3149 = vmatpush1.msra.mxu0 0.0
        %3150 = vmatprep.subr.mxu0 0.0
        %3151 = vmatpush1.msra.mxu0 0.0
        %3152 = vmatprep.subr.mxu0 0.0
        %3153 = vmatpush1.msra.mxu0 0.0
        %3154 = vmatprep.subr.mxu0 0.0
        %3155 = vmatpush1.msra.mxu0 0.0
        %3156 = vmatprep.subr.mxu0 0.0
        %3157 = vmatpush1.msra.mxu0 0.0
        %3158 = vmatprep.subr.mxu0 0.0
        %3159 = vmatpush1.msra.mxu0 0.0
        %3160 = vmatprep.subr.mxu0 0.0
        %3161 = vmatpush1.msra.mxu0 0.0
        %3162 = vmatprep.subr.mxu0 0.0
        %3163 = vmatpush1.msra.mxu0 0.0
        %3164 = vmatprep.subr.mxu0 0.0
        %3165 = vmatpush1.msra.mxu0 0.0
        %3166 = vmatprep.subr.mxu0 0.0
        %3167 = vmatpush1.msra.mxu0 0.0
        %3168 = vmatprep.subr.mxu0 0.0
        %3169 = vmatpush1.msra.mxu0 0.0
        %3170 = vmatprep.subr.mxu0 0.0
        %3171 = vmatpush1.msra.mxu0 0.0
        %3172 = vmatprep.subr.mxu0 0.0
        %3173 = vmatpush1.msra.mxu0 0.0
        %3174 = vmatprep.subr.mxu0 0.0
        %3175 = vmatpush1.msra.mxu0 0.0
        %3176 = vmatprep.mubr.f32.mxu0 0.0
        %3177 = vmatmul.mubr.f32.gmra.mrb[0].mxu0 %v2830
        %v3178 = vpop.f32.mrb[0].mxu0
        %v3179 = vadd.f32 %v2899, %v3178
        %v3180 = vpop.f32.mrb[0].mxu0
        %3181 = vdwg.mxu0
        %3182 = vmatprep.subr.mxu0 0.0
        %3183 = vmatpush1.msra.mxu0 %v1360
        %3184 = vmatprep.subr.mxu0 0.0
        %3185 = vmatpush1.msra.mxu0 %v1363
        %3186 = vmatprep.subr.mxu0 0.0
        %3187 = vmatpush1.msra.mxu0 %v1366
        %3188 = vmatprep.subr.mxu0 0.0
        %3189 = vmatpush1.msra.mxu0 %v1369
        %3190 = vmatprep.subr.mxu0 0.0
        %3191 = vmatpush1.msra.mxu0 %v1372
        %3192 = vmatprep.subr.mxu0 0.0
        %3193 = vmatpush1.msra.mxu0 %v1375
        %3194 = vmatprep.subr.mxu0 0.0
        %3195 = vmatpush1.msra.mxu0 %v1378
        %3196 = vmatprep.subr.mxu0 0.0
        %3197 = vmatpush1.msra.mxu0 %v1381
        %3198 = vmatprep.subr.mxu0 0.0
        %3199 = vmatpush1.msra.mxu0 %v1384
        %3200 = vmatprep.subr.mxu0 0.0
        %3201 = vmatpush1.msra.mxu0 %v1387
        %3202 = vmatprep.subr.mxu0 0.0
        %3203 = vmatpush1.msra.mxu0 %v1390
        %3204 = vmatprep.subr.mxu0 0.0
        %3205 = vmatpush1.msra.mxu0 %v1393
        %3206 = vmatprep.subr.mxu0 0.0
        %3207 = vmatpush1.msra.mxu0 %v1396
        %3208 = vmatprep.subr.mxu0 0.0
        %3209 = vmatpush1.msra.mxu0 %v1399
        %3210 = vmatprep.subr.mxu0 0.0
        %3211 = vmatpush1.msra.mxu0 %v1402
        %3212 = vmatprep.subr.mxu0 0.0
        %3213 = vmatpush1.msra.mxu0 %v1405
        %3214 = vmatprep.subr.mxu0 0.0
        %3215 = vmatpush1.msra.mxu0 0.0
        %3216 = vmatprep.subr.mxu0 0.0
        %3217 = vmatpush1.msra.mxu0 0.0
        %3218 = vmatprep.subr.mxu0 0.0
        %3219 = vmatpush1.msra.mxu0 0.0
        %3220 = vmatprep.subr.mxu0 0.0
        %3221 = vmatpush1.msra.mxu0 0.0
        %3222 = vmatprep.subr.mxu0 0.0
        %3223 = vmatpush1.msra.mxu0 0.0
        %3224 = vmatprep.subr.mxu0 0.0
        %3225 = vmatpush1.msra.mxu0 0.0
        %3226 = vmatprep.subr.mxu0 0.0
        %3227 = vmatpush1.msra.mxu0 0.0
        %3228 = vmatprep.subr.mxu0 0.0
        %3229 = vmatpush1.msra.mxu0 0.0
        %3230 = vmatprep.subr.mxu0 0.0
        %3231 = vmatpush1.msra.mxu0 0.0
        %3232 = vmatprep.subr.mxu0 0.0
        %3233 = vmatpush1.msra.mxu0 0.0
        %3234 = vmatprep.subr.mxu0 0.0
        %3235 = vmatpush1.msra.mxu0 0.0
        %3236 = vmatprep.subr.mxu0 0.0
        %3237 = vmatpush1.msra.mxu0 0.0
        %3238 = vmatprep.subr.mxu0 0.0
        %3239 = vmatpush1.msra.mxu0 0.0
        %3240 = vmatprep.subr.mxu0 0.0
        %3241 = vmatpush1.msra.mxu0 0.0
        %3242 = vmatprep.subr.mxu0 0.0
        %3243 = vmatpush1.msra.mxu0 0.0
        %3244 = vmatprep.subr.mxu0 0.0
        %3245 = vmatpush1.msra.mxu0 0.0
        %3246 = vmatprep.mubr.f32.mxu0 0.0
        %3247 = vmatmul.mubr.f32.gmra.mrb[0].mxu0 %v2830
        %v3248 = vpop.f32.mrb[0].mxu0
        %v3249 = vadd.f32 %v2969, %v3248
        %v3250 = vpop.f32.mrb[0].mxu0
        %3251 = vdwg.mxu0
        %3252 = vmatprep.subr.mxu0 0.0
        %3253 = vmatpush1.msra.mxu0 %v1428
        %3254 = vmatprep.subr.mxu0 0.0
        %3255 = vmatpush1.msra.mxu0 %v1431
        %3256 = vmatprep.subr.mxu0 0.0
        %3257 = vmatpush1.msra.mxu0 %v1434
        %3258 = vmatprep.subr.mxu0 0.0
        %3259 = vmatpush1.msra.mxu0 %v1437
        %3260 = vmatprep.subr.mxu0 0.0
        %3261 = vmatpush1.msra.mxu0 %v1440
        %3262 = vmatprep.subr.mxu0 0.0
        %3263 = vmatpush1.msra.mxu0 %v1443
        %3264 = vmatprep.subr.mxu0 0.0
        %3265 = vmatpush1.msra.mxu0 %v1446
        %3266 = vmatprep.subr.mxu0 0.0
        %3267 = vmatpush1.msra.mxu0 %v1449
        %3268 = vmatprep.subr.mxu0 0.0
        %3269 = vmatpush1.msra.mxu0 %v1452
        %3270 = vmatprep.subr.mxu0 0.0
        %3271 = vmatpush1.msra.mxu0 %v1455
        %3272 = vmatprep.subr.mxu0 0.0
        %3273 = vmatpush1.msra.mxu0 %v1458
        %3274 = vmatprep.subr.mxu0 0.0
        %3275 = vmatpush1.msra.mxu0 %v1461
        %3276 = vmatprep.subr.mxu0 0.0
        %3277 = vmatpush1.msra.mxu0 %v1464
        %3278 = vmatprep.subr.mxu0 0.0
        %3279 = vmatpush1.msra.mxu0 %v1467
        %3280 = vmatprep.subr.mxu0 0.0
        %3281 = vmatpush1.msra.mxu0 %v1470
        %3282 = vmatprep.subr.mxu0 0.0
        %3283 = vmatpush1.msra.mxu0 %v1473
        %3284 = vmatprep.subr.mxu0 0.0
        %3285 = vmatpush1.msra.mxu0 0.0
        %3286 = vmatprep.subr.mxu0 0.0
        %3287 = vmatpush1.msra.mxu0 0.0
        %3288 = vmatprep.subr.mxu0 0.0
        %3289 = vmatpush1.msra.mxu0 0.0
        %3290 = vmatprep.subr.mxu0 0.0
        %3291 = vmatpush1.msra.mxu0 0.0
        %3292 = vmatprep.subr.mxu0 0.0
        %3293 = vmatpush1.msra.mxu0 0.0
        %3294 = vmatprep.subr.mxu0 0.0
        %3295 = vmatpush1.msra.mxu0 0.0
        %3296 = vmatprep.subr.mxu0 0.0
        %3297 = vmatpush1.msra.mxu0 0.0
        %3298 = vmatprep.subr.mxu0 0.0
        %3299 = vmatpush1.msra.mxu0 0.0
        %3300 = vmatprep.subr.mxu0 0.0
        %3301 = vmatpush1.msra.mxu0 0.0
        %3302 = vmatprep.subr.mxu0 0.0
        %3303 = vmatpush1.msra.mxu0 0.0
        %3304 = vmatprep.subr.mxu0 0.0
        %3305 = vmatpush1.msra.mxu0 0.0
        %3306 = vmatprep.subr.mxu0 0.0
        %3307 = vmatpush1.msra.mxu0 0.0
        %3308 = vmatprep.subr.mxu0 0.0
        %3309 = vmatpush1.msra.mxu0 0.0
        %3310 = vmatprep.subr.mxu0 0.0
        %3311 = vmatpush1.msra.mxu0 0.0
        %3312 = vmatprep.subr.mxu0 0.0
        %3313 = vmatpush1.msra.mxu0 0.0
        %3314 = vmatprep.subr.mxu0 0.0
        %3315 = vmatpush1.msra.mxu0 0.0
        %3316 = vmatprep.mubr.f32.mxu0 0.0
        %3317 = vmatmul.mubr.f32.gmra.mrb[0].mxu0 %v2830
        %v3318 = vpop.f32.mrb[0].mxu0
        %v3319 = vadd.f32 %v3039, %v3318
        %v3320 = vpop.f32.mrb[0].mxu0
        %3321 = vdwg.mxu0
        %3322 = vmatprep.subr.mxu0 0.0
        %3323 = vmatpush1.msra.mxu0 %v1496
        %3324 = vmatprep.subr.mxu0 0.0
        %3325 = vmatpush1.msra.mxu0 %v1499
        %3326 = vmatprep.subr.mxu0 0.0
        %3327 = vmatpush1.msra.mxu0 %v1502
        %3328 = vmatprep.subr.mxu0 0.0
        %3329 = vmatpush1.msra.mxu0 %v1505
        %3330 = vmatprep.subr.mxu0 0.0
        %3331 = vmatpush1.msra.mxu0 %v1508
        %3332 = vmatprep.subr.mxu0 0.0
        %3333 = vmatpush1.msra.mxu0 %v1511
        %3334 = vmatprep.subr.mxu0 0.0
        %3335 = vmatpush1.msra.mxu0 %v1514
        %3336 = vmatprep.subr.mxu0 0.0
        %3337 = vmatpush1.msra.mxu0 %v1517
        %3338 = vmatprep.subr.mxu0 0.0
        %3339 = vmatpush1.msra.mxu0 %v1520
        %3340 = vmatprep.subr.mxu0 0.0
        %3341 = vmatpush1.msra.mxu0 %v1523
        %3342 = vmatprep.subr.mxu0 0.0
        %3343 = vmatpush1.msra.mxu0 %v1526
        %3344 = vmatprep.subr.mxu0 0.0
        %3345 = vmatpush1.msra.mxu0 %v1529
        %3346 = vmatprep.subr.mxu0 0.0
        %3347 = vmatpush1.msra.mxu0 %v1532
        %3348 = vmatprep.subr.mxu0 0.0
        %3349 = vmatpush1.msra.mxu0 %v1535
        %3350 = vmatprep.subr.mxu0 0.0
        %3351 = vmatpush1.msra.mxu0 %v1538
        %3352 = vmatprep.subr.mxu0 0.0
        %3353 = vmatpush1.msra.mxu0 %v1541
        %3354 = vmatprep.subr.mxu0 0.0
        %3355 = vmatpush1.msra.mxu0 0.0
        %3356 = vmatprep.subr.mxu0 0.0
        %3357 = vmatpush1.msra.mxu0 0.0
        %3358 = vmatprep.subr.mxu0 0.0
        %3359 = vmatpush1.msra.mxu0 0.0
        %3360 = vmatprep.subr.mxu0 0.0
        %3361 = vmatpush1.msra.mxu0 0.0
        %3362 = vmatprep.subr.mxu0 0.0
        %3363 = vmatpush1.msra.mxu0 0.0
        %3364 = vmatprep.subr.mxu0 0.0
        %3365 = vmatpush1.msra.mxu0 0.0
        %3366 = vmatprep.subr.mxu0 0.0
        %3367 = vmatpush1.msra.mxu0 0.0
        %3368 = vmatprep.subr.mxu0 0.0
        %3369 = vmatpush1.msra.mxu0 0.0
        %3370 = vmatprep.subr.mxu0 0.0
        %3371 = vmatpush1.msra.mxu0 0.0
        %3372 = vmatprep.subr.mxu0 0.0
        %3373 = vmatpush1.msra.mxu0 0.0
        %3374 = vmatprep.subr.mxu0 0.0
        %3375 = vmatpush1.msra.mxu0 0.0
        %3376 = vmatprep.subr.mxu0 0.0
        %3377 = vmatpush1.msra.mxu0 0.0
        %3378 = vmatprep.subr.mxu0 0.0
        %3379 = vmatpush1.msra.mxu0 0.0
        %3380 = vmatprep.subr.mxu0 0.0
        %3381 = vmatpush1.msra.mxu0 0.0
        %3382 = vmatprep.subr.mxu0 0.0
        %3383 = vmatpush1.msra.mxu0 0.0
        %3384 = vmatprep.subr.mxu0 0.0
        %3385 = vmatpush1.msra.mxu0 0.0
        %3386 = vmatprep.mubr.f32.mxu0 0.0
        %3387 = vmatmul.mubr.f32.gmra.mrb[0].mxu0 %v2830
        %v3388 = vpop.f32.mrb[0].mxu0
        %v3389 = vadd.f32 %v3109, %v3388
        %v3390 = vpop.f32.mrb[0].mxu0
        %3391 = vdwg.mxu0
        %v3392 = vld [vmem:[%s7] sm:$0x3]
        %v3393 = vadd.f32 %v3179, %v3392
        %v3394 = vadd.f32 %v3249, %v3392
        %v3395 = vadd.f32 %v3319, %v3392
        %v3396 = vadd.f32 %v3389, %v3392
        %vm3397 = vcmask 1024
        %3398 = vst.msk [vmem:[%s350] sm:$0x3] %vm3397, %v3393
        %3399 = vst.msk [vmem:[%s350 + $0x2] sm:$0x3] %vm3397, %v3394
        %3400 = vst.msk [vmem:[%s350 + $0x4] sm:$0x3] %vm3397, %v3395
        %3401 = vst.msk [vmem:[%s350 + $0x6] sm:$0x3] %vm3397, %v3396
        %s3402 = smul.u32 4, %s26
        %p3403 = scmp.lt.s32.totalorder %s3402, 15
        %s3404 = scalar_select %p3403, %s3402, 15
        %s3405 = smul.addr %s3404, 2
        %s3406 = scalar_lea.vmem %s8, %s3405
        %s3407 = sand.u32 %s233, 1
        %s3408 = scalar_lea.sflag [#allocation4], %s3407
        %s3409 = sand.u32 %s233, 1
        %s3410 = smul.addr %s3409, 4
        %s3411 = scalar_lea.vmem [#allocation3], %s3410
        // Predicated region
        $region53: #{tpu_custom_call.1} parent=51 // pred_check
          %p3412 = pneg %p217
        $region54: #{tpu_custom_call.1} parent=51 // pred_check_branch
          %3414 = sbr.rel (%p3412) target = $region56
        $region55: #{tpu_custom_call.1} parent=51 // pred_region
          %s3415 = smul.u32 4, %s26
        $region56: #{tpu_custom_call.1} parent=51 // pred_fallthru
          _
        // Predicated region
        $region57: #{tpu_custom_call.1} parent=51 // pred_check
          %p3416 = pneg %p243
        $region58: #{tpu_custom_call.1} parent=51 // pred_check_branch
          %3418 = sbr.rel (%p3416) target = $region60
        $region59: #{tpu_custom_call.1} parent=51 // pred_region
          %s3419 = smul.u32 4, %s26
          %s3421 = ssub.s32 64, 64
          %3422 = vsyncadd %s3408, %s3421
          %s3423 = smul.addr %s3419, 16
          %s3424 = scalar_lea.hbm %s9, %s3423
          %s3425 = sshll.u32 %s3411, 4
          %s3426 = int_to_ptr.vmem [resolvable:$true] %s3425
          %3431 = dma.vmem_to_hbm [thread:$0]  %s3426, 64, %s3424, %s3408, 16, 16, 1
        $region60: #{tpu_custom_call.1} parent=51 // pred_fallthru
          _
      $region52: #{tpu_custom_call.1} parent=5 // pred_fallthru
        _
      %p3432 = scmp.le.s32.totalorder 2, %s21
      // Predicated region
      $region61: #{tpu_custom_call.1} parent=5 // pred_check
        %p3433 = pneg %p3432
      $region62: #{tpu_custom_call.1} parent=5 // pred_check_branch
        %3435 = sbr.rel (%p3433) target = $region64
      $region63: #{tpu_custom_call.1} parent=5 // pred_region
        %s3436 = ssub.s32 %s21, 2
        // Predicated region
        $region65: #{tpu_custom_call.1} parent=63 // pred_check
          %p3437 = pneg %p223
        $region66: #{tpu_custom_call.1} parent=63 // pred_check_branch
          %3439 = sbr.rel (%p3437) target = $region68
        $region67: #{tpu_custom_call.1} parent=63 // pred_region
          %s3440 = smul.u32 4, %s27
          %p3441 = scmp.lt.s32.totalorder %s3440, 15
          %s3442 = scalar_select %p3441, %s3440, 15
          %s3443 = smul.addr %s3442, 2
          %s3444 = scalar_lea.vmem %s8, %s3443
        $region68: #{tpu_custom_call.1} parent=63 // pred_fallthru
          _
        // Predicated region
        $region69: #{tpu_custom_call.1} parent=63 // pred_check
          %p3445 = pneg %p249
        $region70: #{tpu_custom_call.1} parent=63 // pred_check_branch
          %3447 = sbr.rel (%p3445) target = $region72
        $region71: #{tpu_custom_call.1} parent=63 // pred_region
          %s3448 = sand.u32 %s234, 1
          %s3449 = scalar_lea.sflag [#allocation4], %s3448
          %s3450 = sand.u32 %s234, 1
          %s3451 = smul.addr %s3450, 4
          %s3452 = scalar_lea.vmem [#allocation3], %s3451
          %3453 = dma.done %s3449, 64
        $region72: #{tpu_custom_call.1} parent=63 // pred_fallthru
          _
      $region64: #{tpu_custom_call.1} parent=5 // pred_fallthru
        _
    $region6: #{tpu_custom_call.1} parent=1 // loop_footer
      %s25 = sadd.s32 1, %s21
    $region7: #{tpu_custom_call.1} parent=1 // loop_footer_branch
      %20 = sbr.rel target = $region3
    $region8: #{tpu_custom_call.1} parent=1 // loop_exit
      _
    %3454 = vsyncpa [#allocation4], 1
    %s3455 = scalar_lea.sflag [#allocation4], 1
    %3456 = vsyncpa %s3455, 1

</llo_original>
